<compile_context>
chip_gen: v6e
topology: v6e:2x2x1
jax: 0.10.0
libtpu: 0.0.40
codegen_flags: <defaults>
</compile_context>

<pallas_src>
import jax
import jax.numpy as jnp
from jax.experimental import pallas as pl
from jax.experimental.pallas import tpu as pltpu


# ---------------------------------------------------------------------------
# Kernel
# ---------------------------------------------------------------------------
def net2_kernel(x_ref,
                w1f_ref, b1f_ref, w2f_ref, b2f_ref, w3f_ref, b3f_ref,
                rep_ref, sum_ref,
                xw1_ref, xb1_ref, xw2_ref, xb2_ref, xw3_ref, xb3_ref,
                out_ref):
    x = x_ref[...]                                            # (TB, 54) f32

    def linear(v, w_ref, b_ref):
        return jnp.dot(v, w_ref[...],
                       preferred_element_type=jnp.float32) + b_ref[...]

    # Fused H_net1/2/3 (block-diagonal weights): three wide MXU matmuls.
    h = jax.nn.sigmoid(linear(x, w1f_ref, b1f_ref))           # (TB, 384)
    h = jax.nn.sigmoid(linear(h, w2f_ref, b2f_ref))           # (TB, 768)
    hf = linear(h, w3f_ref, b3f_ref)                          # (TB, 972) = 3 flat (18,18)

    # Batched (1,18)@(18,18) mixing for all 3 branches, lane-dense:
    #   x_rep[b, g*324 + k*18 + j] = x[b, g*18 + k]            (MXU, 0/1 matrix R)
    #   z[b, g*18 + j] = sum_k x_rep * hf                      (MXU, 0/1 matrix S)
    x_rep = jnp.dot(x, rep_ref[...], preferred_element_type=jnp.float32)       # (TB, 972)
    z = jnp.dot(x_rep * hf, sum_ref[...], preferred_element_type=jnp.float32)  # (TB, 54)

    # X_net classifier: Linear(54,128)->ReLU->Linear(128,128)->ReLU->Linear(128,7)->Softmax
    a = jax.nn.relu(linear(z, xw1_ref, xb1_ref))              # (TB, 128)
    a = jax.nn.relu(linear(a, xw2_ref, xb2_ref))              # (TB, 128)
    logits = linear(a, xw3_ref, xb3_ref)                      # (TB, 7)
    m = jnp.max(logits, axis=-1, keepdims=True)
    e = jnp.exp(logits - m)
    denom = jnp.sum(e, axis=-1, keepdims=True)
    out_ref[...] = e * pl.reciprocal(denom, approx=True)


# ---------------------------------------------------------------------------
# Wrapper
# ---------------------------------------------------------------------------
def net2_forward(x, fused_params, *, batch_tile=512):
    bs, feat = x.shape
    assert feat == 54

    if bs <= batch_tile:
        tb = bs                     # single tile; block == full array dims
        n_tiles = 1
        x_in = x
    else:
        tb = batch_tile             # must be a multiple of 8 (it is)
        n_tiles = (bs + tb - 1) // tb
        pad = n_tiles * tb - bs
        x_in = jnp.pad(x, ((0, pad), (0, 0))) if pad else x

    x_spec = pl.BlockSpec((tb, 54), lambda i: (i, 0))
    out_spec = pl.BlockSpec((tb, 7), lambda i: (i, 0))
    # Parameters: full-array blocks, constant index_map -> DMA'd once, resident.
    w_specs = [pl.BlockSpec(p.shape, lambda i: (0, 0)) for p in fused_params]

    out = pl.pallas_call(
        net2_kernel,
        out_shape=jax.ShapeDtypeStruct((x_in.shape[0], 7), jnp.float32),
        grid_spec=pltpu.PrefetchScalarGridSpec(
            num_scalar_prefetch=0,
            grid=(n_tiles,),
            in_specs=[x_spec] + w_specs,
            out_specs=out_spec,
        ),
        compiler_params=pltpu.CompilerParams(
            dimension_semantics=("parallel",),      # megacore sharding on v7x
            vmem_limit_bytes=32 * 1024 * 1024,
        ),
    )(x_in, *fused_params)
    return out[:bs]


# ---------------------------------------------------------------------------
# Parameter construction (PyTorch nn.Linear-style init) + fusion
# ---------------------------------------------------------------------------
def init_linear(key, fan_in, fan_out):
    kw, kb = jax.random.split(key)
    bound = 1.0 / float(fan_in) ** 0.5
    w = jax.random.uniform(kw, (fan_in, fan_out), jnp.float32, -bound, bound)
    b = jax.random.uniform(kb, (1, fan_out), jnp.float32, -bound, bound)
    return w, b


def init_params(key):
    params = []
    for _ in range(3):  # H_net1..3: Linear(18,128), Linear(128,256), Linear(256,324)
        for fan_in, fan_out in ((18, 128), (128, 256), (256, 18 * 18)):
            key, sub = jax.random.split(key)
            params.extend(init_linear(sub, fan_in, fan_out))
    for fan_in, fan_out in ((54, 128), (128, 128), (128, 7)):  # X_net
        key, sub = jax.random.split(key)
        params.extend(init_linear(sub, fan_in, fan_out))
    return tuple(params)


def _block_diag(*mats):
    rows = sum(m.shape[0] for m in mats)
    cols = sum(m.shape[1] for m in mats)
    out = jnp.zeros((rows, cols), jnp.float32)
    r = c = 0
    for m in mats:
        out = out.at[r:r + m.shape[0], c:c + m.shape[1]].set(m)
        r += m.shape[0]
        c += m.shape[1]
    return out


def fuse_params(params):
    (h1w1, h1b1, h1w2, h1b2, h1w3, h1b3,
     h2w1, h2b1, h2w2, h2b2, h2w3, h2b3,
     h3w1, h3b1, h3w2, h3b2, h3w3, h3b3,
     xw1, xb1, xw2, xb2, xw3, xb3) = params

    w1f = _block_diag(h1w1, h2w1, h3w1)                       # (54, 384)
    b1f = jnp.concatenate([h1b1, h2b1, h3b1], axis=1)         # (1, 384)
    w2f = _block_diag(h1w2, h2w2, h3w2)                       # (384, 768)
    b2f = jnp.concatenate([h1b2, h2b2, h3b2], axis=1)         # (1, 768)
    w3f = _block_diag(h1w3, h2w3, h3w3)                       # (768, 972)
    b3f = jnp.concatenate([h1b3, h2b3, h3b3], axis=1)         # (1, 972)

    # 0/1 matrices for the lane-dense mixing step (built once, kept in VMEM).
    i_idx = jnp.arange(54)
    ig, ik = i_idx // 18, i_idx % 18
    c_idx = jnp.arange(3 * 18 * 18)
    cg, ck, cj = c_idx // 324, (c_idx % 324) // 18, c_idx % 18
    # rep[i, c] = 1  iff  c = g(i)*324 + k(i)*18 + j (any j)
    rep = ((ig[:, None] == cg[None, :]) &
           (ik[:, None] == ck[None, :])).astype(jnp.float32)  # (54, 972)
    # grp[c, o] = 1  iff  o = g(c)*18 + j(c)
    o_idx = jnp.arange(54)
    og, oj = o_idx // 18, o_idx % 18
    grp = ((cg[:, None] == og[None, :]) &
           (cj[:, None] == oj[None, :])).astype(jnp.float32)  # (972, 54)

    return (w1f, b1f, w2f, b2f, w3f, b3f, rep, grp,
            xw1, xb1, xw2, xb2, xw3, xb3)


# ---------------------------------------------------------------------------
# Pure-JAX reference (unfused, mirrors the PyTorch forward)
# ---------------------------------------------------------------------------
def net2_reference(x, params):
    (h1w1, h1b1, h1w2, h1b2, h1w3, h1b3,
     h2w1, h2b1, h2w2, h2b2, h2w3, h2b3,
     h3w1, h3b1, h3w2, h3b2, h3w3, h3b3,
     xw1, xb1, xw2, xb2, xw3, xb3) = params
    bs = x.shape[0]

    def branch(z, w1, b1, w2, b2, w3, b3):
        h = jax.nn.sigmoid(z @ w1 + b1)
        h = jax.nn.sigmoid(h @ w2 + b2)
        big_h = (h @ w3 + b3).reshape(bs, 18, 18)
        return jnp.einsum('bk,bkj->bj', z, big_h)

    with jax.default_matmul_precision("highest"):
        z1 = branch(x[:, 0:18], h1w1, h1b1, h1w2, h1b2, h1w3, h1b3)
        z2 = branch(x[:, 18:36], h2w1, h2b1, h2w2, h2b2, h2w3, h2b3)
        z3 = branch(x[:, 36:54], h3w1, h3b1, h3w2, h3b2, h3w3, h3b3)
        z = jnp.concatenate([z1, z2, z3], axis=1)
        a = jax.nn.relu(z @ xw1 + xb1)
        a = jax.nn.relu(a @ xw2 + xb2)
        return jax.nn.softmax(a @ xw3 + xb3, axis=-1)


# NOTE: the original module's loss_reg / requires_grad / self.x / self.y
# bookkeeping has no effect on the forward output and is omitted.

if __name__ == "__main__":
    key = jax.random.PRNGKey(0)
    key_x, key_p = jax.random.split(key)

    params = init_params(key_p)
    fused = fuse_params(params)

    # Small deterministic example consistent with the module: (bs, 54) features.
    bs = 2
    x = jax.random.normal(key_x, (bs, 54), dtype=jnp.float32)

    y = jax.block_until_ready(net2_forward(x, fused))
    assert y.shape == (bs, 7)
    assert bool(jnp.allclose(jnp.sum(y, axis=-1), 1.0, atol=5e-3))
    y_ref = net2_reference(x, params)
    assert bool(jnp.allclose(y, y_ref, atol=5e-3)), float(jnp.max(jnp.abs(y - y_ref)))

    # Also exercise the gridded (multi-tile, batch-padded) path.
    bs2 = 1030
    x2 = jax.random.normal(jax.random.PRNGKey(1), (bs2, 54), dtype=jnp.float32)
    y2 = jax.block_until_ready(net2_forward(x2, fused, batch_tile=256))
    assert y2.shape == (bs2, 7)
    y2_ref = net2_reference(x2, params)
    assert bool(jnp.allclose(y2, y2_ref, atol=5e-3)), float(jnp.max(jnp.abs(y2 - y2_ref)))

    print("KERNEL_OK")
</pallas_src>

<mosaic_0001>
module attributes {stable_mosaic.version = 11 : i64} {
  func.func @net2_kernel(%arg0: i32, %arg1: memref<2x54xf32, #tpu.memory_space<vmem>>, %arg2: memref<54x384xf32, #tpu.memory_space<vmem>>, %arg3: memref<1x384xf32, #tpu.memory_space<vmem>>, %arg4: memref<384x768xf32, #tpu.memory_space<vmem>>, %arg5: memref<1x768xf32, #tpu.memory_space<vmem>>, %arg6: memref<768x972xf32, #tpu.memory_space<vmem>>, %arg7: memref<1x972xf32, #tpu.memory_space<vmem>>, %arg8: memref<54x972xf32, #tpu.memory_space<vmem>>, %arg9: memref<972x54xf32, #tpu.memory_space<vmem>>, %arg10: memref<54x128xf32, #tpu.memory_space<vmem>>, %arg11: memref<1x128xf32, #tpu.memory_space<vmem>>, %arg12: memref<128x128xf32, #tpu.memory_space<vmem>>, %arg13: memref<1x128xf32, #tpu.memory_space<vmem>>, %arg14: memref<128x7xf32, #tpu.memory_space<vmem>>, %arg15: memref<1x7xf32, #tpu.memory_space<vmem>>, %arg16: memref<2x7xf32, #tpu.memory_space<vmem>>) attributes {dimension_semantics = [#tpu.dimension_semantics<parallel>], iteration_bounds = array<i64: 1>, scalar_prefetch = 0 : i64, scratch_operands = 0 : i64, tpu.core_type = #tpu.core_type<tc>, window_params = [{transform_indices = @transform_0, window_bounds = array<i64: 2, 54>}, {pipeline_mode = #tpu.pipeline_mode<synchronous>, transform_indices = @transform_1, window_bounds = array<i64: 54, 384>}, {pipeline_mode = #tpu.pipeline_mode<synchronous>, transform_indices = @transform_2, window_bounds = array<i64: 1, 384>}, {pipeline_mode = #tpu.pipeline_mode<synchronous>, transform_indices = @transform_3, window_bounds = array<i64: 384, 768>}, {pipeline_mode = #tpu.pipeline_mode<synchronous>, transform_indices = @transform_4, window_bounds = array<i64: 1, 768>}, {pipeline_mode = #tpu.pipeline_mode<synchronous>, transform_indices = @transform_5, window_bounds = array<i64: 768, 972>}, {pipeline_mode = #tpu.pipeline_mode<synchronous>, transform_indices = @transform_6, window_bounds = array<i64: 1, 972>}, {pipeline_mode = #tpu.pipeline_mode<synchronous>, transform_indices = @transform_7, window_bounds = array<i64: 54, 972>}, {pipeline_mode = #tpu.pipeline_mode<synchronous>, transform_indices = @transform_8, window_bounds = array<i64: 972, 54>}, {pipeline_mode = #tpu.pipeline_mode<synchronous>, transform_indices = @transform_9, window_bounds = array<i64: 54, 128>}, {pipeline_mode = #tpu.pipeline_mode<synchronous>, transform_indices = @transform_10, window_bounds = array<i64: 1, 128>}, {pipeline_mode = #tpu.pipeline_mode<synchronous>, transform_indices = @transform_11, window_bounds = array<i64: 128, 128>}, {pipeline_mode = #tpu.pipeline_mode<synchronous>, transform_indices = @transform_12, window_bounds = array<i64: 1, 128>}, {pipeline_mode = #tpu.pipeline_mode<synchronous>, transform_indices = @transform_13, window_bounds = array<i64: 128, 7>}, {pipeline_mode = #tpu.pipeline_mode<synchronous>, transform_indices = @transform_14, window_bounds = array<i64: 1, 7>}, {transform_indices = @transform_15, window_bounds = array<i64: 2, 7>}]} {
    %c0 = arith.constant 0 : index
    %c0_0 = arith.constant 0 : index
    %0 = vector.load %arg1[%c0, %c0_0] : memref<2x54xf32, #tpu.memory_space<vmem>>, vector<2x54xf32>
    %c0_1 = arith.constant 0 : index
    %c0_2 = arith.constant 0 : index
    %1 = vector.load %arg2[%c0_1, %c0_2] : memref<54x384xf32, #tpu.memory_space<vmem>>, vector<54x384xf32>
    %cst = arith.constant dense<0.000000e+00> : vector<2x384xf32>
    %2 = tpu.matmul %0, %1, %cst {dimension_numbers = #tpu.dot_dimension_numbers<[1], [0], [0], [1], [0, 0, 1, 1], [], []>} : vector<2x54xf32>, vector<54x384xf32>, vector<2x384xf32> -> vector<2x384xf32>
    %c0_3 = arith.constant 0 : index
    %c0_4 = arith.constant 0 : index
    %3 = vector.load %arg3[%c0_3, %c0_4] : memref<1x384xf32, #tpu.memory_space<vmem>>, vector<1x384xf32>
    %4 = vector.broadcast %3 : vector<1x384xf32> to vector<2x384xf32>
    %5 = arith.addf %2, %4 : vector<2x384xf32>
    %6 = arith.negf %5 : vector<2x384xf32>
    %7 = math.exp %6 : vector<2x384xf32>
    %cst_5 = arith.constant 1.000000e+00 : f32
    %8 = vector.broadcast %cst_5 : f32 to vector<2x384xf32>
    %9 = arith.addf %8, %7 : vector<2x384xf32>
    %10 = arith.divf %8, %9 : vector<2x384xf32>
    %c0_6 = arith.constant 0 : index
    %c0_7 = arith.constant 0 : index
    %11 = vector.load %arg4[%c0_6, %c0_7] : memref<384x768xf32, #tpu.memory_space<vmem>>, vector<384x768xf32>
    %cst_8 = arith.constant dense<0.000000e+00> : vector<2x768xf32>
    %12 = tpu.matmul %10, %11, %cst_8 {dimension_numbers = #tpu.dot_dimension_numbers<[1], [0], [0], [1], [0, 0, 1, 1], [], []>} : vector<2x384xf32>, vector<384x768xf32>, vector<2x768xf32> -> vector<2x768xf32>
    %c0_9 = arith.constant 0 : index
    %c0_10 = arith.constant 0 : index
    %13 = vector.load %arg5[%c0_9, %c0_10] : memref<1x768xf32, #tpu.memory_space<vmem>>, vector<1x768xf32>
    %14 = vector.broadcast %13 : vector<1x768xf32> to vector<2x768xf32>
    %15 = arith.addf %12, %14 : vector<2x768xf32>
    %16 = arith.negf %15 : vector<2x768xf32>
    %17 = math.exp %16 : vector<2x768xf32>
    %cst_11 = arith.constant 1.000000e+00 : f32
    %18 = vector.broadcast %cst_11 : f32 to vector<2x768xf32>
    %19 = arith.addf %18, %17 : vector<2x768xf32>
    %20 = arith.divf %18, %19 : vector<2x768xf32>
    %c0_12 = arith.constant 0 : index
    %c0_13 = arith.constant 0 : index
    %21 = vector.load %arg6[%c0_12, %c0_13] : memref<768x972xf32, #tpu.memory_space<vmem>>, vector<768x972xf32>
    %cst_14 = arith.constant dense<0.000000e+00> : vector<2x972xf32>
    %22 = tpu.matmul %20, %21, %cst_14 {dimension_numbers = #tpu.dot_dimension_numbers<[1], [0], [0], [1], [0, 0, 1, 1], [], []>} : vector<2x768xf32>, vector<768x972xf32>, vector<2x972xf32> -> vector<2x972xf32>
    %c0_15 = arith.constant 0 : index
    %c0_16 = arith.constant 0 : index
    %23 = vector.load %arg7[%c0_15, %c0_16] : memref<1x972xf32, #tpu.memory_space<vmem>>, vector<1x972xf32>
    %24 = vector.broadcast %23 : vector<1x972xf32> to vector<2x972xf32>
    %25 = arith.addf %22, %24 : vector<2x972xf32>
    %c0_17 = arith.constant 0 : index
    %c0_18 = arith.constant 0 : index
    %26 = vector.load %arg8[%c0_17, %c0_18] : memref<54x972xf32, #tpu.memory_space<vmem>>, vector<54x972xf32>
    %cst_19 = arith.constant dense<0.000000e+00> : vector<2x972xf32>
    %27 = tpu.matmul %0, %26, %cst_19 {dimension_numbers = #tpu.dot_dimension_numbers<[1], [0], [0], [1], [0, 0, 1, 1], [], []>} : vector<2x54xf32>, vector<54x972xf32>, vector<2x972xf32> -> vector<2x972xf32>
    %28 = arith.mulf %27, %25 : vector<2x972xf32>
    %c0_20 = arith.constant 0 : index
    %c0_21 = arith.constant 0 : index
    %29 = vector.load %arg9[%c0_20, %c0_21] : memref<972x54xf32, #tpu.memory_space<vmem>>, vector<972x54xf32>
    %cst_22 = arith.constant dense<0.000000e+00> : vector<2x54xf32>
    %30 = tpu.matmul %28, %29, %cst_22 {dimension_numbers = #tpu.dot_dimension_numbers<[1], [0], [0], [1], [0, 0, 1, 1], [], []>} : vector<2x972xf32>, vector<972x54xf32>, vector<2x54xf32> -> vector<2x54xf32>
    %c0_23 = arith.constant 0 : index
    %c0_24 = arith.constant 0 : index
    %31 = vector.load %arg10[%c0_23, %c0_24] : memref<54x128xf32, #tpu.memory_space<vmem>>, vector<54x128xf32>
    %cst_25 = arith.constant dense<0.000000e+00> : vector<2x128xf32>
    %32 = tpu.matmul %30, %31, %cst_25 {dimension_numbers = #tpu.dot_dimension_numbers<[1], [0], [0], [1], [0, 0, 1, 1], [], []>} : vector<2x54xf32>, vector<54x128xf32>, vector<2x128xf32> -> vector<2x128xf32>
    %c0_26 = arith.constant 0 : index
    %c0_27 = arith.constant 0 : index
    %33 = vector.load %arg11[%c0_26, %c0_27] : memref<1x128xf32, #tpu.memory_space<vmem>>, vector<1x128xf32>
    %34 = vector.broadcast %33 : vector<1x128xf32> to vector<2x128xf32>
    %35 = arith.addf %32, %34 : vector<2x128xf32>
    %cst_28 = arith.constant 0.000000e+00 : f32
    %36 = vector.broadcast %cst_28 : f32 to vector<2x128xf32>
    %37 = arith.maximumf %35, %36 : vector<2x128xf32>
    %c0_29 = arith.constant 0 : index
    %c0_30 = arith.constant 0 : index
    %38 = vector.load %arg12[%c0_29, %c0_30] : memref<128x128xf32, #tpu.memory_space<vmem>>, vector<128x128xf32>
    %cst_31 = arith.constant dense<0.000000e+00> : vector<2x128xf32>
    %39 = tpu.matmul %37, %38, %cst_31 {dimension_numbers = #tpu.dot_dimension_numbers<[1], [0], [0], [1], [0, 0, 1, 1], [], []>} : vector<2x128xf32>, vector<128x128xf32>, vector<2x128xf32> -> vector<2x128xf32>
    %c0_32 = arith.constant 0 : index
    %c0_33 = arith.constant 0 : index
    %40 = vector.load %arg13[%c0_32, %c0_33] : memref<1x128xf32, #tpu.memory_space<vmem>>, vector<1x128xf32>
    %41 = vector.broadcast %40 : vector<1x128xf32> to vector<2x128xf32>
    %42 = arith.addf %39, %41 : vector<2x128xf32>
    %cst_34 = arith.constant 0.000000e+00 : f32
    %43 = vector.broadcast %cst_34 : f32 to vector<2x128xf32>
    %44 = arith.maximumf %42, %43 : vector<2x128xf32>
    %c0_35 = arith.constant 0 : index
    %c0_36 = arith.constant 0 : index
    %45 = vector.load %arg14[%c0_35, %c0_36] : memref<128x7xf32, #tpu.memory_space<vmem>>, vector<128x7xf32>
    %cst_37 = arith.constant dense<0.000000e+00> : vector<2x7xf32>
    %46 = tpu.matmul %44, %45, %cst_37 {dimension_numbers = #tpu.dot_dimension_numbers<[1], [0], [0], [1], [0, 0, 1, 1], [], []>} : vector<2x128xf32>, vector<128x7xf32>, vector<2x7xf32> -> vector<2x7xf32>
    %c0_38 = arith.constant 0 : index
    %c0_39 = arith.constant 0 : index
    %47 = vector.load %arg15[%c0_38, %c0_39] : memref<1x7xf32, #tpu.memory_space<vmem>>, vector<1x7xf32>
    %48 = vector.broadcast %47 : vector<1x7xf32> to vector<2x7xf32>
    %49 = arith.addf %46, %48 : vector<2x7xf32>
    %cst_40 = arith.constant dense<0xFF800000> : vector<2xf32>
    %50 = vector.multi_reduction <maximumf>, %49, %cst_40 [1] : vector<2x7xf32> to vector<2xf32>
    %51 = vector.shape_cast %50 : vector<2xf32> to vector<2x1xf32>
    %52 = vector.broadcast %51 : vector<2x1xf32> to vector<2x7xf32>
    %53 = arith.subf %49, %52 : vector<2x7xf32>
    %54 = math.exp %53 : vector<2x7xf32>
    %cst_41 = arith.constant dense<0.000000e+00> : vector<2xf32>
    %55 = vector.multi_reduction <add>, %54, %cst_41 [1] : vector<2x7xf32> to vector<2xf32>
    %56 = vector.shape_cast %55 : vector<2xf32> to vector<2x1xf32>
    %57 = tpu.reciprocal %56 {approx = true} : vector<2x1xf32> -> vector<2x1xf32>
    %58 = vector.broadcast %57 : vector<2x1xf32> to vector<2x7xf32>
    %59 = arith.mulf %54, %58 : vector<2x7xf32>
    %c0_42 = arith.constant 0 : index
    %c0_43 = arith.constant 0 : index
    %60 = vector.load %arg16[%c0_42, %c0_43] : memref<2x7xf32, #tpu.memory_space<vmem>>, vector<2x7xf32>
    tpu.vector_store %arg16[%c0_42, %c0_43], %59 {strides = array<i32>} : memref<2x7xf32, #tpu.memory_space<vmem>>, vector<2x7xf32>,
    return
  }
  func.func @transform_0(%arg0: i32) -> (i32, i32) {
    %c0_i32 = arith.constant 0 : i32
    %c0_i32_0 = arith.constant 0 : i32
    return %arg0, %c0_i32 : i32, i32
  }
  func.func @transform_1(%arg0: i32) -> (i32, i32) {
    %c0_i32 = arith.constant 0 : i32
    %c0_i32_0 = arith.constant 0 : i32
    %c0_i32_1 = arith.constant 0 : i32
    return %c0_i32, %c0_i32_0 : i32, i32
  }
  func.func @transform_2(%arg0: i32) -> (i32, i32) {
    %c0_i32 = arith.constant 0 : i32
    %c0_i32_0 = arith.constant 0 : i32
    %c0_i32_1 = arith.constant 0 : i32
    return %c0_i32, %c0_i32_0 : i32, i32
  }
  func.func @transform_3(%arg0: i32) -> (i32, i32) {
    %c0_i32 = arith.constant 0 : i32
    %c0_i32_0 = arith.constant 0 : i32
    %c0_i32_1 = arith.constant 0 : i32
    return %c0_i32, %c0_i32_0 : i32, i32
  }
  func.func @transform_4(%arg0: i32) -> (i32, i32) {
    %c0_i32 = arith.constant 0 : i32
    %c0_i32_0 = arith.constant 0 : i32
    %c0_i32_1 = arith.constant 0 : i32
    return %c0_i32, %c0_i32_0 : i32, i32
  }
  func.func @transform_5(%arg0: i32) -> (i32, i32) {
    %c0_i32 = arith.constant 0 : i32
    %c0_i32_0 = arith.constant 0 : i32
    %c0_i32_1 = arith.constant 0 : i32
    return %c0_i32, %c0_i32_0 : i32, i32
  }
  func.func @transform_6(%arg0: i32) -> (i32, i32) {
    %c0_i32 = arith.constant 0 : i32
    %c0_i32_0 = arith.constant 0 : i32
    %c0_i32_1 = arith.constant 0 : i32
    return %c0_i32, %c0_i32_0 : i32, i32
  }
  func.func @transform_7(%arg0: i32) -> (i32, i32) {
    %c0_i32 = arith.constant 0 : i32
    %c0_i32_0 = arith.constant 0 : i32
    %c0_i32_1 = arith.constant 0 : i32
    return %c0_i32, %c0_i32_0 : i32, i32
  }
  func.func @transform_8(%arg0: i32) -> (i32, i32) {
    %c0_i32 = arith.constant 0 : i32
    %c0_i32_0 = arith.constant 0 : i32
    %c0_i32_1 = arith.constant 0 : i32
    return %c0_i32, %c0_i32_0 : i32, i32
  }
  func.func @transform_9(%arg0: i32) -> (i32, i32) {
    %c0_i32 = arith.constant 0 : i32
    %c0_i32_0 = arith.constant 0 : i32
    %c0_i32_1 = arith.constant 0 : i32
    return %c0_i32, %c0_i32_0 : i32, i32
  }
  func.func @transform_10(%arg0: i32) -> (i32, i32) {
    %c0_i32 = arith.constant 0 : i32
    %c0_i32_0 = arith.constant 0 : i32
    %c0_i32_1 = arith.constant 0 : i32
    return %c0_i32, %c0_i32_0 : i32, i32
  }
  func.func @transform_11(%arg0: i32) -> (i32, i32) {
    %c0_i32 = arith.constant 0 : i32
    %c0_i32_0 = arith.constant 0 : i32
    %c0_i32_1 = arith.constant 0 : i32
    return %c0_i32, %c0_i32_0 : i32, i32
  }
  func.func @transform_12(%arg0: i32) -> (i32, i32) {
    %c0_i32 = arith.constant 0 : i32
    %c0_i32_0 = arith.constant 0 : i32
    %c0_i32_1 = arith.constant 0 : i32
    return %c0_i32, %c0_i32_0 : i32, i32
  }
  func.func @transform_13(%arg0: i32) -> (i32, i32) {
    %c0_i32 = arith.constant 0 : i32
    %c0_i32_0 = arith.constant 0 : i32
    %c0_i32_1 = arith.constant 0 : i32
    return %c0_i32, %c0_i32_0 : i32, i32
  }
  func.func @transform_14(%arg0: i32) -> (i32, i32) {
    %c0_i32 = arith.constant 0 : i32
    %c0_i32_0 = arith.constant 0 : i32
    %c0_i32_1 = arith.constant 0 : i32
    return %c0_i32, %c0_i32_0 : i32, i32
  }
  func.func @transform_15(%arg0: i32) -> (i32, i32) {
    %c0_i32 = arith.constant 0 : i32
    %c0_i32_0 = arith.constant 0 : i32
    return %arg0, %c0_i32 : i32, i32
  }
}

</mosaic_0001>

<llo_original>
// kernel: tpu_custom_call.1
$region0: #{tpu_custom_call.1}
  #allocation0 [shape = 'u32[]', space=smem, size = 0x4, offset = 0x4, fixed_abs, tag = 'smem constant byte address 0x4 - core index']
  #allocation1 [shape = 'u32[144,128]{1,0:T(1,128)}', space=vmem, size = 0x12000, scoped, tag = 'internal scratch']
  %s0 = inlined_call_operand.vmem [shape: f32[2,54], index: 0, kind: input, shape index: {}]
  %s1 = inlined_call_operand.vmem [shape: f32[54,384], index: 1, kind: input, shape index: {}]
  %s2 = inlined_call_operand.vmem [shape: f32[1,384], index: 2, kind: input, shape index: {}]
  %s3 = inlined_call_operand.vmem [shape: f32[384,768], index: 3, kind: input, shape index: {}]
  %s4 = inlined_call_operand.vmem [shape: f32[1,768], index: 4, kind: input, shape index: {}]
  %s5 = inlined_call_operand.vmem [shape: f32[768,972], index: 5, kind: input, shape index: {}]
  %s6 = inlined_call_operand.vmem [shape: f32[1,972], index: 6, kind: input, shape index: {}]
  %s7 = inlined_call_operand.vmem [shape: f32[54,972], index: 7, kind: input, shape index: {}]
  %s8 = inlined_call_operand.vmem [shape: f32[972,54], index: 8, kind: input, shape index: {}]
  %s9 = inlined_call_operand.vmem [shape: f32[54,128], index: 9, kind: input, shape index: {}]
  %s10 = inlined_call_operand.vmem [shape: f32[1,128], index: 10, kind: input, shape index: {}]
  %s11 = inlined_call_operand.vmem [shape: f32[128,128], index: 11, kind: input, shape index: {}]
  %s12 = inlined_call_operand.vmem [shape: f32[1,128], index: 12, kind: input, shape index: {}]
  %s13 = inlined_call_operand.vmem [shape: f32[128,7], index: 13, kind: input, shape index: {}]
  %s14 = inlined_call_operand.vmem [shape: f32[1,7], index: 14, kind: input, shape index: {}]
  %s15 = inlined_call_operand.hbm [shape: f32[2,7], index: 15, kind: output, shape index: {}]
  %s16 = sld [smem:[#allocation0]]
  $region70: #{tpu_custom_call.1} parent=0
    _
  %s18 = ssub.s32 1, %s16
  %s19 = scalar_select 0, %s18, %s16
  $region1: #{tpu_custom_call.1} parent=0
    #allocation2 [shape = 'u8[1024]{0}', space=vmem, size = 0x400, scoped, tag = 'output window, operand 0, single buffered']
    #allocation3 [shape = 's32[1]{0}', space=sflag, size = 0x4, scoped, tag = 'scoped memory for tpu_custom_call.1']
    %20 = vsyncpa [#allocation3], 0
    // Predicated region
    $region2: #{tpu_custom_call.1} parent=1 // pred_check
      _
    $region3: #{tpu_custom_call.1} parent=1 // pred_check_branch
      %22 = sbr.rel (0) target = $region5
    $region4: #{tpu_custom_call.1} parent=1 // pred_region
      _
    $region5: #{tpu_custom_call.1} parent=1 // pred_fallthru
      _
    // Predicated region
    $region6: #{tpu_custom_call.1} parent=1 // pred_check
      _
    $region7: #{tpu_custom_call.1} parent=1 // pred_check_branch
      %24 = sbr.rel (0) target = $region9
    $region8: #{tpu_custom_call.1} parent=1 // pred_region
      _
    $region9: #{tpu_custom_call.1} parent=1 // pred_fallthru
      _
    // Predicated region
    $region10: #{tpu_custom_call.1} parent=1 // pred_check
      _
    $region11: #{tpu_custom_call.1} parent=1 // pred_check_branch
      %26 = sbr.rel (0) target = $region13
    $region12: #{tpu_custom_call.1} parent=1 // pred_region
      _
    $region13: #{tpu_custom_call.1} parent=1 // pred_fallthru
      _
    // Predicated region
    $region14: #{tpu_custom_call.1} parent=1 // pred_check
      _
    $region15: #{tpu_custom_call.1} parent=1 // pred_check_branch
      %28 = sbr.rel (0) target = $region17
    $region16: #{tpu_custom_call.1} parent=1 // pred_region
      _
    $region17: #{tpu_custom_call.1} parent=1 // pred_fallthru
      _
    // Predicated region
    $region18: #{tpu_custom_call.1} parent=1 // pred_check
      _
    $region19: #{tpu_custom_call.1} parent=1 // pred_check_branch
      %30 = sbr.rel (0) target = $region21
    $region20: #{tpu_custom_call.1} parent=1 // pred_region
      _
    $region21: #{tpu_custom_call.1} parent=1 // pred_fallthru
      _
    // Predicated region
    $region22: #{tpu_custom_call.1} parent=1 // pred_check
      _
    $region23: #{tpu_custom_call.1} parent=1 // pred_check_branch
      %32 = sbr.rel (0) target = $region25
    $region24: #{tpu_custom_call.1} parent=1 // pred_region
      _
    $region25: #{tpu_custom_call.1} parent=1 // pred_fallthru
      _
    // Predicated region
    $region26: #{tpu_custom_call.1} parent=1 // pred_check
      _
    $region27: #{tpu_custom_call.1} parent=1 // pred_check_branch
      %34 = sbr.rel (0) target = $region29
    $region28: #{tpu_custom_call.1} parent=1 // pred_region
      _
    $region29: #{tpu_custom_call.1} parent=1 // pred_fallthru
      _
    // Predicated region
    $region30: #{tpu_custom_call.1} parent=1 // pred_check
      _
    $region31: #{tpu_custom_call.1} parent=1 // pred_check_branch
      %36 = sbr.rel (0) target = $region33
    $region32: #{tpu_custom_call.1} parent=1 // pred_region
      _
    $region33: #{tpu_custom_call.1} parent=1 // pred_fallthru
      _
    // Predicated region
    $region34: #{tpu_custom_call.1} parent=1 // pred_check
      _
    $region35: #{tpu_custom_call.1} parent=1 // pred_check_branch
      %38 = sbr.rel (0) target = $region37
    $region36: #{tpu_custom_call.1} parent=1 // pred_region
      _
    $region37: #{tpu_custom_call.1} parent=1 // pred_fallthru
      _
    // Predicated region
    $region38: #{tpu_custom_call.1} parent=1 // pred_check
      _
    $region39: #{tpu_custom_call.1} parent=1 // pred_check_branch
      %40 = sbr.rel (0) target = $region41
    $region40: #{tpu_custom_call.1} parent=1 // pred_region
      _
    $region41: #{tpu_custom_call.1} parent=1 // pred_fallthru
      _
    // Predicated region
    $region42: #{tpu_custom_call.1} parent=1 // pred_check
      _
    $region43: #{tpu_custom_call.1} parent=1 // pred_check_branch
      %42 = sbr.rel (0) target = $region45
    $region44: #{tpu_custom_call.1} parent=1 // pred_region
      _
    $region45: #{tpu_custom_call.1} parent=1 // pred_fallthru
      _
    // Predicated region
    $region46: #{tpu_custom_call.1} parent=1 // pred_check
      _
    $region47: #{tpu_custom_call.1} parent=1 // pred_check_branch
      %44 = sbr.rel (0) target = $region49
    $region48: #{tpu_custom_call.1} parent=1 // pred_region
      _
    $region49: #{tpu_custom_call.1} parent=1 // pred_fallthru
      _
    // Predicated region
    $region50: #{tpu_custom_call.1} parent=1 // pred_check
      _
    $region51: #{tpu_custom_call.1} parent=1 // pred_check_branch
      %46 = sbr.rel (0) target = $region53
    $region52: #{tpu_custom_call.1} parent=1 // pred_region
      _
    $region53: #{tpu_custom_call.1} parent=1 // pred_fallthru
      _
    // Predicated region
    $region54: #{tpu_custom_call.1} parent=1 // pred_check
      _
    $region55: #{tpu_custom_call.1} parent=1 // pred_check_branch
      %48 = sbr.rel (0) target = $region57
    $region56: #{tpu_custom_call.1} parent=1 // pred_region
      _
    $region57: #{tpu_custom_call.1} parent=1 // pred_fallthru
      _
    // Predicated region
    $region58: #{tpu_custom_call.1} parent=1 // pred_check
      _
    $region59: #{tpu_custom_call.1} parent=1 // pred_check_branch
      %50 = sbr.rel (0) target = $region61
    $region60: #{tpu_custom_call.1} parent=1 // pred_region
      _
    $region61: #{tpu_custom_call.1} parent=1 // pred_fallthru
      _
    %v51 = vld [vmem:[%s0] sm:$0x3]
    %v52 = vld [vmem:[%s1] sm:$0xff]
    %v53 = vld [vmem:[%s1 + $0x8] sm:$0xff]
    %v54 = vld [vmem:[%s1 + $0x10] sm:$0xff]
    %v55 = vld [vmem:[%s1 + $0x18] sm:$0xff]
    %v56 = vld [vmem:[%s1 + $0x20] sm:$0xff]
    %v57 = vld [vmem:[%s1 + $0x28] sm:$0xff]
    %v58 = vld [vmem:[%s1 + $0x30] sm:$0xff]
    %v59 = vld [vmem:[%s1 + $0x38] sm:$0xff]
    %v60 = vld [vmem:[%s1 + $0x40] sm:$0xff]
    %v61 = vld [vmem:[%s1 + $0x48] sm:$0xff]
    %v62 = vld [vmem:[%s1 + $0x50] sm:$0xff]
    %v63 = vld [vmem:[%s1 + $0x58] sm:$0xff]
    %v64 = vld [vmem:[%s1 + $0x60] sm:$0xff]
    %v65 = vld [vmem:[%s1 + $0x68] sm:$0xff]
    %v66 = vld [vmem:[%s1 + $0x70] sm:$0xff]
    %v67 = vld [vmem:[%s1 + $0x78] sm:$0xff]
    %v68 = vld [vmem:[%s1 + $0x80] sm:$0xff]
    %v69 = vld [vmem:[%s1 + $0x88] sm:$0xff]
    %v70 = vld [vmem:[%s1 + $0x90] sm:$0x3f]
    %v71 = vld [vmem:[%s1 + $0x98] sm:$0x3f]
    %v72 = vld [vmem:[%s1 + $0xa0] sm:$0x3f]
    %v73 = vld [vmem:[%s2] sm:$0x7]
    %v75 = vlaneseq
    %v76 = vshrl.u32 %v75, 7
    %v77 = vsub.s32 0, %v76
    %v78 = vrot.slane %v73, %v77
    %v79 = vlaneseq
    %v80 = vshrl.u32 %v79, 7
    %v81 = vsub.s32 1, %v80
    %v82 = vrot.slane %v73, %v81
    %v83 = vlaneseq
    %v84 = vshrl.u32 %v83, 7
    %v85 = vsub.s32 2, %v84
    %v86 = vrot.slane %v73, %v85
    %vm90 = vcmask 441344
    %v92 = vsel %vm90, %v51, 0
    %vm94 = vcmask 1045504
    %v96 = vsel %vm94, %v70, 0
    %v99 = vsel %vm94, %v71, 0
    %v102 = vsel %vm94, %v72, 0
    %104 = vmatprep.subr.mxu0 0.0
    %105 = vmatpush1.msra.mxu0 0.0
    %106 = vmatprep.subr.mxu0 0.0
    %107 = vmatpush1.msra.mxu0 0.0
    %108 = vmatprep.subr.mxu0 0.0
    %109 = vmatpush1.msra.mxu0 0.0
    %110 = vmatprep.subr.mxu0 0.0
    %111 = vmatpush1.msra.mxu0 0.0
    %112 = vmatprep.subr.mxu0 0.0
    %113 = vmatpush1.msra.mxu0 0.0
    %114 = vmatprep.subr.mxu0 0.0
    %115 = vmatpush1.msra.mxu0 0.0
    %116 = vmatprep.subr.mxu0 0.0
    %117 = vmatpush1.msra.mxu0 0.0
    %118 = vmatprep.subr.mxu0 0.0
    %119 = vmatpush1.msra.mxu0 0.0
    %120 = vmatprep.subr.mxu0 0.0
    %121 = vmatpush1.msra.mxu0 0.0
    %122 = vmatprep.subr.mxu0 %v99
    %123 = vmatpush1.msra.mxu0 %v96
    %124 = vmatprep.subr.mxu0 %v68
    %125 = vmatpush1.msra.mxu0 %v67
    %126 = vmatprep.subr.mxu0 %v65
    %127 = vmatpush1.msra.mxu0 %v64
    %128 = vmatprep.subr.mxu0 %v62
    %129 = vmatpush1.msra.mxu0 %v61
    %130 = vmatprep.subr.mxu0 %v59
    %131 = vmatpush1.msra.mxu0 %v58
    %132 = vmatprep.subr.mxu0 %v56
    %133 = vmatpush1.msra.mxu0 %v55
    %134 = vmatprep.subr.mxu0 %v53
    %135 = vmatpush1.msra.mxu0 %v52
    %136 = vmatprep.subr.mxu0 0.0
    %137 = vmatpush2.msra.mxu0 0.0
    %138 = vmatprep.subr.mxu0 0.0
    %139 = vmatpush2.msra.mxu0 0.0
    %140 = vmatprep.subr.mxu0 0.0
    %141 = vmatpush2.msra.mxu0 0.0
    %142 = vmatprep.subr.mxu0 0.0
    %143 = vmatpush2.msra.mxu0 0.0
    %144 = vmatprep.subr.mxu0 0.0
    %145 = vmatpush2.msra.mxu0 0.0
    %146 = vmatprep.subr.mxu0 0.0
    %147 = vmatpush2.msra.mxu0 0.0
    %148 = vmatprep.subr.mxu0 0.0
    %149 = vmatpush2.msra.mxu0 0.0
    %150 = vmatprep.subr.mxu0 0.0
    %151 = vmatpush2.msra.mxu0 0.0
    %152 = vmatprep.subr.mxu0 0.0
    %153 = vmatpush2.msra.mxu0 0.0
    %154 = vmatprep.subr.mxu0 0.0
    %155 = vmatpush2.msra.mxu0 0.0
    %156 = vmatprep.subr.mxu0 0.0
    %157 = vmatpush2.msra.mxu0 0.0
    %158 = vmatprep.subr.mxu0 0.0
    %159 = vmatpush2.msra.mxu0 0.0
    %160 = vmatprep.subr.mxu0 0.0
    %161 = vmatpush2.msra.mxu0 0.0
    %162 = vmatprep.subr.mxu0 0.0
    %163 = vmatpush2.msra.mxu0 0.0
    %164 = vmatprep.subr.mxu0 0.0
    %165 = vmatpush2.msra.mxu0 0.0
    %166 = vmatprep.subr.mxu0 0.0
    %167 = vmatpush2.msra.mxu0 0.0
    %168 = vmatprep.mubr.f32.mxu0 0.0
    %169 = vmatmul.mubr.f32.gmra.mxu0 %v92
    %v170 = vpop.f32.mrf.mxu0
    %v171 = vadd.f32 %v78, %v170
    %v172 = vpop.f32.mrf.mxu0
    %v173 = vadd.f32 %v82, %v172
    %174 = vdwg.mxu0
    %175 = vmatprep.subr.mxu0 0.0
    %176 = vmatpush1.msra.mxu0 0.0
    %177 = vmatprep.subr.mxu0 0.0
    %178 = vmatpush1.msra.mxu0 0.0
    %179 = vmatprep.subr.mxu0 0.0
    %180 = vmatpush1.msra.mxu0 0.0
    %181 = vmatprep.subr.mxu0 0.0
    %182 = vmatpush1.msra.mxu0 0.0
    %183 = vmatprep.subr.mxu0 0.0
    %184 = vmatpush1.msra.mxu0 0.0
    %185 = vmatprep.subr.mxu0 0.0
    %186 = vmatpush1.msra.mxu0 0.0
    %187 = vmatprep.subr.mxu0 0.0
    %188 = vmatpush1.msra.mxu0 0.0
    %189 = vmatprep.subr.mxu0 0.0
    %190 = vmatpush1.msra.mxu0 0.0
    %191 = vmatprep.subr.mxu0 0.0
    %192 = vmatpush1.msra.mxu0 0.0
    %193 = vmatprep.subr.mxu0 0.0
    %194 = vmatpush1.msra.mxu0 %v102
    %195 = vmatprep.subr.mxu0 0.0
    %196 = vmatpush1.msra.mxu0 %v69
    %197 = vmatprep.subr.mxu0 0.0
    %198 = vmatpush1.msra.mxu0 %v66
    %199 = vmatprep.subr.mxu0 0.0
    %200 = vmatpush1.msra.mxu0 %v63
    %201 = vmatprep.subr.mxu0 0.0
    %202 = vmatpush1.msra.mxu0 %v60
    %203 = vmatprep.subr.mxu0 0.0
    %204 = vmatpush1.msra.mxu0 %v57
    %205 = vmatprep.subr.mxu0 0.0
    %206 = vmatpush1.msra.mxu0 %v54
    %207 = vmatprep.subr.mxu0 0.0
    %208 = vmatpush2.msra.mxu0 0.0
    %209 = vmatprep.subr.mxu0 0.0
    %210 = vmatpush2.msra.mxu0 0.0
    %211 = vmatprep.subr.mxu0 0.0
    %212 = vmatpush2.msra.mxu0 0.0
    %213 = vmatprep.subr.mxu0 0.0
    %214 = vmatpush2.msra.mxu0 0.0
    %215 = vmatprep.subr.mxu0 0.0
    %216 = vmatpush2.msra.mxu0 0.0
    %217 = vmatprep.subr.mxu0 0.0
    %218 = vmatpush2.msra.mxu0 0.0
    %219 = vmatprep.subr.mxu0 0.0
    %220 = vmatpush2.msra.mxu0 0.0
    %221 = vmatprep.subr.mxu0 0.0
    %222 = vmatpush2.msra.mxu0 0.0
    %223 = vmatprep.subr.mxu0 0.0
    %224 = vmatpush2.msra.mxu0 0.0
    %225 = vmatprep.subr.mxu0 0.0
    %226 = vmatpush2.msra.mxu0 0.0
    %227 = vmatprep.subr.mxu0 0.0
    %228 = vmatpush2.msra.mxu0 0.0
    %229 = vmatprep.subr.mxu0 0.0
    %230 = vmatpush2.msra.mxu0 0.0
    %231 = vmatprep.subr.mxu0 0.0
    %232 = vmatpush2.msra.mxu0 0.0
    %233 = vmatprep.subr.mxu0 0.0
    %234 = vmatpush2.msra.mxu0 0.0
    %235 = vmatprep.subr.mxu0 0.0
    %236 = vmatpush2.msra.mxu0 0.0
    %237 = vmatprep.subr.mxu0 0.0
    %238 = vmatpush2.msra.mxu0 0.0
    %239 = vmatprep.mubr.f32.mxu0 0.0
    %240 = vmatmul.mubr.f32.gmra.mxu0 %v92
    %v241 = vpop.f32.mrf.mxu0
    %v242 = vadd.f32 %v86, %v241
    %v243 = vpop.f32.mrf.mxu0
    %244 = vdwg.mxu0
    %v245 = vxor.u32 %v171, 2147483648
    %v246 = vxor.u32 %v173, 2147483648
    %v247 = vxor.u32 %v242, 2147483648
    %v248 = vmul.f32 %v245, 1.442695
    %v249 = vpow.pop %v248
    %v250 = vmul.f32 %v246, 1.442695
    %v251 = vpow.pop %v250
    %v252 = vmul.f32 %v247, 1.442695
    %v253 = vpow.pop %v252
    %v254 = vadd.f32 %v249, 1.0
    %v255 = vadd.f32 %v251, 1.0
    %v256 = vadd.f32 %v253, 1.0
    %v257 = vrcp.pop %v254
    %v258 = vmul.f32 1.0, %v257
    %v259 = vrcp.pop %v255
    %v260 = vmul.f32 1.0, %v259
    %v261 = vrcp.pop %v256
    %v262 = vmul.f32 1.0, %v261
    %v263 = vld [vmem:[%s3] sm:$0xff]
    %v264 = vld [vmem:[%s3 + $0x8] sm:$0xff]
    %v265 = vld [vmem:[%s3 + $0x10] sm:$0xff]
    %v266 = vld [vmem:[%s3 + $0x18] sm:$0xff]
    %v267 = vld [vmem:[%s3 + $0x20] sm:$0xff]
    %v268 = vld [vmem:[%s3 + $0x28] sm:$0xff]
    %v269 = vld [vmem:[%s3 + $0x30] sm:$0xff]
    %v270 = vld [vmem:[%s3 + $0x38] sm:$0xff]
    %v271 = vld [vmem:[%s3 + $0x40] sm:$0xff]
    %v272 = vld [vmem:[%s3 + $0x48] sm:$0xff]
    %v273 = vld [vmem:[%s3 + $0x50] sm:$0xff]
    %v274 = vld [vmem:[%s3 + $0x58] sm:$0xff]
    %v275 = vld [vmem:[%s3 + $0x60] sm:$0xff]
    %v276 = vld [vmem:[%s3 + $0x68] sm:$0xff]
    %v277 = vld [vmem:[%s3 + $0x70] sm:$0xff]
    %v278 = vld [vmem:[%s3 + $0x78] sm:$0xff]
    %v279 = vld [vmem:[%s3 + $0x80] sm:$0xff]
    %v280 = vld [vmem:[%s3 + $0x88] sm:$0xff]
    %v281 = vld [vmem:[%s3 + $0x90] sm:$0xff]
    %v282 = vld [vmem:[%s3 + $0x98] sm:$0xff]
    %v283 = vld [vmem:[%s3 + $0xa0] sm:$0xff]
    %v284 = vld [vmem:[%s3 + $0xa8] sm:$0xff]
    %v285 = vld [vmem:[%s3 + $0xb0] sm:$0xff]
    %v286 = vld [vmem:[%s3 + $0xb8] sm:$0xff]
    %v287 = vld [vmem:[%s3 + $0xc0] sm:$0xff]
    %v288 = vld [vmem:[%s3 + $0xc8] sm:$0xff]
    %v289 = vld [vmem:[%s3 + $0xd0] sm:$0xff]
    %v290 = vld [vmem:[%s3 + $0xd8] sm:$0xff]
    %v291 = vld [vmem:[%s3 + $0xe0] sm:$0xff]
    %v292 = vld [vmem:[%s3 + $0xe8] sm:$0xff]
    %v293 = vld [vmem:[%s3 + $0xf0] sm:$0xff]
    %v294 = vld [vmem:[%s3 + $0xf8] sm:$0xff]
    %v295 = vld [vmem:[%s3 + $0x100] sm:$0xff]
    %v296 = vld [vmem:[%s3 + $0x108] sm:$0xff]
    %v297 = vld [vmem:[%s3 + $0x110] sm:$0xff]
    %v298 = vld [vmem:[%s3 + $0x118] sm:$0xff]
    %v299 = vld [vmem:[%s3 + $0x120] sm:$0xff]
    %v300 = vld [vmem:[%s3 + $0x128] sm:$0xff]
    %v301 = vld [vmem:[%s3 + $0x130] sm:$0xff]
    %v302 = vld [vmem:[%s3 + $0x138] sm:$0xff]
    %v303 = vld [vmem:[%s3 + $0x140] sm:$0xff]
    %v304 = vld [vmem:[%s3 + $0x148] sm:$0xff]
    %v305 = vld [vmem:[%s3 + $0x150] sm:$0xff]
    %v306 = vld [vmem:[%s3 + $0x158] sm:$0xff]
    %v307 = vld [vmem:[%s3 + $0x160] sm:$0xff]
    %v308 = vld [vmem:[%s3 + $0x168] sm:$0xff]
    %v309 = vld [vmem:[%s3 + $0x170] sm:$0xff]
    %v310 = vld [vmem:[%s3 + $0x178] sm:$0xff]
    %v311 = vld [vmem:[%s3 + $0x180] sm:$0xff]
    %v312 = vld [vmem:[%s3 + $0x188] sm:$0xff]
    %v313 = vld [vmem:[%s3 + $0x190] sm:$0xff]
    %v314 = vld [vmem:[%s3 + $0x198] sm:$0xff]
    %v315 = vld [vmem:[%s3 + $0x1a0] sm:$0xff]
    %v316 = vld [vmem:[%s3 + $0x1a8] sm:$0xff]
    %v317 = vld [vmem:[%s3 + $0x1b0] sm:$0xff]
    %v318 = vld [vmem:[%s3 + $0x1b8] sm:$0xff]
    %v319 = vld [vmem:[%s3 + $0x1c0] sm:$0xff]
    %v320 = vld [vmem:[%s3 + $0x1c8] sm:$0xff]
    %v321 = vld [vmem:[%s3 + $0x1d0] sm:$0xff]
    %v322 = vld [vmem:[%s3 + $0x1d8] sm:$0xff]
    %v323 = vld [vmem:[%s3 + $0x1e0] sm:$0xff]
    %v324 = vld [vmem:[%s3 + $0x1e8] sm:$0xff]
    %v325 = vld [vmem:[%s3 + $0x1f0] sm:$0xff]
    %v326 = vld [vmem:[%s3 + $0x1f8] sm:$0xff]
    %v327 = vld [vmem:[%s3 + $0x200] sm:$0xff]
    %v328 = vld [vmem:[%s3 + $0x208] sm:$0xff]
    %v329 = vld [vmem:[%s3 + $0x210] sm:$0xff]
    %v330 = vld [vmem:[%s3 + $0x218] sm:$0xff]
    %v331 = vld [vmem:[%s3 + $0x220] sm:$0xff]
    %v332 = vld [vmem:[%s3 + $0x228] sm:$0xff]
    %v333 = vld [vmem:[%s3 + $0x230] sm:$0xff]
    %v334 = vld [vmem:[%s3 + $0x238] sm:$0xff]
    %v335 = vld [vmem:[%s3 + $0x240] sm:$0xff]
    %v336 = vld [vmem:[%s3 + $0x248] sm:$0xff]
    %v337 = vld [vmem:[%s3 + $0x250] sm:$0xff]
    %v338 = vld [vmem:[%s3 + $0x258] sm:$0xff]
    %v339 = vld [vmem:[%s3 + $0x260] sm:$0xff]
    %v340 = vld [vmem:[%s3 + $0x268] sm:$0xff]
    %v341 = vld [vmem:[%s3 + $0x270] sm:$0xff]
    %v342 = vld [vmem:[%s3 + $0x278] sm:$0xff]
    %v343 = vld [vmem:[%s3 + $0x280] sm:$0xff]
    %v344 = vld [vmem:[%s3 + $0x288] sm:$0xff]
    %v345 = vld [vmem:[%s3 + $0x290] sm:$0xff]
    %v346 = vld [vmem:[%s3 + $0x298] sm:$0xff]
    %v347 = vld [vmem:[%s3 + $0x2a0] sm:$0xff]
    %v348 = vld [vmem:[%s3 + $0x2a8] sm:$0xff]
    %v349 = vld [vmem:[%s3 + $0x2b0] sm:$0xff]
    %v350 = vld [vmem:[%s3 + $0x2b8] sm:$0xff]
    %v351 = vld [vmem:[%s3 + $0x2c0] sm:$0xff]
    %v352 = vld [vmem:[%s3 + $0x2c8] sm:$0xff]
    %v353 = vld [vmem:[%s3 + $0x2d0] sm:$0xff]
    %v354 = vld [vmem:[%s3 + $0x2d8] sm:$0xff]
    %v355 = vld [vmem:[%s3 + $0x2e0] sm:$0xff]
    %v356 = vld [vmem:[%s3 + $0x2e8] sm:$0xff]
    %v357 = vld [vmem:[%s3 + $0x2f0] sm:$0xff]
    %v358 = vld [vmem:[%s3 + $0x2f8] sm:$0xff]
    %v359 = vld [vmem:[%s3 + $0x300] sm:$0xff]
    %v360 = vld [vmem:[%s3 + $0x308] sm:$0xff]
    %v361 = vld [vmem:[%s3 + $0x310] sm:$0xff]
    %v362 = vld [vmem:[%s3 + $0x318] sm:$0xff]
    %v363 = vld [vmem:[%s3 + $0x320] sm:$0xff]
    %v364 = vld [vmem:[%s3 + $0x328] sm:$0xff]
    %v365 = vld [vmem:[%s3 + $0x330] sm:$0xff]
    %v366 = vld [vmem:[%s3 + $0x338] sm:$0xff]
    %v367 = vld [vmem:[%s3 + $0x340] sm:$0xff]
    %v368 = vld [vmem:[%s3 + $0x348] sm:$0xff]
    %v369 = vld [vmem:[%s3 + $0x350] sm:$0xff]
    %v370 = vld [vmem:[%s3 + $0x358] sm:$0xff]
    %v371 = vld [vmem:[%s3 + $0x360] sm:$0xff]
    %v372 = vld [vmem:[%s3 + $0x368] sm:$0xff]
    %v373 = vld [vmem:[%s3 + $0x370] sm:$0xff]
    %v374 = vld [vmem:[%s3 + $0x378] sm:$0xff]
    %v375 = vld [vmem:[%s3 + $0x380] sm:$0xff]
    %v376 = vld [vmem:[%s3 + $0x388] sm:$0xff]
    %v377 = vld [vmem:[%s3 + $0x390] sm:$0xff]
    %v378 = vld [vmem:[%s3 + $0x398] sm:$0xff]
    %v379 = vld [vmem:[%s3 + $0x3a0] sm:$0xff]
    %v380 = vld [vmem:[%s3 + $0x3a8] sm:$0xff]
    %v381 = vld [vmem:[%s3 + $0x3b0] sm:$0xff]
    %v382 = vld [vmem:[%s3 + $0x3b8] sm:$0xff]
    %v383 = vld [vmem:[%s3 + $0x3c0] sm:$0xff]
    %v384 = vld [vmem:[%s3 + $0x3c8] sm:$0xff]
    %v385 = vld [vmem:[%s3 + $0x3d0] sm:$0xff]
    %v386 = vld [vmem:[%s3 + $0x3d8] sm:$0xff]
    %v387 = vld [vmem:[%s3 + $0x3e0] sm:$0xff]
    %v388 = vld [vmem:[%s3 + $0x3e8] sm:$0xff]
    %v389 = vld [vmem:[%s3 + $0x3f0] sm:$0xff]
    %v390 = vld [vmem:[%s3 + $0x3f8] sm:$0xff]
    %v391 = vld [vmem:[%s3 + $0x400] sm:$0xff]
    %v392 = vld [vmem:[%s3 + $0x408] sm:$0xff]
    %v393 = vld [vmem:[%s3 + $0x410] sm:$0xff]
    %v394 = vld [vmem:[%s3 + $0x418] sm:$0xff]
    %v395 = vld [vmem:[%s3 + $0x420] sm:$0xff]
    %v396 = vld [vmem:[%s3 + $0x428] sm:$0xff]
    %v397 = vld [vmem:[%s3 + $0x430] sm:$0xff]
    %v398 = vld [vmem:[%s3 + $0x438] sm:$0xff]
    %v399 = vld [vmem:[%s3 + $0x440] sm:$0xff]
    %v400 = vld [vmem:[%s3 + $0x448] sm:$0xff]
    %v401 = vld [vmem:[%s3 + $0x450] sm:$0xff]
    %v402 = vld [vmem:[%s3 + $0x458] sm:$0xff]
    %v403 = vld [vmem:[%s3 + $0x460] sm:$0xff]
    %v404 = vld [vmem:[%s3 + $0x468] sm:$0xff]
    %v405 = vld [vmem:[%s3 + $0x470] sm:$0xff]
    %v406 = vld [vmem:[%s3 + $0x478] sm:$0xff]
    %v407 = vld [vmem:[%s3 + $0x480] sm:$0xff]
    %v408 = vld [vmem:[%s3 + $0x488] sm:$0xff]
    %v409 = vld [vmem:[%s3 + $0x490] sm:$0xff]
    %v410 = vld [vmem:[%s3 + $0x498] sm:$0xff]
    %v411 = vld [vmem:[%s3 + $0x4a0] sm:$0xff]
    %v412 = vld [vmem:[%s3 + $0x4a8] sm:$0xff]
    %v413 = vld [vmem:[%s3 + $0x4b0] sm:$0xff]
    %v414 = vld [vmem:[%s3 + $0x4b8] sm:$0xff]
    %v415 = vld [vmem:[%s3 + $0x4c0] sm:$0xff]
    %v416 = vld [vmem:[%s3 + $0x4c8] sm:$0xff]
    %v417 = vld [vmem:[%s3 + $0x4d0] sm:$0xff]
    %v418 = vld [vmem:[%s3 + $0x4d8] sm:$0xff]
    %v419 = vld [vmem:[%s3 + $0x4e0] sm:$0xff]
    %v420 = vld [vmem:[%s3 + $0x4e8] sm:$0xff]
    %v421 = vld [vmem:[%s3 + $0x4f0] sm:$0xff]
    %v422 = vld [vmem:[%s3 + $0x4f8] sm:$0xff]
    %v423 = vld [vmem:[%s3 + $0x500] sm:$0xff]
    %v424 = vld [vmem:[%s3 + $0x508] sm:$0xff]
    %v425 = vld [vmem:[%s3 + $0x510] sm:$0xff]
    %v426 = vld [vmem:[%s3 + $0x518] sm:$0xff]
    %v427 = vld [vmem:[%s3 + $0x520] sm:$0xff]
    %v428 = vld [vmem:[%s3 + $0x528] sm:$0xff]
    %v429 = vld [vmem:[%s3 + $0x530] sm:$0xff]
    %v430 = vld [vmem:[%s3 + $0x538] sm:$0xff]
    %v431 = vld [vmem:[%s3 + $0x540] sm:$0xff]
    %v432 = vld [vmem:[%s3 + $0x548] sm:$0xff]
    %v433 = vld [vmem:[%s3 + $0x550] sm:$0xff]
    %v434 = vld [vmem:[%s3 + $0x558] sm:$0xff]
    %v435 = vld [vmem:[%s3 + $0x560] sm:$0xff]
    %v436 = vld [vmem:[%s3 + $0x568] sm:$0xff]
    %v437 = vld [vmem:[%s3 + $0x570] sm:$0xff]
    %v438 = vld [vmem:[%s3 + $0x578] sm:$0xff]
    %v439 = vld [vmem:[%s3 + $0x580] sm:$0xff]
    %v440 = vld [vmem:[%s3 + $0x588] sm:$0xff]
    %v441 = vld [vmem:[%s3 + $0x590] sm:$0xff]
    %v442 = vld [vmem:[%s3 + $0x598] sm:$0xff]
    %v443 = vld [vmem:[%s3 + $0x5a0] sm:$0xff]
    %v444 = vld [vmem:[%s3 + $0x5a8] sm:$0xff]
    %v445 = vld [vmem:[%s3 + $0x5b0] sm:$0xff]
    %v446 = vld [vmem:[%s3 + $0x5b8] sm:$0xff]
    %v447 = vld [vmem:[%s3 + $0x5c0] sm:$0xff]
    %v448 = vld [vmem:[%s3 + $0x5c8] sm:$0xff]
    %v449 = vld [vmem:[%s3 + $0x5d0] sm:$0xff]
    %v450 = vld [vmem:[%s3 + $0x5d8] sm:$0xff]
    %v451 = vld [vmem:[%s3 + $0x5e0] sm:$0xff]
    %v452 = vld [vmem:[%s3 + $0x5e8] sm:$0xff]
    %v453 = vld [vmem:[%s3 + $0x5f0] sm:$0xff]
    %v454 = vld [vmem:[%s3 + $0x5f8] sm:$0xff]
    %v455 = vld [vmem:[%s3 + $0x600] sm:$0xff]
    %v456 = vld [vmem:[%s3 + $0x608] sm:$0xff]
    %v457 = vld [vmem:[%s3 + $0x610] sm:$0xff]
    %v458 = vld [vmem:[%s3 + $0x618] sm:$0xff]
    %v459 = vld [vmem:[%s3 + $0x620] sm:$0xff]
    %v460 = vld [vmem:[%s3 + $0x628] sm:$0xff]
    %v461 = vld [vmem:[%s3 + $0x630] sm:$0xff]
    %v462 = vld [vmem:[%s3 + $0x638] sm:$0xff]
    %v463 = vld [vmem:[%s3 + $0x640] sm:$0xff]
    %v464 = vld [vmem:[%s3 + $0x648] sm:$0xff]
    %v465 = vld [vmem:[%s3 + $0x650] sm:$0xff]
    %v466 = vld [vmem:[%s3 + $0x658] sm:$0xff]
    %v467 = vld [vmem:[%s3 + $0x660] sm:$0xff]
    %v468 = vld [vmem:[%s3 + $0x668] sm:$0xff]
    %v469 = vld [vmem:[%s3 + $0x670] sm:$0xff]
    %v470 = vld [vmem:[%s3 + $0x678] sm:$0xff]
    %v471 = vld [vmem:[%s3 + $0x680] sm:$0xff]
    %v472 = vld [vmem:[%s3 + $0x688] sm:$0xff]
    %v473 = vld [vmem:[%s3 + $0x690] sm:$0xff]
    %v474 = vld [vmem:[%s3 + $0x698] sm:$0xff]
    %v475 = vld [vmem:[%s3 + $0x6a0] sm:$0xff]
    %v476 = vld [vmem:[%s3 + $0x6a8] sm:$0xff]
    %v477 = vld [vmem:[%s3 + $0x6b0] sm:$0xff]
    %v478 = vld [vmem:[%s3 + $0x6b8] sm:$0xff]
    %v479 = vld [vmem:[%s3 + $0x6c0] sm:$0xff]
    %v480 = vld [vmem:[%s3 + $0x6c8] sm:$0xff]
    %v481 = vld [vmem:[%s3 + $0x6d0] sm:$0xff]
    %v482 = vld [vmem:[%s3 + $0x6d8] sm:$0xff]
    %v483 = vld [vmem:[%s3 + $0x6e0] sm:$0xff]
    %v484 = vld [vmem:[%s3 + $0x6e8] sm:$0xff]
    %v485 = vld [vmem:[%s3 + $0x6f0] sm:$0xff]
    %v486 = vld [vmem:[%s3 + $0x6f8] sm:$0xff]
    %v487 = vld [vmem:[%s3 + $0x700] sm:$0xff]
    %v488 = vld [vmem:[%s3 + $0x708] sm:$0xff]
    %v489 = vld [vmem:[%s3 + $0x710] sm:$0xff]
    %v490 = vld [vmem:[%s3 + $0x718] sm:$0xff]
    %v491 = vld [vmem:[%s3 + $0x720] sm:$0xff]
    %v492 = vld [vmem:[%s3 + $0x728] sm:$0xff]
    %v493 = vld [vmem:[%s3 + $0x730] sm:$0xff]
    %v494 = vld [vmem:[%s3 + $0x738] sm:$0xff]
    %v495 = vld [vmem:[%s3 + $0x740] sm:$0xff]
    %v496 = vld [vmem:[%s3 + $0x748] sm:$0xff]
    %v497 = vld [vmem:[%s3 + $0x750] sm:$0xff]
    %v498 = vld [vmem:[%s3 + $0x758] sm:$0xff]
    %v499 = vld [vmem:[%s3 + $0x760] sm:$0xff]
    %v500 = vld [vmem:[%s3 + $0x768] sm:$0xff]
    %v501 = vld [vmem:[%s3 + $0x770] sm:$0xff]
    %v502 = vld [vmem:[%s3 + $0x778] sm:$0xff]
    %v503 = vld [vmem:[%s3 + $0x780] sm:$0xff]
    %v504 = vld [vmem:[%s3 + $0x788] sm:$0xff]
    %v505 = vld [vmem:[%s3 + $0x790] sm:$0xff]
    %v506 = vld [vmem:[%s3 + $0x798] sm:$0xff]
    %v507 = vld [vmem:[%s3 + $0x7a0] sm:$0xff]
    %v508 = vld [vmem:[%s3 + $0x7a8] sm:$0xff]
    %v509 = vld [vmem:[%s3 + $0x7b0] sm:$0xff]
    %v510 = vld [vmem:[%s3 + $0x7b8] sm:$0xff]
    %v511 = vld [vmem:[%s3 + $0x7c0] sm:$0xff]
    %v512 = vld [vmem:[%s3 + $0x7c8] sm:$0xff]
    %v513 = vld [vmem:[%s3 + $0x7d0] sm:$0xff]
    %v514 = vld [vmem:[%s3 + $0x7d8] sm:$0xff]
    %v515 = vld [vmem:[%s3 + $0x7e0] sm:$0xff]
    %v516 = vld [vmem:[%s3 + $0x7e8] sm:$0xff]
    %v517 = vld [vmem:[%s3 + $0x7f0] sm:$0xff]
    %v518 = vld [vmem:[%s3 + $0x7f8] sm:$0xff]
    %v519 = vld [vmem:[%s3 + $0x800] sm:$0xff]
    %v520 = vld [vmem:[%s3 + $0x808] sm:$0xff]
    %v521 = vld [vmem:[%s3 + $0x810] sm:$0xff]
    %v522 = vld [vmem:[%s3 + $0x818] sm:$0xff]
    %v523 = vld [vmem:[%s3 + $0x820] sm:$0xff]
    %v524 = vld [vmem:[%s3 + $0x828] sm:$0xff]
    %v525 = vld [vmem:[%s3 + $0x830] sm:$0xff]
    %v526 = vld [vmem:[%s3 + $0x838] sm:$0xff]
    %v527 = vld [vmem:[%s3 + $0x840] sm:$0xff]
    %v528 = vld [vmem:[%s3 + $0x848] sm:$0xff]
    %v529 = vld [vmem:[%s3 + $0x850] sm:$0xff]
    %v530 = vld [vmem:[%s3 + $0x858] sm:$0xff]
    %v531 = vld [vmem:[%s3 + $0x860] sm:$0xff]
    %v532 = vld [vmem:[%s3 + $0x868] sm:$0xff]
    %v533 = vld [vmem:[%s3 + $0x870] sm:$0xff]
    %v534 = vld [vmem:[%s3 + $0x878] sm:$0xff]
    %v535 = vld [vmem:[%s3 + $0x880] sm:$0xff]
    %v536 = vld [vmem:[%s3 + $0x888] sm:$0xff]
    %v537 = vld [vmem:[%s3 + $0x890] sm:$0xff]
    %v538 = vld [vmem:[%s3 + $0x898] sm:$0xff]
    %v539 = vld [vmem:[%s3 + $0x8a0] sm:$0xff]
    %v540 = vld [vmem:[%s3 + $0x8a8] sm:$0xff]
    %v541 = vld [vmem:[%s3 + $0x8b0] sm:$0xff]
    %v542 = vld [vmem:[%s3 + $0x8b8] sm:$0xff]
    %v543 = vld [vmem:[%s3 + $0x8c0] sm:$0xff]
    %v544 = vld [vmem:[%s3 + $0x8c8] sm:$0xff]
    %v545 = vld [vmem:[%s3 + $0x8d0] sm:$0xff]
    %v546 = vld [vmem:[%s3 + $0x8d8] sm:$0xff]
    %v547 = vld [vmem:[%s3 + $0x8e0] sm:$0xff]
    %v548 = vld [vmem:[%s3 + $0x8e8] sm:$0xff]
    %v549 = vld [vmem:[%s3 + $0x8f0] sm:$0xff]
    %v550 = vld [vmem:[%s3 + $0x8f8] sm:$0xff]
    %v551 = vld [vmem:[%s4] sm:$0x3f]
    %v553 = vlaneseq
    %v554 = vshrl.u32 %v553, 7
    %v555 = vsub.s32 0, %v554
    %v556 = vrot.slane %v551, %v555
    %v557 = vlaneseq
    %v558 = vshrl.u32 %v557, 7
    %v559 = vsub.s32 1, %v558
    %v560 = vrot.slane %v551, %v559
    %v561 = vlaneseq
    %v562 = vshrl.u32 %v561, 7
    %v563 = vsub.s32 2, %v562
    %v564 = vrot.slane %v551, %v563
    %v565 = vlaneseq
    %v566 = vshrl.u32 %v565, 7
    %v567 = vsub.s32 3, %v566
    %v568 = vrot.slane %v551, %v567
    %v569 = vlaneseq
    %v570 = vshrl.u32 %v569, 7
    %v571 = vsub.s32 4, %v570
    %v572 = vrot.slane %v551, %v571
    %v573 = vlaneseq
    %v574 = vshrl.u32 %v573, 7
    %v575 = vsub.s32 5, %v574
    %v576 = vrot.slane %v551, %v575
    %583 = vmatprep.subr.mxu0 %v354
    %584 = vmatpush1.msra.mxu0 %v353
    %585 = vmatprep.subr.mxu0 %v348
    %586 = vmatpush1.msra.mxu0 %v347
    %587 = vmatprep.subr.mxu0 %v342
    %588 = vmatpush1.msra.mxu0 %v341
    %589 = vmatprep.subr.mxu0 %v336
    %590 = vmatpush1.msra.mxu0 %v335
    %591 = vmatprep.subr.mxu0 %v330
    %592 = vmatpush1.msra.mxu0 %v329
    %593 = vmatprep.subr.mxu0 %v324
    %594 = vmatpush1.msra.mxu0 %v323
    %595 = vmatprep.subr.mxu0 %v318
    %596 = vmatpush1.msra.mxu0 %v317
    %597 = vmatprep.subr.mxu0 %v312
    %598 = vmatpush1.msra.mxu0 %v311
    %599 = vmatprep.subr.mxu0 %v306
    %600 = vmatpush1.msra.mxu0 %v305
    %601 = vmatprep.subr.mxu0 %v300
    %602 = vmatpush1.msra.mxu0 %v299
    %603 = vmatprep.subr.mxu0 %v294
    %604 = vmatpush1.msra.mxu0 %v293
    %605 = vmatprep.subr.mxu0 %v288
    %606 = vmatpush1.msra.mxu0 %v287
    %607 = vmatprep.subr.mxu0 %v282
    %608 = vmatpush1.msra.mxu0 %v281
    %609 = vmatprep.subr.mxu0 %v276
    %610 = vmatpush1.msra.mxu0 %v275
    %611 = vmatprep.subr.mxu0 %v270
    %612 = vmatpush1.msra.mxu0 %v269
    %613 = vmatprep.subr.mxu0 %v264
    %614 = vmatpush1.msra.mxu0 %v263
    %615 = vmatprep.subr.mxu0 %v450
    %616 = vmatpush2.msra.mxu0 %v449
    %617 = vmatprep.subr.mxu0 %v444
    %618 = vmatpush2.msra.mxu0 %v443
    %619 = vmatprep.subr.mxu0 %v438
    %620 = vmatpush2.msra.mxu0 %v437
    %621 = vmatprep.subr.mxu0 %v432
    %622 = vmatpush2.msra.mxu0 %v431
    %623 = vmatprep.subr.mxu0 %v426
    %624 = vmatpush2.msra.mxu0 %v425
    %625 = vmatprep.subr.mxu0 %v420
    %626 = vmatpush2.msra.mxu0 %v419
    %627 = vmatprep.subr.mxu0 %v414
    %628 = vmatpush2.msra.mxu0 %v413
    %629 = vmatprep.subr.mxu0 %v408
    %630 = vmatpush2.msra.mxu0 %v407
    %631 = vmatprep.subr.mxu0 %v402
    %632 = vmatpush2.msra.mxu0 %v401
    %633 = vmatprep.subr.mxu0 %v396
    %634 = vmatpush2.msra.mxu0 %v395
    %635 = vmatprep.subr.mxu0 %v390
    %636 = vmatpush2.msra.mxu0 %v389
    %637 = vmatprep.subr.mxu0 %v384
    %638 = vmatpush2.msra.mxu0 %v383
    %639 = vmatprep.subr.mxu0 %v378
    %640 = vmatpush2.msra.mxu0 %v377
    %641 = vmatprep.subr.mxu0 %v372
    %642 = vmatpush2.msra.mxu0 %v371
    %643 = vmatprep.subr.mxu0 %v366
    %644 = vmatpush2.msra.mxu0 %v365
    %645 = vmatprep.subr.mxu0 %v360
    %646 = vmatpush2.msra.mxu0 %v359
    %647 = vmatprep.mubr.f32.mxu0 %v260
    %648 = vmatmul.mubr.f32.gmra.mxu0 %v258
    %v649 = vpop.f32.mrf.mxu0
    %v650 = vadd.f32 %v556, %v649
    %v651 = vpop.f32.mrf.mxu0
    %v652 = vadd.f32 %v560, %v651
    %653 = vdwg.mxu0
    %654 = vmatprep.subr.mxu0 %v546
    %655 = vmatpush1.msra.mxu0 %v545
    %656 = vmatprep.subr.mxu0 %v540
    %657 = vmatpush1.msra.mxu0 %v539
    %658 = vmatprep.subr.mxu0 %v534
    %659 = vmatpush1.msra.mxu0 %v533
    %660 = vmatprep.subr.mxu0 %v528
    %661 = vmatpush1.msra.mxu0 %v527
    %662 = vmatprep.subr.mxu0 %v522
    %663 = vmatpush1.msra.mxu0 %v521
    %664 = vmatprep.subr.mxu0 %v516
    %665 = vmatpush1.msra.mxu0 %v515
    %666 = vmatprep.subr.mxu0 %v510
    %667 = vmatpush1.msra.mxu0 %v509
    %668 = vmatprep.subr.mxu0 %v504
    %669 = vmatpush1.msra.mxu0 %v503
    %670 = vmatprep.subr.mxu0 %v498
    %671 = vmatpush1.msra.mxu0 %v497
    %672 = vmatprep.subr.mxu0 %v492
    %673 = vmatpush1.msra.mxu0 %v491
    %674 = vmatprep.subr.mxu0 %v486
    %675 = vmatpush1.msra.mxu0 %v485
    %676 = vmatprep.subr.mxu0 %v480
    %677 = vmatpush1.msra.mxu0 %v479
    %678 = vmatprep.subr.mxu0 %v474
    %679 = vmatpush1.msra.mxu0 %v473
    %680 = vmatprep.subr.mxu0 %v468
    %681 = vmatpush1.msra.mxu0 %v467
    %682 = vmatprep.subr.mxu0 %v462
    %683 = vmatpush1.msra.mxu0 %v461
    %684 = vmatprep.subr.mxu0 %v456
    %685 = vmatpush1.msra.mxu0 %v455
    %686 = vmatprep.subr.mxu0 0.0
    %687 = vmatpush2.msra.mxu0 0.0
    %688 = vmatprep.subr.mxu0 0.0
    %689 = vmatpush2.msra.mxu0 0.0
    %690 = vmatprep.subr.mxu0 0.0
    %691 = vmatpush2.msra.mxu0 0.0
    %692 = vmatprep.subr.mxu0 0.0
    %693 = vmatpush2.msra.mxu0 0.0
    %694 = vmatprep.subr.mxu0 0.0
    %695 = vmatpush2.msra.mxu0 0.0
    %696 = vmatprep.subr.mxu0 0.0
    %697 = vmatpush2.msra.mxu0 0.0
    %698 = vmatprep.subr.mxu0 0.0
    %699 = vmatpush2.msra.mxu0 0.0
    %700 = vmatprep.subr.mxu0 0.0
    %701 = vmatpush2.msra.mxu0 0.0
    %702 = vmatprep.subr.mxu0 0.0
    %703 = vmatpush2.msra.mxu0 0.0
    %704 = vmatprep.subr.mxu0 0.0
    %705 = vmatpush2.msra.mxu0 0.0
    %706 = vmatprep.subr.mxu0 0.0
    %707 = vmatpush2.msra.mxu0 0.0
    %708 = vmatprep.subr.mxu0 0.0
    %709 = vmatpush2.msra.mxu0 0.0
    %710 = vmatprep.subr.mxu0 0.0
    %711 = vmatpush2.msra.mxu0 0.0
    %712 = vmatprep.subr.mxu0 0.0
    %713 = vmatpush2.msra.mxu0 0.0
    %714 = vmatprep.subr.mxu0 0.0
    %715 = vmatpush2.msra.mxu0 0.0
    %716 = vmatprep.subr.mxu0 0.0
    %717 = vmatpush2.msra.mxu0 0.0
    %718 = vmatprep.mubr.f32.mxu0 0.0
    %719 = vmatmul.mubr.f32.gmra.mxu0 %v262
    %v720 = vpop.f32.mrf.mxu0
    %v721 = vadd.f32 %v650, %v720
    %v722 = vpop.f32.mrf.mxu0
    %v723 = vadd.f32 %v652, %v722
    %724 = vdwg.mxu0
    %725 = vmatprep.subr.mxu0 %v356
    %726 = vmatpush1.msra.mxu0 %v355
    %727 = vmatprep.subr.mxu0 %v350
    %728 = vmatpush1.msra.mxu0 %v349
    %729 = vmatprep.subr.mxu0 %v344
    %730 = vmatpush1.msra.mxu0 %v343
    %731 = vmatprep.subr.mxu0 %v338
    %732 = vmatpush1.msra.mxu0 %v337
    %733 = vmatprep.subr.mxu0 %v332
    %734 = vmatpush1.msra.mxu0 %v331
    %735 = vmatprep.subr.mxu0 %v326
    %736 = vmatpush1.msra.mxu0 %v325
    %737 = vmatprep.subr.mxu0 %v320
    %738 = vmatpush1.msra.mxu0 %v319
    %739 = vmatprep.subr.mxu0 %v314
    %740 = vmatpush1.msra.mxu0 %v313
    %741 = vmatprep.subr.mxu0 %v308
    %742 = vmatpush1.msra.mxu0 %v307
    %743 = vmatprep.subr.mxu0 %v302
    %744 = vmatpush1.msra.mxu0 %v301
    %745 = vmatprep.subr.mxu0 %v296
    %746 = vmatpush1.msra.mxu0 %v295
    %747 = vmatprep.subr.mxu0 %v290
    %748 = vmatpush1.msra.mxu0 %v289
    %749 = vmatprep.subr.mxu0 %v284
    %750 = vmatpush1.msra.mxu0 %v283
    %751 = vmatprep.subr.mxu0 %v278
    %752 = vmatpush1.msra.mxu0 %v277
    %753 = vmatprep.subr.mxu0 %v272
    %754 = vmatpush1.msra.mxu0 %v271
    %755 = vmatprep.subr.mxu0 %v266
    %756 = vmatpush1.msra.mxu0 %v265
    %757 = vmatprep.subr.mxu0 %v452
    %758 = vmatpush2.msra.mxu0 %v451
    %759 = vmatprep.subr.mxu0 %v446
    %760 = vmatpush2.msra.mxu0 %v445
    %761 = vmatprep.subr.mxu0 %v440
    %762 = vmatpush2.msra.mxu0 %v439
    %763 = vmatprep.subr.mxu0 %v434
    %764 = vmatpush2.msra.mxu0 %v433
    %765 = vmatprep.subr.mxu0 %v428
    %766 = vmatpush2.msra.mxu0 %v427
    %767 = vmatprep.subr.mxu0 %v422
    %768 = vmatpush2.msra.mxu0 %v421
    %769 = vmatprep.subr.mxu0 %v416
    %770 = vmatpush2.msra.mxu0 %v415
    %771 = vmatprep.subr.mxu0 %v410
    %772 = vmatpush2.msra.mxu0 %v409
    %773 = vmatprep.subr.mxu0 %v404
    %774 = vmatpush2.msra.mxu0 %v403
    %775 = vmatprep.subr.mxu0 %v398
    %776 = vmatpush2.msra.mxu0 %v397
    %777 = vmatprep.subr.mxu0 %v392
    %778 = vmatpush2.msra.mxu0 %v391
    %779 = vmatprep.subr.mxu0 %v386
    %780 = vmatpush2.msra.mxu0 %v385
    %781 = vmatprep.subr.mxu0 %v380
    %782 = vmatpush2.msra.mxu0 %v379
    %783 = vmatprep.subr.mxu0 %v374
    %784 = vmatpush2.msra.mxu0 %v373
    %785 = vmatprep.subr.mxu0 %v368
    %786 = vmatpush2.msra.mxu0 %v367
    %787 = vmatprep.subr.mxu0 %v362
    %788 = vmatpush2.msra.mxu0 %v361
    %789 = vmatprep.mubr.f32.mxu0 %v260
    %790 = vmatmul.mubr.f32.gmra.mxu0 %v258
    %v791 = vpop.f32.mrf.mxu0
    %v792 = vadd.f32 %v564, %v791
    %v793 = vpop.f32.mrf.mxu0
    %v794 = vadd.f32 %v568, %v793
    %795 = vdwg.mxu0
    %796 = vmatprep.subr.mxu0 %v548
    %797 = vmatpush1.msra.mxu0 %v547
    %798 = vmatprep.subr.mxu0 %v542
    %799 = vmatpush1.msra.mxu0 %v541
    %800 = vmatprep.subr.mxu0 %v536
    %801 = vmatpush1.msra.mxu0 %v535
    %802 = vmatprep.subr.mxu0 %v530
    %803 = vmatpush1.msra.mxu0 %v529
    %804 = vmatprep.subr.mxu0 %v524
    %805 = vmatpush1.msra.mxu0 %v523
    %806 = vmatprep.subr.mxu0 %v518
    %807 = vmatpush1.msra.mxu0 %v517
    %808 = vmatprep.subr.mxu0 %v512
    %809 = vmatpush1.msra.mxu0 %v511
    %810 = vmatprep.subr.mxu0 %v506
    %811 = vmatpush1.msra.mxu0 %v505
    %812 = vmatprep.subr.mxu0 %v500
    %813 = vmatpush1.msra.mxu0 %v499
    %814 = vmatprep.subr.mxu0 %v494
    %815 = vmatpush1.msra.mxu0 %v493
    %816 = vmatprep.subr.mxu0 %v488
    %817 = vmatpush1.msra.mxu0 %v487
    %818 = vmatprep.subr.mxu0 %v482
    %819 = vmatpush1.msra.mxu0 %v481
    %820 = vmatprep.subr.mxu0 %v476
    %821 = vmatpush1.msra.mxu0 %v475
    %822 = vmatprep.subr.mxu0 %v470
    %823 = vmatpush1.msra.mxu0 %v469
    %824 = vmatprep.subr.mxu0 %v464
    %825 = vmatpush1.msra.mxu0 %v463
    %826 = vmatprep.subr.mxu0 %v458
    %827 = vmatpush1.msra.mxu0 %v457
    %828 = vmatprep.subr.mxu0 0.0
    %829 = vmatpush2.msra.mxu0 0.0
    %830 = vmatprep.subr.mxu0 0.0
    %831 = vmatpush2.msra.mxu0 0.0
    %832 = vmatprep.subr.mxu0 0.0
    %833 = vmatpush2.msra.mxu0 0.0
    %834 = vmatprep.subr.mxu0 0.0
    %835 = vmatpush2.msra.mxu0 0.0
    %836 = vmatprep.subr.mxu0 0.0
    %837 = vmatpush2.msra.mxu0 0.0
    %838 = vmatprep.subr.mxu0 0.0
    %839 = vmatpush2.msra.mxu0 0.0
    %840 = vmatprep.subr.mxu0 0.0
    %841 = vmatpush2.msra.mxu0 0.0
    %842 = vmatprep.subr.mxu0 0.0
    %843 = vmatpush2.msra.mxu0 0.0
    %844 = vmatprep.subr.mxu0 0.0
    %845 = vmatpush2.msra.mxu0 0.0
    %846 = vmatprep.subr.mxu0 0.0
    %847 = vmatpush2.msra.mxu0 0.0
    %848 = vmatprep.subr.mxu0 0.0
    %849 = vmatpush2.msra.mxu0 0.0
    %850 = vmatprep.subr.mxu0 0.0
    %851 = vmatpush2.msra.mxu0 0.0
    %852 = vmatprep.subr.mxu0 0.0
    %853 = vmatpush2.msra.mxu0 0.0
    %854 = vmatprep.subr.mxu0 0.0
    %855 = vmatpush2.msra.mxu0 0.0
    %856 = vmatprep.subr.mxu0 0.0
    %857 = vmatpush2.msra.mxu0 0.0
    %858 = vmatprep.subr.mxu0 0.0
    %859 = vmatpush2.msra.mxu0 0.0
    %860 = vmatprep.mubr.f32.mxu0 0.0
    %861 = vmatmul.mubr.f32.gmra.mxu0 %v262
    %v862 = vpop.f32.mrf.mxu0
    %v863 = vadd.f32 %v792, %v862
    %v864 = vpop.f32.mrf.mxu0
    %v865 = vadd.f32 %v794, %v864
    %866 = vdwg.mxu0
    %867 = vmatprep.subr.mxu0 %v358
    %868 = vmatpush1.msra.mxu0 %v357
    %869 = vmatprep.subr.mxu0 %v352
    %870 = vmatpush1.msra.mxu0 %v351
    %871 = vmatprep.subr.mxu0 %v346
    %872 = vmatpush1.msra.mxu0 %v345
    %873 = vmatprep.subr.mxu0 %v340
    %874 = vmatpush1.msra.mxu0 %v339
    %875 = vmatprep.subr.mxu0 %v334
    %876 = vmatpush1.msra.mxu0 %v333
    %877 = vmatprep.subr.mxu0 %v328
    %878 = vmatpush1.msra.mxu0 %v327
    %879 = vmatprep.subr.mxu0 %v322
    %880 = vmatpush1.msra.mxu0 %v321
    %881 = vmatprep.subr.mxu0 %v316
    %882 = vmatpush1.msra.mxu0 %v315
    %883 = vmatprep.subr.mxu0 %v310
    %884 = vmatpush1.msra.mxu0 %v309
    %885 = vmatprep.subr.mxu0 %v304
    %886 = vmatpush1.msra.mxu0 %v303
    %887 = vmatprep.subr.mxu0 %v298
    %888 = vmatpush1.msra.mxu0 %v297
    %889 = vmatprep.subr.mxu0 %v292
    %890 = vmatpush1.msra.mxu0 %v291
    %891 = vmatprep.subr.mxu0 %v286
    %892 = vmatpush1.msra.mxu0 %v285
    %893 = vmatprep.subr.mxu0 %v280
    %894 = vmatpush1.msra.mxu0 %v279
    %895 = vmatprep.subr.mxu0 %v274
    %896 = vmatpush1.msra.mxu0 %v273
    %897 = vmatprep.subr.mxu0 %v268
    %898 = vmatpush1.msra.mxu0 %v267
    %899 = vmatprep.subr.mxu0 %v454
    %900 = vmatpush2.msra.mxu0 %v453
    %901 = vmatprep.subr.mxu0 %v448
    %902 = vmatpush2.msra.mxu0 %v447
    %903 = vmatprep.subr.mxu0 %v442
    %904 = vmatpush2.msra.mxu0 %v441
    %905 = vmatprep.subr.mxu0 %v436
    %906 = vmatpush2.msra.mxu0 %v435
    %907 = vmatprep.subr.mxu0 %v430
    %908 = vmatpush2.msra.mxu0 %v429
    %909 = vmatprep.subr.mxu0 %v424
    %910 = vmatpush2.msra.mxu0 %v423
    %911 = vmatprep.subr.mxu0 %v418
    %912 = vmatpush2.msra.mxu0 %v417
    %913 = vmatprep.subr.mxu0 %v412
    %914 = vmatpush2.msra.mxu0 %v411
    %915 = vmatprep.subr.mxu0 %v406
    %916 = vmatpush2.msra.mxu0 %v405
    %917 = vmatprep.subr.mxu0 %v400
    %918 = vmatpush2.msra.mxu0 %v399
    %919 = vmatprep.subr.mxu0 %v394
    %920 = vmatpush2.msra.mxu0 %v393
    %921 = vmatprep.subr.mxu0 %v388
    %922 = vmatpush2.msra.mxu0 %v387
    %923 = vmatprep.subr.mxu0 %v382
    %924 = vmatpush2.msra.mxu0 %v381
    %925 = vmatprep.subr.mxu0 %v376
    %926 = vmatpush2.msra.mxu0 %v375
    %927 = vmatprep.subr.mxu0 %v370
    %928 = vmatpush2.msra.mxu0 %v369
    %929 = vmatprep.subr.mxu0 %v364
    %930 = vmatpush2.msra.mxu0 %v363
    %931 = vmatprep.mubr.f32.mxu0 %v260
    %932 = vmatmul.mubr.f32.gmra.mxu0 %v258
    %v933 = vpop.f32.mrf.mxu0
    %v934 = vadd.f32 %v572, %v933
    %v935 = vpop.f32.mrf.mxu0
    %v936 = vadd.f32 %v576, %v935
    %937 = vdwg.mxu0
    %938 = vmatprep.subr.mxu0 %v550
    %939 = vmatpush1.msra.mxu0 %v549
    %940 = vmatprep.subr.mxu0 %v544
    %941 = vmatpush1.msra.mxu0 %v543
    %942 = vmatprep.subr.mxu0 %v538
    %943 = vmatpush1.msra.mxu0 %v537
    %944 = vmatprep.subr.mxu0 %v532
    %945 = vmatpush1.msra.mxu0 %v531
    %946 = vmatprep.subr.mxu0 %v526
    %947 = vmatpush1.msra.mxu0 %v525
    %948 = vmatprep.subr.mxu0 %v520
    %949 = vmatpush1.msra.mxu0 %v519
    %950 = vmatprep.subr.mxu0 %v514
    %951 = vmatpush1.msra.mxu0 %v513
    %952 = vmatprep.subr.mxu0 %v508
    %953 = vmatpush1.msra.mxu0 %v507
    %954 = vmatprep.subr.mxu0 %v502
    %955 = vmatpush1.msra.mxu0 %v501
    %956 = vmatprep.subr.mxu0 %v496
    %957 = vmatpush1.msra.mxu0 %v495
    %958 = vmatprep.subr.mxu0 %v490
    %959 = vmatpush1.msra.mxu0 %v489
    %960 = vmatprep.subr.mxu0 %v484
    %961 = vmatpush1.msra.mxu0 %v483
    %962 = vmatprep.subr.mxu0 %v478
    %963 = vmatpush1.msra.mxu0 %v477
    %964 = vmatprep.subr.mxu0 %v472
    %965 = vmatpush1.msra.mxu0 %v471
    %966 = vmatprep.subr.mxu0 %v466
    %967 = vmatpush1.msra.mxu0 %v465
    %968 = vmatprep.subr.mxu0 %v460
    %969 = vmatpush1.msra.mxu0 %v459
    %970 = vmatprep.subr.mxu0 0.0
    %971 = vmatpush2.msra.mxu0 0.0
    %972 = vmatprep.subr.mxu0 0.0
    %973 = vmatpush2.msra.mxu0 0.0
    %974 = vmatprep.subr.mxu0 0.0
    %975 = vmatpush2.msra.mxu0 0.0
    %976 = vmatprep.subr.mxu0 0.0
    %977 = vmatpush2.msra.mxu0 0.0
    %978 = vmatprep.subr.mxu0 0.0
    %979 = vmatpush2.msra.mxu0 0.0
    %980 = vmatprep.subr.mxu0 0.0
    %981 = vmatpush2.msra.mxu0 0.0
    %982 = vmatprep.subr.mxu0 0.0
    %983 = vmatpush2.msra.mxu0 0.0
    %984 = vmatprep.subr.mxu0 0.0
    %985 = vmatpush2.msra.mxu0 0.0
    %986 = vmatprep.subr.mxu0 0.0
    %987 = vmatpush2.msra.mxu0 0.0
    %988 = vmatprep.subr.mxu0 0.0
    %989 = vmatpush2.msra.mxu0 0.0
    %990 = vmatprep.subr.mxu0 0.0
    %991 = vmatpush2.msra.mxu0 0.0
    %992 = vmatprep.subr.mxu0 0.0
    %993 = vmatpush2.msra.mxu0 0.0
    %994 = vmatprep.subr.mxu0 0.0
    %995 = vmatpush2.msra.mxu0 0.0
    %996 = vmatprep.subr.mxu0 0.0
    %997 = vmatpush2.msra.mxu0 0.0
    %998 = vmatprep.subr.mxu0 0.0
    %999 = vmatpush2.msra.mxu0 0.0
    %1000 = vmatprep.subr.mxu0 0.0
    %1001 = vmatpush2.msra.mxu0 0.0
    %1002 = vmatprep.mubr.f32.mxu0 0.0
    %1003 = vmatmul.mubr.f32.gmra.mxu0 %v262
    %v1004 = vpop.f32.mrf.mxu0
    %v1005 = vadd.f32 %v934, %v1004
    %v1006 = vpop.f32.mrf.mxu0
    %v1007 = vadd.f32 %v936, %v1006
    %1008 = vdwg.mxu0
    %v1009 = vxor.u32 %v721, 2147483648
    %v1010 = vxor.u32 %v723, 2147483648
    %v1011 = vxor.u32 %v863, 2147483648
    %v1012 = vxor.u32 %v865, 2147483648
    %v1013 = vxor.u32 %v1005, 2147483648
    %v1014 = vxor.u32 %v1007, 2147483648
    %v1015 = vmul.f32 %v1009, 1.442695
    %v1016 = vpow.pop %v1015
    %v1017 = vmul.f32 %v1010, 1.442695
    %v1018 = vpow.pop %v1017
    %v1019 = vmul.f32 %v1011, 1.442695
    %v1020 = vpow.pop %v1019
    %v1021 = vmul.f32 %v1012, 1.442695
    %v1022 = vpow.pop %v1021
    %v1023 = vmul.f32 %v1013, 1.442695
    %v1024 = vpow.pop %v1023
    %v1025 = vmul.f32 %v1014, 1.442695
    %v1026 = vpow.pop %v1025
    %v1027 = vadd.f32 %v1016, 1.0
    %v1028 = vadd.f32 %v1018, 1.0
    %v1029 = vadd.f32 %v1020, 1.0
    %v1030 = vadd.f32 %v1022, 1.0
    %v1031 = vadd.f32 %v1024, 1.0
    %v1032 = vadd.f32 %v1026, 1.0
    %v1033 = vrcp.pop %v1027
    %v1034 = vmul.f32 1.0, %v1033
    %v1035 = vrcp.pop %v1028
    %v1036 = vmul.f32 1.0, %v1035
    %v1037 = vrcp.pop %v1029
    %v1038 = vmul.f32 1.0, %v1037
    %v1039 = vrcp.pop %v1030
    %v1040 = vmul.f32 1.0, %v1039
    %v1041 = vrcp.pop %v1031
    %v1042 = vmul.f32 1.0, %v1041
    %v1043 = vrcp.pop %v1032
    %v1044 = vmul.f32 1.0, %v1043
    %v1045 = vld [vmem:[%s5] sm:$0xff]
    %v1046 = vld [vmem:[%s5 + $0x8] sm:$0xff]
    %v1047 = vld [vmem:[%s5 + $0x10] sm:$0xff]
    %v1048 = vld [vmem:[%s5 + $0x18] sm:$0xff]
    %v1049 = vld [vmem:[%s5 + $0x20] sm:$0xff]
    %v1050 = vld [vmem:[%s5 + $0x28] sm:$0xff]
    %v1051 = vld [vmem:[%s5 + $0x30] sm:$0xff]
    %v1052 = vld [vmem:[%s5 + $0x38] sm:$0xff]
    %v1053 = vld [vmem:[%s5 + $0x40] sm:$0xff]
    %v1054 = vld [vmem:[%s5 + $0x48] sm:$0xff]
    %v1055 = vld [vmem:[%s5 + $0x50] sm:$0xff]
    %v1056 = vld [vmem:[%s5 + $0x58] sm:$0xff]
    %v1057 = vld [vmem:[%s5 + $0x60] sm:$0xff]
    %v1058 = vld [vmem:[%s5 + $0x68] sm:$0xff]
    %v1059 = vld [vmem:[%s5 + $0x70] sm:$0xff]
    %v1060 = vld [vmem:[%s5 + $0x78] sm:$0xff]
    %v1061 = vld [vmem:[%s5 + $0x80] sm:$0xff]
    %v1062 = vld [vmem:[%s5 + $0x88] sm:$0xff]
    %v1063 = vld [vmem:[%s5 + $0x90] sm:$0xff]
    %v1064 = vld [vmem:[%s5 + $0x98] sm:$0xff]
    %v1065 = vld [vmem:[%s5 + $0xa0] sm:$0xff]
    %v1066 = vld [vmem:[%s5 + $0xa8] sm:$0xff]
    %v1067 = vld [vmem:[%s5 + $0xb0] sm:$0xff]
    %v1068 = vld [vmem:[%s5 + $0xb8] sm:$0xff]
    %v1069 = vld [vmem:[%s5 + $0xc0] sm:$0xff]
    %v1070 = vld [vmem:[%s5 + $0xc8] sm:$0xff]
    %v1071 = vld [vmem:[%s5 + $0xd0] sm:$0xff]
    %v1072 = vld [vmem:[%s5 + $0xd8] sm:$0xff]
    %v1073 = vld [vmem:[%s5 + $0xe0] sm:$0xff]
    %v1074 = vld [vmem:[%s5 + $0xe8] sm:$0xff]
    %v1075 = vld [vmem:[%s5 + $0xf0] sm:$0xff]
    %v1076 = vld [vmem:[%s5 + $0xf8] sm:$0xff]
    %v1077 = vld [vmem:[%s5 + $0x100] sm:$0xff]
    %v1078 = vld [vmem:[%s5 + $0x108] sm:$0xff]
    %v1079 = vld [vmem:[%s5 + $0x110] sm:$0xff]
    %v1080 = vld [vmem:[%s5 + $0x118] sm:$0xff]
    %v1081 = vld [vmem:[%s5 + $0x120] sm:$0xff]
    %v1082 = vld [vmem:[%s5 + $0x128] sm:$0xff]
    %v1083 = vld [vmem:[%s5 + $0x130] sm:$0xff]
    %v1084 = vld [vmem:[%s5 + $0x138] sm:$0xff]
    %v1085 = vld [vmem:[%s5 + $0x140] sm:$0xff]
    %v1086 = vld [vmem:[%s5 + $0x148] sm:$0xff]
    %v1087 = vld [vmem:[%s5 + $0x150] sm:$0xff]
    %v1088 = vld [vmem:[%s5 + $0x158] sm:$0xff]
    %v1089 = vld [vmem:[%s5 + $0x160] sm:$0xff]
    %v1090 = vld [vmem:[%s5 + $0x168] sm:$0xff]
    %v1091 = vld [vmem:[%s5 + $0x170] sm:$0xff]
    %v1092 = vld [vmem:[%s5 + $0x178] sm:$0xff]
    %v1093 = vld [vmem:[%s5 + $0x180] sm:$0xff]
    %v1094 = vld [vmem:[%s5 + $0x188] sm:$0xff]
    %v1095 = vld [vmem:[%s5 + $0x190] sm:$0xff]
    %v1096 = vld [vmem:[%s5 + $0x198] sm:$0xff]
    %v1097 = vld [vmem:[%s5 + $0x1a0] sm:$0xff]
    %v1098 = vld [vmem:[%s5 + $0x1a8] sm:$0xff]
    %v1099 = vld [vmem:[%s5 + $0x1b0] sm:$0xff]
    %v1100 = vld [vmem:[%s5 + $0x1b8] sm:$0xff]
    %v1101 = vld [vmem:[%s5 + $0x1c0] sm:$0xff]
    %v1102 = vld [vmem:[%s5 + $0x1c8] sm:$0xff]
    %v1103 = vld [vmem:[%s5 + $0x1d0] sm:$0xff]
    %v1104 = vld [vmem:[%s5 + $0x1d8] sm:$0xff]
    %v1105 = vld [vmem:[%s5 + $0x1e0] sm:$0xff]
    %v1106 = vld [vmem:[%s5 + $0x1e8] sm:$0xff]
    %v1107 = vld [vmem:[%s5 + $0x1f0] sm:$0xff]
    %v1108 = vld [vmem:[%s5 + $0x1f8] sm:$0xff]
    %v1109 = vld [vmem:[%s5 + $0x200] sm:$0xff]
    %v1110 = vld [vmem:[%s5 + $0x208] sm:$0xff]
    %v1111 = vld [vmem:[%s5 + $0x210] sm:$0xff]
    %v1112 = vld [vmem:[%s5 + $0x218] sm:$0xff]
    %v1113 = vld [vmem:[%s5 + $0x220] sm:$0xff]
    %v1114 = vld [vmem:[%s5 + $0x228] sm:$0xff]
    %v1115 = vld [vmem:[%s5 + $0x230] sm:$0xff]
    %v1116 = vld [vmem:[%s5 + $0x238] sm:$0xff]
    %v1117 = vld [vmem:[%s5 + $0x240] sm:$0xff]
    %v1118 = vld [vmem:[%s5 + $0x248] sm:$0xff]
    %v1119 = vld [vmem:[%s5 + $0x250] sm:$0xff]
    %v1120 = vld [vmem:[%s5 + $0x258] sm:$0xff]
    %v1121 = vld [vmem:[%s5 + $0x260] sm:$0xff]
    %v1122 = vld [vmem:[%s5 + $0x268] sm:$0xff]
    %v1123 = vld [vmem:[%s5 + $0x270] sm:$0xff]
    %v1124 = vld [vmem:[%s5 + $0x278] sm:$0xff]
    %v1125 = vld [vmem:[%s5 + $0x280] sm:$0xff]
    %v1126 = vld [vmem:[%s5 + $0x288] sm:$0xff]
    %v1127 = vld [vmem:[%s5 + $0x290] sm:$0xff]
    %v1128 = vld [vmem:[%s5 + $0x298] sm:$0xff]
    %v1129 = vld [vmem:[%s5 + $0x2a0] sm:$0xff]
    %v1130 = vld [vmem:[%s5 + $0x2a8] sm:$0xff]
    %v1131 = vld [vmem:[%s5 + $0x2b0] sm:$0xff]
    %v1132 = vld [vmem:[%s5 + $0x2b8] sm:$0xff]
    %v1133 = vld [vmem:[%s5 + $0x2c0] sm:$0xff]
    %v1134 = vld [vmem:[%s5 + $0x2c8] sm:$0xff]
    %v1135 = vld [vmem:[%s5 + $0x2d0] sm:$0xff]
    %v1136 = vld [vmem:[%s5 + $0x2d8] sm:$0xff]
    %v1137 = vld [vmem:[%s5 + $0x2e0] sm:$0xff]
    %v1138 = vld [vmem:[%s5 + $0x2e8] sm:$0xff]
    %v1139 = vld [vmem:[%s5 + $0x2f0] sm:$0xff]
    %v1140 = vld [vmem:[%s5 + $0x2f8] sm:$0xff]
    %v1141 = vld [vmem:[%s5 + $0x300] sm:$0xff]
    %v1142 = vld [vmem:[%s5 + $0x308] sm:$0xff]
    %v1143 = vld [vmem:[%s5 + $0x310] sm:$0xff]
    %v1144 = vld [vmem:[%s5 + $0x318] sm:$0xff]
    %v1145 = vld [vmem:[%s5 + $0x320] sm:$0xff]
    %v1146 = vld [vmem:[%s5 + $0x328] sm:$0xff]
    %v1147 = vld [vmem:[%s5 + $0x330] sm:$0xff]
    %v1148 = vld [vmem:[%s5 + $0x338] sm:$0xff]
    %v1149 = vld [vmem:[%s5 + $0x340] sm:$0xff]
    %v1150 = vld [vmem:[%s5 + $0x348] sm:$0xff]
    %v1151 = vld [vmem:[%s5 + $0x350] sm:$0xff]
    %v1152 = vld [vmem:[%s5 + $0x358] sm:$0xff]
    %v1153 = vld [vmem:[%s5 + $0x360] sm:$0xff]
    %v1154 = vld [vmem:[%s5 + $0x368] sm:$0xff]
    %v1155 = vld [vmem:[%s5 + $0x370] sm:$0xff]
    %v1156 = vld [vmem:[%s5 + $0x378] sm:$0xff]
    %v1157 = vld [vmem:[%s5 + $0x380] sm:$0xff]
    %v1158 = vld [vmem:[%s5 + $0x388] sm:$0xff]
    %v1159 = vld [vmem:[%s5 + $0x390] sm:$0xff]
    %v1160 = vld [vmem:[%s5 + $0x398] sm:$0xff]
    %v1161 = vld [vmem:[%s5 + $0x3a0] sm:$0xff]
    %v1162 = vld [vmem:[%s5 + $0x3a8] sm:$0xff]
    %v1163 = vld [vmem:[%s5 + $0x3b0] sm:$0xff]
    %v1164 = vld [vmem:[%s5 + $0x3b8] sm:$0xff]
    %v1165 = vld [vmem:[%s5 + $0x3c0] sm:$0xff]
    %v1166 = vld [vmem:[%s5 + $0x3c8] sm:$0xff]
    %v1167 = vld [vmem:[%s5 + $0x3d0] sm:$0xff]
    %v1168 = vld [vmem:[%s5 + $0x3d8] sm:$0xff]
    %v1169 = vld [vmem:[%s5 + $0x3e0] sm:$0xff]
    %v1170 = vld [vmem:[%s5 + $0x3e8] sm:$0xff]
    %v1171 = vld [vmem:[%s5 + $0x3f0] sm:$0xff]
    %v1172 = vld [vmem:[%s5 + $0x3f8] sm:$0xff]
    %v1173 = vld [vmem:[%s5 + $0x400] sm:$0xff]
    %v1174 = vld [vmem:[%s5 + $0x408] sm:$0xff]
    %v1175 = vld [vmem:[%s5 + $0x410] sm:$0xff]
    %v1176 = vld [vmem:[%s5 + $0x418] sm:$0xff]
    %v1177 = vld [vmem:[%s5 + $0x420] sm:$0xff]
    %v1178 = vld [vmem:[%s5 + $0x428] sm:$0xff]
    %v1179 = vld [vmem:[%s5 + $0x430] sm:$0xff]
    %v1180 = vld [vmem:[%s5 + $0x438] sm:$0xff]
    %v1181 = vld [vmem:[%s5 + $0x440] sm:$0xff]
    %v1182 = vld [vmem:[%s5 + $0x448] sm:$0xff]
    %v1183 = vld [vmem:[%s5 + $0x450] sm:$0xff]
    %v1184 = vld [vmem:[%s5 + $0x458] sm:$0xff]
    %v1185 = vld [vmem:[%s5 + $0x460] sm:$0xff]
    %v1186 = vld [vmem:[%s5 + $0x468] sm:$0xff]
    %v1187 = vld [vmem:[%s5 + $0x470] sm:$0xff]
    %v1188 = vld [vmem:[%s5 + $0x478] sm:$0xff]
    %v1189 = vld [vmem:[%s5 + $0x480] sm:$0xff]
    %v1190 = vld [vmem:[%s5 + $0x488] sm:$0xff]
    %v1191 = vld [vmem:[%s5 + $0x490] sm:$0xff]
    %v1192 = vld [vmem:[%s5 + $0x498] sm:$0xff]
    %v1193 = vld [vmem:[%s5 + $0x4a0] sm:$0xff]
    %v1194 = vld [vmem:[%s5 + $0x4a8] sm:$0xff]
    %v1195 = vld [vmem:[%s5 + $0x4b0] sm:$0xff]
    %v1196 = vld [vmem:[%s5 + $0x4b8] sm:$0xff]
    %v1197 = vld [vmem:[%s5 + $0x4c0] sm:$0xff]
    %v1198 = vld [vmem:[%s5 + $0x4c8] sm:$0xff]
    %v1199 = vld [vmem:[%s5 + $0x4d0] sm:$0xff]
    %v1200 = vld [vmem:[%s5 + $0x4d8] sm:$0xff]
    %v1201 = vld [vmem:[%s5 + $0x4e0] sm:$0xff]
    %v1202 = vld [vmem:[%s5 + $0x4e8] sm:$0xff]
    %v1203 = vld [vmem:[%s5 + $0x4f0] sm:$0xff]
    %v1204 = vld [vmem:[%s5 + $0x4f8] sm:$0xff]
    %v1205 = vld [vmem:[%s5 + $0x500] sm:$0xff]
    %v1206 = vld [vmem:[%s5 + $0x508] sm:$0xff]
    %v1207 = vld [vmem:[%s5 + $0x510] sm:$0xff]
    %v1208 = vld [vmem:[%s5 + $0x518] sm:$0xff]
    %v1209 = vld [vmem:[%s5 + $0x520] sm:$0xff]
    %v1210 = vld [vmem:[%s5 + $0x528] sm:$0xff]
    %v1211 = vld [vmem:[%s5 + $0x530] sm:$0xff]
    %v1212 = vld [vmem:[%s5 + $0x538] sm:$0xff]
    %v1213 = vld [vmem:[%s5 + $0x540] sm:$0xff]
    %v1214 = vld [vmem:[%s5 + $0x548] sm:$0xff]
    %v1215 = vld [vmem:[%s5 + $0x550] sm:$0xff]
    %v1216 = vld [vmem:[%s5 + $0x558] sm:$0xff]
    %v1217 = vld [vmem:[%s5 + $0x560] sm:$0xff]
    %v1218 = vld [vmem:[%s5 + $0x568] sm:$0xff]
    %v1219 = vld [vmem:[%s5 + $0x570] sm:$0xff]
    %v1220 = vld [vmem:[%s5 + $0x578] sm:$0xff]
    %v1221 = vld [vmem:[%s5 + $0x580] sm:$0xff]
    %v1222 = vld [vmem:[%s5 + $0x588] sm:$0xff]
    %v1223 = vld [vmem:[%s5 + $0x590] sm:$0xff]
    %v1224 = vld [vmem:[%s5 + $0x598] sm:$0xff]
    %v1225 = vld [vmem:[%s5 + $0x5a0] sm:$0xff]
    %v1226 = vld [vmem:[%s5 + $0x5a8] sm:$0xff]
    %v1227 = vld [vmem:[%s5 + $0x5b0] sm:$0xff]
    %v1228 = vld [vmem:[%s5 + $0x5b8] sm:$0xff]
    %v1229 = vld [vmem:[%s5 + $0x5c0] sm:$0xff]
    %v1230 = vld [vmem:[%s5 + $0x5c8] sm:$0xff]
    %v1231 = vld [vmem:[%s5 + $0x5d0] sm:$0xff]
    %v1232 = vld [vmem:[%s5 + $0x5d8] sm:$0xff]
    %v1233 = vld [vmem:[%s5 + $0x5e0] sm:$0xff]
    %v1234 = vld [vmem:[%s5 + $0x5e8] sm:$0xff]
    %v1235 = vld [vmem:[%s5 + $0x5f0] sm:$0xff]
    %v1236 = vld [vmem:[%s5 + $0x5f8] sm:$0xff]
    %v1237 = vld [vmem:[%s5 + $0x600] sm:$0xff]
    %v1238 = vld [vmem:[%s5 + $0x608] sm:$0xff]
    %v1239 = vld [vmem:[%s5 + $0x610] sm:$0xff]
    %v1240 = vld [vmem:[%s5 + $0x618] sm:$0xff]
    %v1241 = vld [vmem:[%s5 + $0x620] sm:$0xff]
    %v1242 = vld [vmem:[%s5 + $0x628] sm:$0xff]
    %v1243 = vld [vmem:[%s5 + $0x630] sm:$0xff]
    %v1244 = vld [vmem:[%s5 + $0x638] sm:$0xff]
    %v1245 = vld [vmem:[%s5 + $0x640] sm:$0xff]
    %v1246 = vld [vmem:[%s5 + $0x648] sm:$0xff]
    %v1247 = vld [vmem:[%s5 + $0x650] sm:$0xff]
    %v1248 = vld [vmem:[%s5 + $0x658] sm:$0xff]
    %v1249 = vld [vmem:[%s5 + $0x660] sm:$0xff]
    %v1250 = vld [vmem:[%s5 + $0x668] sm:$0xff]
    %v1251 = vld [vmem:[%s5 + $0x670] sm:$0xff]
    %v1252 = vld [vmem:[%s5 + $0x678] sm:$0xff]
    %v1253 = vld [vmem:[%s5 + $0x680] sm:$0xff]
    %v1254 = vld [vmem:[%s5 + $0x688] sm:$0xff]
    %v1255 = vld [vmem:[%s5 + $0x690] sm:$0xff]
    %v1256 = vld [vmem:[%s5 + $0x698] sm:$0xff]
    %v1257 = vld [vmem:[%s5 + $0x6a0] sm:$0xff]
    %v1258 = vld [vmem:[%s5 + $0x6a8] sm:$0xff]
    %v1259 = vld [vmem:[%s5 + $0x6b0] sm:$0xff]
    %v1260 = vld [vmem:[%s5 + $0x6b8] sm:$0xff]
    %v1261 = vld [vmem:[%s5 + $0x6c0] sm:$0xff]
    %v1262 = vld [vmem:[%s5 + $0x6c8] sm:$0xff]
    %v1263 = vld [vmem:[%s5 + $0x6d0] sm:$0xff]
    %v1264 = vld [vmem:[%s5 + $0x6d8] sm:$0xff]
    %v1265 = vld [vmem:[%s5 + $0x6e0] sm:$0xff]
    %v1266 = vld [vmem:[%s5 + $0x6e8] sm:$0xff]
    %v1267 = vld [vmem:[%s5 + $0x6f0] sm:$0xff]
    %v1268 = vld [vmem:[%s5 + $0x6f8] sm:$0xff]
    %v1269 = vld [vmem:[%s5 + $0x700] sm:$0xff]
    %v1270 = vld [vmem:[%s5 + $0x708] sm:$0xff]
    %v1271 = vld [vmem:[%s5 + $0x710] sm:$0xff]
    %v1272 = vld [vmem:[%s5 + $0x718] sm:$0xff]
    %v1273 = vld [vmem:[%s5 + $0x720] sm:$0xff]
    %v1274 = vld [vmem:[%s5 + $0x728] sm:$0xff]
    %v1275 = vld [vmem:[%s5 + $0x730] sm:$0xff]
    %v1276 = vld [vmem:[%s5 + $0x738] sm:$0xff]
    %v1277 = vld [vmem:[%s5 + $0x740] sm:$0xff]
    %v1278 = vld [vmem:[%s5 + $0x748] sm:$0xff]
    %v1279 = vld [vmem:[%s5 + $0x750] sm:$0xff]
    %v1280 = vld [vmem:[%s5 + $0x758] sm:$0xff]
    %v1281 = vld [vmem:[%s5 + $0x760] sm:$0xff]
    %v1282 = vld [vmem:[%s5 + $0x768] sm:$0xff]
    %v1283 = vld [vmem:[%s5 + $0x770] sm:$0xff]
    %v1284 = vld [vmem:[%s5 + $0x778] sm:$0xff]
    %v1285 = vld [vmem:[%s5 + $0x780] sm:$0xff]
    %v1286 = vld [vmem:[%s5 + $0x788] sm:$0xff]
    %v1287 = vld [vmem:[%s5 + $0x790] sm:$0xff]
    %v1288 = vld [vmem:[%s5 + $0x798] sm:$0xff]
    %v1289 = vld [vmem:[%s5 + $0x7a0] sm:$0xff]
    %v1290 = vld [vmem:[%s5 + $0x7a8] sm:$0xff]
    %v1291 = vld [vmem:[%s5 + $0x7b0] sm:$0xff]
    %v1292 = vld [vmem:[%s5 + $0x7b8] sm:$0xff]
    %v1293 = vld [vmem:[%s5 + $0x7c0] sm:$0xff]
    %v1294 = vld [vmem:[%s5 + $0x7c8] sm:$0xff]
    %v1295 = vld [vmem:[%s5 + $0x7d0] sm:$0xff]
    %v1296 = vld [vmem:[%s5 + $0x7d8] sm:$0xff]
    %v1297 = vld [vmem:[%s5 + $0x7e0] sm:$0xff]
    %v1298 = vld [vmem:[%s5 + $0x7e8] sm:$0xff]
    %v1299 = vld [vmem:[%s5 + $0x7f0] sm:$0xff]
    %v1300 = vld [vmem:[%s5 + $0x7f8] sm:$0xff]
    %v1301 = vld [vmem:[%s5 + $0x800] sm:$0xff]
    %v1302 = vld [vmem:[%s5 + $0x808] sm:$0xff]
    %v1303 = vld [vmem:[%s5 + $0x810] sm:$0xff]
    %v1304 = vld [vmem:[%s5 + $0x818] sm:$0xff]
    %v1305 = vld [vmem:[%s5 + $0x820] sm:$0xff]
    %v1306 = vld [vmem:[%s5 + $0x828] sm:$0xff]
    %v1307 = vld [vmem:[%s5 + $0x830] sm:$0xff]
    %v1308 = vld [vmem:[%s5 + $0x838] sm:$0xff]
    %v1309 = vld [vmem:[%s5 + $0x840] sm:$0xff]
    %v1310 = vld [vmem:[%s5 + $0x848] sm:$0xff]
    %v1311 = vld [vmem:[%s5 + $0x850] sm:$0xff]
    %v1312 = vld [vmem:[%s5 + $0x858] sm:$0xff]
    %v1313 = vld [vmem:[%s5 + $0x860] sm:$0xff]
    %v1314 = vld [vmem:[%s5 + $0x868] sm:$0xff]
    %v1315 = vld [vmem:[%s5 + $0x870] sm:$0xff]
    %v1316 = vld [vmem:[%s5 + $0x878] sm:$0xff]
    %v1317 = vld [vmem:[%s5 + $0x880] sm:$0xff]
    %v1318 = vld [vmem:[%s5 + $0x888] sm:$0xff]
    %v1319 = vld [vmem:[%s5 + $0x890] sm:$0xff]
    %v1320 = vld [vmem:[%s5 + $0x898] sm:$0xff]
    %v1321 = vld [vmem:[%s5 + $0x8a0] sm:$0xff]
    %v1322 = vld [vmem:[%s5 + $0x8a8] sm:$0xff]
    %v1323 = vld [vmem:[%s5 + $0x8b0] sm:$0xff]
    %v1324 = vld [vmem:[%s5 + $0x8b8] sm:$0xff]
    %v1325 = vld [vmem:[%s5 + $0x8c0] sm:$0xff]
    %v1326 = vld [vmem:[%s5 + $0x8c8] sm:$0xff]
    %v1327 = vld [vmem:[%s5 + $0x8d0] sm:$0xff]
    %v1328 = vld [vmem:[%s5 + $0x8d8] sm:$0xff]
    %v1329 = vld [vmem:[%s5 + $0x8e0] sm:$0xff]
    %v1330 = vld [vmem:[%s5 + $0x8e8] sm:$0xff]
    %v1331 = vld [vmem:[%s5 + $0x8f0] sm:$0xff]
    %v1332 = vld [vmem:[%s5 + $0x8f8] sm:$0xff]
    %v1333 = vld [vmem:[%s5 + $0x900] sm:$0xff]
    %v1334 = vld [vmem:[%s5 + $0x908] sm:$0xff]
    %v1335 = vld [vmem:[%s5 + $0x910] sm:$0xff]
    %v1336 = vld [vmem:[%s5 + $0x918] sm:$0xff]
    %v1337 = vld [vmem:[%s5 + $0x920] sm:$0xff]
    %v1338 = vld [vmem:[%s5 + $0x928] sm:$0xff]
    %v1339 = vld [vmem:[%s5 + $0x930] sm:$0xff]
    %v1340 = vld [vmem:[%s5 + $0x938] sm:$0xff]
    %v1341 = vld [vmem:[%s5 + $0x940] sm:$0xff]
    %v1342 = vld [vmem:[%s5 + $0x948] sm:$0xff]
    %v1343 = vld [vmem:[%s5 + $0x950] sm:$0xff]
    %v1344 = vld [vmem:[%s5 + $0x958] sm:$0xff]
    %v1345 = vld [vmem:[%s5 + $0x960] sm:$0xff]
    %v1346 = vld [vmem:[%s5 + $0x968] sm:$0xff]
    %v1347 = vld [vmem:[%s5 + $0x970] sm:$0xff]
    %v1348 = vld [vmem:[%s5 + $0x978] sm:$0xff]
    %v1349 = vld [vmem:[%s5 + $0x980] sm:$0xff]
    %v1350 = vld [vmem:[%s5 + $0x988] sm:$0xff]
    %v1351 = vld [vmem:[%s5 + $0x990] sm:$0xff]
    %v1352 = vld [vmem:[%s5 + $0x998] sm:$0xff]
    %v1353 = vld [vmem:[%s5 + $0x9a0] sm:$0xff]
    %v1354 = vld [vmem:[%s5 + $0x9a8] sm:$0xff]
    %v1355 = vld [vmem:[%s5 + $0x9b0] sm:$0xff]
    %v1356 = vld [vmem:[%s5 + $0x9b8] sm:$0xff]
    %v1357 = vld [vmem:[%s5 + $0x9c0] sm:$0xff]
    %v1358 = vld [vmem:[%s5 + $0x9c8] sm:$0xff]
    %v1359 = vld [vmem:[%s5 + $0x9d0] sm:$0xff]
    %v1360 = vld [vmem:[%s5 + $0x9d8] sm:$0xff]
    %v1361 = vld [vmem:[%s5 + $0x9e0] sm:$0xff]
    %v1362 = vld [vmem:[%s5 + $0x9e8] sm:$0xff]
    %v1363 = vld [vmem:[%s5 + $0x9f0] sm:$0xff]
    %v1364 = vld [vmem:[%s5 + $0x9f8] sm:$0xff]
    %v1365 = vld [vmem:[%s5 + $0xa00] sm:$0xff]
    %v1366 = vld [vmem:[%s5 + $0xa08] sm:$0xff]
    %v1367 = vld [vmem:[%s5 + $0xa10] sm:$0xff]
    %v1368 = vld [vmem:[%s5 + $0xa18] sm:$0xff]
    %v1369 = vld [vmem:[%s5 + $0xa20] sm:$0xff]
    %v1370 = vld [vmem:[%s5 + $0xa28] sm:$0xff]
    %v1371 = vld [vmem:[%s5 + $0xa30] sm:$0xff]
    %v1372 = vld [vmem:[%s5 + $0xa38] sm:$0xff]
    %v1373 = vld [vmem:[%s5 + $0xa40] sm:$0xff]
    %v1374 = vld [vmem:[%s5 + $0xa48] sm:$0xff]
    %v1375 = vld [vmem:[%s5 + $0xa50] sm:$0xff]
    %v1376 = vld [vmem:[%s5 + $0xa58] sm:$0xff]
    %v1377 = vld [vmem:[%s5 + $0xa60] sm:$0xff]
    %v1378 = vld [vmem:[%s5 + $0xa68] sm:$0xff]
    %v1379 = vld [vmem:[%s5 + $0xa70] sm:$0xff]
    %v1380 = vld [vmem:[%s5 + $0xa78] sm:$0xff]
    %v1381 = vld [vmem:[%s5 + $0xa80] sm:$0xff]
    %v1382 = vld [vmem:[%s5 + $0xa88] sm:$0xff]
    %v1383 = vld [vmem:[%s5 + $0xa90] sm:$0xff]
    %v1384 = vld [vmem:[%s5 + $0xa98] sm:$0xff]
    %v1385 = vld [vmem:[%s5 + $0xaa0] sm:$0xff]
    %v1386 = vld [vmem:[%s5 + $0xaa8] sm:$0xff]
    %v1387 = vld [vmem:[%s5 + $0xab0] sm:$0xff]
    %v1388 = vld [vmem:[%s5 + $0xab8] sm:$0xff]
    %v1389 = vld [vmem:[%s5 + $0xac0] sm:$0xff]
    %v1390 = vld [vmem:[%s5 + $0xac8] sm:$0xff]
    %v1391 = vld [vmem:[%s5 + $0xad0] sm:$0xff]
    %v1392 = vld [vmem:[%s5 + $0xad8] sm:$0xff]
    %v1393 = vld [vmem:[%s5 + $0xae0] sm:$0xff]
    %v1394 = vld [vmem:[%s5 + $0xae8] sm:$0xff]
    %v1395 = vld [vmem:[%s5 + $0xaf0] sm:$0xff]
    %v1396 = vld [vmem:[%s5 + $0xaf8] sm:$0xff]
    %v1397 = vld [vmem:[%s5 + $0xb00] sm:$0xff]
    %v1398 = vld [vmem:[%s5 + $0xb08] sm:$0xff]
    %v1399 = vld [vmem:[%s5 + $0xb10] sm:$0xff]
    %v1400 = vld [vmem:[%s5 + $0xb18] sm:$0xff]
    %v1401 = vld [vmem:[%s5 + $0xb20] sm:$0xff]
    %v1402 = vld [vmem:[%s5 + $0xb28] sm:$0xff]
    %v1403 = vld [vmem:[%s5 + $0xb30] sm:$0xff]
    %v1404 = vld [vmem:[%s5 + $0xb38] sm:$0xff]
    %v1405 = vld [vmem:[%s5 + $0xb40] sm:$0xff]
    %v1406 = vld [vmem:[%s5 + $0xb48] sm:$0xff]
    %v1407 = vld [vmem:[%s5 + $0xb50] sm:$0xff]
    %v1408 = vld [vmem:[%s5 + $0xb58] sm:$0xff]
    %v1409 = vld [vmem:[%s5 + $0xb60] sm:$0xff]
    %v1410 = vld [vmem:[%s5 + $0xb68] sm:$0xff]
    %v1411 = vld [vmem:[%s5 + $0xb70] sm:$0xff]
    %v1412 = vld [vmem:[%s5 + $0xb78] sm:$0xff]
    %v1413 = vld [vmem:[%s5 + $0xb80] sm:$0xff]
    %v1414 = vld [vmem:[%s5 + $0xb88] sm:$0xff]
    %v1415 = vld [vmem:[%s5 + $0xb90] sm:$0xff]
    %v1416 = vld [vmem:[%s5 + $0xb98] sm:$0xff]
    %v1417 = vld [vmem:[%s5 + $0xba0] sm:$0xff]
    %v1418 = vld [vmem:[%s5 + $0xba8] sm:$0xff]
    %v1419 = vld [vmem:[%s5 + $0xbb0] sm:$0xff]
    %v1420 = vld [vmem:[%s5 + $0xbb8] sm:$0xff]
    %v1421 = vld [vmem:[%s5 + $0xbc0] sm:$0xff]
    %v1422 = vld [vmem:[%s5 + $0xbc8] sm:$0xff]
    %v1423 = vld [vmem:[%s5 + $0xbd0] sm:$0xff]
    %v1424 = vld [vmem:[%s5 + $0xbd8] sm:$0xff]
    %v1425 = vld [vmem:[%s5 + $0xbe0] sm:$0xff]
    %v1426 = vld [vmem:[%s5 + $0xbe8] sm:$0xff]
    %v1427 = vld [vmem:[%s5 + $0xbf0] sm:$0xff]
    %v1428 = vld [vmem:[%s5 + $0xbf8] sm:$0xff]
    %v1429 = vld [vmem:[%s5 + $0xc00] sm:$0xff]
    %v1430 = vld [vmem:[%s5 + $0xc08] sm:$0xff]
    %v1431 = vld [vmem:[%s5 + $0xc10] sm:$0xff]
    %v1432 = vld [vmem:[%s5 + $0xc18] sm:$0xff]
    %v1433 = vld [vmem:[%s5 + $0xc20] sm:$0xff]
    %v1434 = vld [vmem:[%s5 + $0xc28] sm:$0xff]
    %v1435 = vld [vmem:[%s5 + $0xc30] sm:$0xff]
    %v1436 = vld [vmem:[%s5 + $0xc38] sm:$0xff]
    %v1437 = vld [vmem:[%s5 + $0xc40] sm:$0xff]
    %v1438 = vld [vmem:[%s5 + $0xc48] sm:$0xff]
    %v1439 = vld [vmem:[%s5 + $0xc50] sm:$0xff]
    %v1440 = vld [vmem:[%s5 + $0xc58] sm:$0xff]
    %v1441 = vld [vmem:[%s5 + $0xc60] sm:$0xff]
    %v1442 = vld [vmem:[%s5 + $0xc68] sm:$0xff]
    %v1443 = vld [vmem:[%s5 + $0xc70] sm:$0xff]
    %v1444 = vld [vmem:[%s5 + $0xc78] sm:$0xff]
    %v1445 = vld [vmem:[%s5 + $0xc80] sm:$0xff]
    %v1446 = vld [vmem:[%s5 + $0xc88] sm:$0xff]
    %v1447 = vld [vmem:[%s5 + $0xc90] sm:$0xff]
    %v1448 = vld [vmem:[%s5 + $0xc98] sm:$0xff]
    %v1449 = vld [vmem:[%s5 + $0xca0] sm:$0xff]
    %v1450 = vld [vmem:[%s5 + $0xca8] sm:$0xff]
    %v1451 = vld [vmem:[%s5 + $0xcb0] sm:$0xff]
    %v1452 = vld [vmem:[%s5 + $0xcb8] sm:$0xff]
    %v1453 = vld [vmem:[%s5 + $0xcc0] sm:$0xff]
    %v1454 = vld [vmem:[%s5 + $0xcc8] sm:$0xff]
    %v1455 = vld [vmem:[%s5 + $0xcd0] sm:$0xff]
    %v1456 = vld [vmem:[%s5 + $0xcd8] sm:$0xff]
    %v1457 = vld [vmem:[%s5 + $0xce0] sm:$0xff]
    %v1458 = vld [vmem:[%s5 + $0xce8] sm:$0xff]
    %v1459 = vld [vmem:[%s5 + $0xcf0] sm:$0xff]
    %v1460 = vld [vmem:[%s5 + $0xcf8] sm:$0xff]
    %v1461 = vld [vmem:[%s5 + $0xd00] sm:$0xff]
    %v1462 = vld [vmem:[%s5 + $0xd08] sm:$0xff]
    %v1463 = vld [vmem:[%s5 + $0xd10] sm:$0xff]
    %v1464 = vld [vmem:[%s5 + $0xd18] sm:$0xff]
    %v1465 = vld [vmem:[%s5 + $0xd20] sm:$0xff]
    %v1466 = vld [vmem:[%s5 + $0xd28] sm:$0xff]
    %v1467 = vld [vmem:[%s5 + $0xd30] sm:$0xff]
    %v1468 = vld [vmem:[%s5 + $0xd38] sm:$0xff]
    %v1469 = vld [vmem:[%s5 + $0xd40] sm:$0xff]
    %v1470 = vld [vmem:[%s5 + $0xd48] sm:$0xff]
    %v1471 = vld [vmem:[%s5 + $0xd50] sm:$0xff]
    %v1472 = vld [vmem:[%s5 + $0xd58] sm:$0xff]
    %v1473 = vld [vmem:[%s5 + $0xd60] sm:$0xff]
    %v1474 = vld [vmem:[%s5 + $0xd68] sm:$0xff]
    %v1475 = vld [vmem:[%s5 + $0xd70] sm:$0xff]
    %v1476 = vld [vmem:[%s5 + $0xd78] sm:$0xff]
    %v1477 = vld [vmem:[%s5 + $0xd80] sm:$0xff]
    %v1478 = vld [vmem:[%s5 + $0xd88] sm:$0xff]
    %v1479 = vld [vmem:[%s5 + $0xd90] sm:$0xff]
    %v1480 = vld [vmem:[%s5 + $0xd98] sm:$0xff]
    %v1481 = vld [vmem:[%s5 + $0xda0] sm:$0xff]
    %v1482 = vld [vmem:[%s5 + $0xda8] sm:$0xff]
    %v1483 = vld [vmem:[%s5 + $0xdb0] sm:$0xff]
    %v1484 = vld [vmem:[%s5 + $0xdb8] sm:$0xff]
    %v1485 = vld [vmem:[%s5 + $0xdc0] sm:$0xff]
    %v1486 = vld [vmem:[%s5 + $0xdc8] sm:$0xff]
    %v1487 = vld [vmem:[%s5 + $0xdd0] sm:$0xff]
    %v1488 = vld [vmem:[%s5 + $0xdd8] sm:$0xff]
    %v1489 = vld [vmem:[%s5 + $0xde0] sm:$0xff]
    %v1490 = vld [vmem:[%s5 + $0xde8] sm:$0xff]
    %v1491 = vld [vmem:[%s5 + $0xdf0] sm:$0xff]
    %v1492 = vld [vmem:[%s5 + $0xdf8] sm:$0xff]
    %v1493 = vld [vmem:[%s5 + $0xe00] sm:$0xff]
    %v1494 = vld [vmem:[%s5 + $0xe08] sm:$0xff]
    %v1495 = vld [vmem:[%s5 + $0xe10] sm:$0xff]
    %v1496 = vld [vmem:[%s5 + $0xe18] sm:$0xff]
    %v1497 = vld [vmem:[%s5 + $0xe20] sm:$0xff]
    %v1498 = vld [vmem:[%s5 + $0xe28] sm:$0xff]
    %v1499 = vld [vmem:[%s5 + $0xe30] sm:$0xff]
    %v1500 = vld [vmem:[%s5 + $0xe38] sm:$0xff]
    %v1501 = vld [vmem:[%s5 + $0xe40] sm:$0xff]
    %v1502 = vld [vmem:[%s5 + $0xe48] sm:$0xff]
    %v1503 = vld [vmem:[%s5 + $0xe50] sm:$0xff]
    %v1504 = vld [vmem:[%s5 + $0xe58] sm:$0xff]
    %v1505 = vld [vmem:[%s5 + $0xe60] sm:$0xff]
    %v1506 = vld [vmem:[%s5 + $0xe68] sm:$0xff]
    %v1507 = vld [vmem:[%s5 + $0xe70] sm:$0xff]
    %v1508 = vld [vmem:[%s5 + $0xe78] sm:$0xff]
    %v1509 = vld [vmem:[%s5 + $0xe80] sm:$0xff]
    %v1510 = vld [vmem:[%s5 + $0xe88] sm:$0xff]
    %v1511 = vld [vmem:[%s5 + $0xe90] sm:$0xff]
    %v1512 = vld [vmem:[%s5 + $0xe98] sm:$0xff]
    %v1513 = vld [vmem:[%s5 + $0xea0] sm:$0xff]
    %v1514 = vld [vmem:[%s5 + $0xea8] sm:$0xff]
    %v1515 = vld [vmem:[%s5 + $0xeb0] sm:$0xff]
    %v1516 = vld [vmem:[%s5 + $0xeb8] sm:$0xff]
    %v1517 = vld [vmem:[%s5 + $0xec0] sm:$0xff]
    %v1518 = vld [vmem:[%s5 + $0xec8] sm:$0xff]
    %v1519 = vld [vmem:[%s5 + $0xed0] sm:$0xff]
    %v1520 = vld [vmem:[%s5 + $0xed8] sm:$0xff]
    %v1521 = vld [vmem:[%s5 + $0xee0] sm:$0xff]
    %v1522 = vld [vmem:[%s5 + $0xee8] sm:$0xff]
    %v1523 = vld [vmem:[%s5 + $0xef0] sm:$0xff]
    %v1524 = vld [vmem:[%s5 + $0xef8] sm:$0xff]
    %v1525 = vld [vmem:[%s5 + $0xf00] sm:$0xff]
    %v1526 = vld [vmem:[%s5 + $0xf08] sm:$0xff]
    %v1527 = vld [vmem:[%s5 + $0xf10] sm:$0xff]
    %v1528 = vld [vmem:[%s5 + $0xf18] sm:$0xff]
    %v1529 = vld [vmem:[%s5 + $0xf20] sm:$0xff]
    %v1530 = vld [vmem:[%s5 + $0xf28] sm:$0xff]
    %v1531 = vld [vmem:[%s5 + $0xf30] sm:$0xff]
    %v1532 = vld [vmem:[%s5 + $0xf38] sm:$0xff]
    %v1533 = vld [vmem:[%s5 + $0xf40] sm:$0xff]
    %v1534 = vld [vmem:[%s5 + $0xf48] sm:$0xff]
    %v1535 = vld [vmem:[%s5 + $0xf50] sm:$0xff]
    %v1536 = vld [vmem:[%s5 + $0xf58] sm:$0xff]
    %v1537 = vld [vmem:[%s5 + $0xf60] sm:$0xff]
    %v1538 = vld [vmem:[%s5 + $0xf68] sm:$0xff]
    %v1539 = vld [vmem:[%s5 + $0xf70] sm:$0xff]
    %v1540 = vld [vmem:[%s5 + $0xf78] sm:$0xff]
    %v1541 = vld [vmem:[%s5 + $0xf80] sm:$0xff]
    %v1542 = vld [vmem:[%s5 + $0xf88] sm:$0xff]
    %v1543 = vld [vmem:[%s5 + $0xf90] sm:$0xff]
    %v1544 = vld [vmem:[%s5 + $0xf98] sm:$0xff]
    %v1545 = vld [vmem:[%s5 + $0xfa0] sm:$0xff]
    %v1546 = vld [vmem:[%s5 + $0xfa8] sm:$0xff]
    %v1547 = vld [vmem:[%s5 + $0xfb0] sm:$0xff]
    %v1548 = vld [vmem:[%s5 + $0xfb8] sm:$0xff]
    %v1549 = vld [vmem:[%s5 + $0xfc0] sm:$0xff]
    %v1550 = vld [vmem:[%s5 + $0xfc8] sm:$0xff]
    %v1551 = vld [vmem:[%s5 + $0xfd0] sm:$0xff]
    %v1552 = vld [vmem:[%s5 + $0xfd8] sm:$0xff]
    %v1553 = vld [vmem:[%s5 + $0xfe0] sm:$0xff]
    %v1554 = vld [vmem:[%s5 + $0xfe8] sm:$0xff]
    %v1555 = vld [vmem:[%s5 + $0xff0] sm:$0xff]
    %v1556 = vld [vmem:[%s5 + $0xff8] sm:$0xff]
    %v1557 = vld [vmem:[%s5 + $0x1000] sm:$0xff]
    %v1558 = vld [vmem:[%s5 + $0x1008] sm:$0xff]
    %v1559 = vld [vmem:[%s5 + $0x1010] sm:$0xff]
    %v1560 = vld [vmem:[%s5 + $0x1018] sm:$0xff]
    %v1561 = vld [vmem:[%s5 + $0x1020] sm:$0xff]
    %v1562 = vld [vmem:[%s5 + $0x1028] sm:$0xff]
    %v1563 = vld [vmem:[%s5 + $0x1030] sm:$0xff]
    %v1564 = vld [vmem:[%s5 + $0x1038] sm:$0xff]
    %v1565 = vld [vmem:[%s5 + $0x1040] sm:$0xff]
    %v1566 = vld [vmem:[%s5 + $0x1048] sm:$0xff]
    %v1567 = vld [vmem:[%s5 + $0x1050] sm:$0xff]
    %v1568 = vld [vmem:[%s5 + $0x1058] sm:$0xff]
    %v1569 = vld [vmem:[%s5 + $0x1060] sm:$0xff]
    %v1570 = vld [vmem:[%s5 + $0x1068] sm:$0xff]
    %v1571 = vld [vmem:[%s5 + $0x1070] sm:$0xff]
    %v1572 = vld [vmem:[%s5 + $0x1078] sm:$0xff]
    %v1573 = vld [vmem:[%s5 + $0x1080] sm:$0xff]
    %v1574 = vld [vmem:[%s5 + $0x1088] sm:$0xff]
    %v1575 = vld [vmem:[%s5 + $0x1090] sm:$0xff]
    %v1576 = vld [vmem:[%s5 + $0x1098] sm:$0xff]
    %v1577 = vld [vmem:[%s5 + $0x10a0] sm:$0xff]
    %v1578 = vld [vmem:[%s5 + $0x10a8] sm:$0xff]
    %v1579 = vld [vmem:[%s5 + $0x10b0] sm:$0xff]
    %v1580 = vld [vmem:[%s5 + $0x10b8] sm:$0xff]
    %v1581 = vld [vmem:[%s5 + $0x10c0] sm:$0xff]
    %v1582 = vld [vmem:[%s5 + $0x10c8] sm:$0xff]
    %v1583 = vld [vmem:[%s5 + $0x10d0] sm:$0xff]
    %v1584 = vld [vmem:[%s5 + $0x10d8] sm:$0xff]
    %v1585 = vld [vmem:[%s5 + $0x10e0] sm:$0xff]
    %v1586 = vld [vmem:[%s5 + $0x10e8] sm:$0xff]
    %v1587 = vld [vmem:[%s5 + $0x10f0] sm:$0xff]
    %v1588 = vld [vmem:[%s5 + $0x10f8] sm:$0xff]
    %v1589 = vld [vmem:[%s5 + $0x1100] sm:$0xff]
    %v1590 = vld [vmem:[%s5 + $0x1108] sm:$0xff]
    %v1591 = vld [vmem:[%s5 + $0x1110] sm:$0xff]
    %v1592 = vld [vmem:[%s5 + $0x1118] sm:$0xff]
    %v1593 = vld [vmem:[%s5 + $0x1120] sm:$0xff]
    %v1594 = vld [vmem:[%s5 + $0x1128] sm:$0xff]
    %v1595 = vld [vmem:[%s5 + $0x1130] sm:$0xff]
    %v1596 = vld [vmem:[%s5 + $0x1138] sm:$0xff]
    %v1597 = vld [vmem:[%s5 + $0x1140] sm:$0xff]
    %v1598 = vld [vmem:[%s5 + $0x1148] sm:$0xff]
    %v1599 = vld [vmem:[%s5 + $0x1150] sm:$0xff]
    %v1600 = vld [vmem:[%s5 + $0x1158] sm:$0xff]
    %v1601 = vld [vmem:[%s5 + $0x1160] sm:$0xff]
    %v1602 = vld [vmem:[%s5 + $0x1168] sm:$0xff]
    %v1603 = vld [vmem:[%s5 + $0x1170] sm:$0xff]
    %v1604 = vld [vmem:[%s5 + $0x1178] sm:$0xff]
    %v1605 = vld [vmem:[%s5 + $0x1180] sm:$0xff]
    %v1606 = vld [vmem:[%s5 + $0x1188] sm:$0xff]
    %v1607 = vld [vmem:[%s5 + $0x1190] sm:$0xff]
    %v1608 = vld [vmem:[%s5 + $0x1198] sm:$0xff]
    %v1609 = vld [vmem:[%s5 + $0x11a0] sm:$0xff]
    %v1610 = vld [vmem:[%s5 + $0x11a8] sm:$0xff]
    %v1611 = vld [vmem:[%s5 + $0x11b0] sm:$0xff]
    %v1612 = vld [vmem:[%s5 + $0x11b8] sm:$0xff]
    %v1613 = vld [vmem:[%s5 + $0x11c0] sm:$0xff]
    %v1614 = vld [vmem:[%s5 + $0x11c8] sm:$0xff]
    %v1615 = vld [vmem:[%s5 + $0x11d0] sm:$0xff]
    %v1616 = vld [vmem:[%s5 + $0x11d8] sm:$0xff]
    %v1617 = vld [vmem:[%s5 + $0x11e0] sm:$0xff]
    %v1618 = vld [vmem:[%s5 + $0x11e8] sm:$0xff]
    %v1619 = vld [vmem:[%s5 + $0x11f0] sm:$0xff]
    %v1620 = vld [vmem:[%s5 + $0x11f8] sm:$0xff]
    %v1621 = vld [vmem:[%s5 + $0x1200] sm:$0xff]
    %v1622 = vld [vmem:[%s5 + $0x1208] sm:$0xff]
    %v1623 = vld [vmem:[%s5 + $0x1210] sm:$0xff]
    %v1624 = vld [vmem:[%s5 + $0x1218] sm:$0xff]
    %v1625 = vld [vmem:[%s5 + $0x1220] sm:$0xff]
    %v1626 = vld [vmem:[%s5 + $0x1228] sm:$0xff]
    %v1627 = vld [vmem:[%s5 + $0x1230] sm:$0xff]
    %v1628 = vld [vmem:[%s5 + $0x1238] sm:$0xff]
    %v1629 = vld [vmem:[%s5 + $0x1240] sm:$0xff]
    %v1630 = vld [vmem:[%s5 + $0x1248] sm:$0xff]
    %v1631 = vld [vmem:[%s5 + $0x1250] sm:$0xff]
    %v1632 = vld [vmem:[%s5 + $0x1258] sm:$0xff]
    %v1633 = vld [vmem:[%s5 + $0x1260] sm:$0xff]
    %v1634 = vld [vmem:[%s5 + $0x1268] sm:$0xff]
    %v1635 = vld [vmem:[%s5 + $0x1270] sm:$0xff]
    %v1636 = vld [vmem:[%s5 + $0x1278] sm:$0xff]
    %v1637 = vld [vmem:[%s5 + $0x1280] sm:$0xff]
    %v1638 = vld [vmem:[%s5 + $0x1288] sm:$0xff]
    %v1639 = vld [vmem:[%s5 + $0x1290] sm:$0xff]
    %v1640 = vld [vmem:[%s5 + $0x1298] sm:$0xff]
    %v1641 = vld [vmem:[%s5 + $0x12a0] sm:$0xff]
    %v1642 = vld [vmem:[%s5 + $0x12a8] sm:$0xff]
    %v1643 = vld [vmem:[%s5 + $0x12b0] sm:$0xff]
    %v1644 = vld [vmem:[%s5 + $0x12b8] sm:$0xff]
    %v1645 = vld [vmem:[%s5 + $0x12c0] sm:$0xff]
    %v1646 = vld [vmem:[%s5 + $0x12c8] sm:$0xff]
    %v1647 = vld [vmem:[%s5 + $0x12d0] sm:$0xff]
    %v1648 = vld [vmem:[%s5 + $0x12d8] sm:$0xff]
    %v1649 = vld [vmem:[%s5 + $0x12e0] sm:$0xff]
    %v1650 = vld [vmem:[%s5 + $0x12e8] sm:$0xff]
    %v1651 = vld [vmem:[%s5 + $0x12f0] sm:$0xff]
    %v1652 = vld [vmem:[%s5 + $0x12f8] sm:$0xff]
    %v1653 = vld [vmem:[%s5 + $0x1300] sm:$0xff]
    %v1654 = vld [vmem:[%s5 + $0x1308] sm:$0xff]
    %v1655 = vld [vmem:[%s5 + $0x1310] sm:$0xff]
    %v1656 = vld [vmem:[%s5 + $0x1318] sm:$0xff]
    %v1657 = vld [vmem:[%s5 + $0x1320] sm:$0xff]
    %v1658 = vld [vmem:[%s5 + $0x1328] sm:$0xff]
    %v1659 = vld [vmem:[%s5 + $0x1330] sm:$0xff]
    %v1660 = vld [vmem:[%s5 + $0x1338] sm:$0xff]
    %v1661 = vld [vmem:[%s5 + $0x1340] sm:$0xff]
    %v1662 = vld [vmem:[%s5 + $0x1348] sm:$0xff]
    %v1663 = vld [vmem:[%s5 + $0x1350] sm:$0xff]
    %v1664 = vld [vmem:[%s5 + $0x1358] sm:$0xff]
    %v1665 = vld [vmem:[%s5 + $0x1360] sm:$0xff]
    %v1666 = vld [vmem:[%s5 + $0x1368] sm:$0xff]
    %v1667 = vld [vmem:[%s5 + $0x1370] sm:$0xff]
    %v1668 = vld [vmem:[%s5 + $0x1378] sm:$0xff]
    %v1669 = vld [vmem:[%s5 + $0x1380] sm:$0xff]
    %v1670 = vld [vmem:[%s5 + $0x1388] sm:$0xff]
    %v1671 = vld [vmem:[%s5 + $0x1390] sm:$0xff]
    %v1672 = vld [vmem:[%s5 + $0x1398] sm:$0xff]
    %v1673 = vld [vmem:[%s5 + $0x13a0] sm:$0xff]
    %v1674 = vld [vmem:[%s5 + $0x13a8] sm:$0xff]
    %v1675 = vld [vmem:[%s5 + $0x13b0] sm:$0xff]
    %v1676 = vld [vmem:[%s5 + $0x13b8] sm:$0xff]
    %v1677 = vld [vmem:[%s5 + $0x13c0] sm:$0xff]
    %v1678 = vld [vmem:[%s5 + $0x13c8] sm:$0xff]
    %v1679 = vld [vmem:[%s5 + $0x13d0] sm:$0xff]
    %v1680 = vld [vmem:[%s5 + $0x13d8] sm:$0xff]
    %v1681 = vld [vmem:[%s5 + $0x13e0] sm:$0xff]
    %v1682 = vld [vmem:[%s5 + $0x13e8] sm:$0xff]
    %v1683 = vld [vmem:[%s5 + $0x13f0] sm:$0xff]
    %v1684 = vld [vmem:[%s5 + $0x13f8] sm:$0xff]
    %v1685 = vld [vmem:[%s5 + $0x1400] sm:$0xff]
    %v1686 = vld [vmem:[%s5 + $0x1408] sm:$0xff]
    %v1687 = vld [vmem:[%s5 + $0x1410] sm:$0xff]
    %v1688 = vld [vmem:[%s5 + $0x1418] sm:$0xff]
    %v1689 = vld [vmem:[%s5 + $0x1420] sm:$0xff]
    %v1690 = vld [vmem:[%s5 + $0x1428] sm:$0xff]
    %v1691 = vld [vmem:[%s5 + $0x1430] sm:$0xff]
    %v1692 = vld [vmem:[%s5 + $0x1438] sm:$0xff]
    %v1693 = vld [vmem:[%s5 + $0x1440] sm:$0xff]
    %v1694 = vld [vmem:[%s5 + $0x1448] sm:$0xff]
    %v1695 = vld [vmem:[%s5 + $0x1450] sm:$0xff]
    %v1696 = vld [vmem:[%s5 + $0x1458] sm:$0xff]
    %v1697 = vld [vmem:[%s5 + $0x1460] sm:$0xff]
    %v1698 = vld [vmem:[%s5 + $0x1468] sm:$0xff]
    %v1699 = vld [vmem:[%s5 + $0x1470] sm:$0xff]
    %v1700 = vld [vmem:[%s5 + $0x1478] sm:$0xff]
    %v1701 = vld [vmem:[%s5 + $0x1480] sm:$0xff]
    %v1702 = vld [vmem:[%s5 + $0x1488] sm:$0xff]
    %v1703 = vld [vmem:[%s5 + $0x1490] sm:$0xff]
    %v1704 = vld [vmem:[%s5 + $0x1498] sm:$0xff]
    %v1705 = vld [vmem:[%s5 + $0x14a0] sm:$0xff]
    %v1706 = vld [vmem:[%s5 + $0x14a8] sm:$0xff]
    %v1707 = vld [vmem:[%s5 + $0x14b0] sm:$0xff]
    %v1708 = vld [vmem:[%s5 + $0x14b8] sm:$0xff]
    %v1709 = vld [vmem:[%s5 + $0x14c0] sm:$0xff]
    %v1710 = vld [vmem:[%s5 + $0x14c8] sm:$0xff]
    %v1711 = vld [vmem:[%s5 + $0x14d0] sm:$0xff]
    %v1712 = vld [vmem:[%s5 + $0x14d8] sm:$0xff]
    %v1713 = vld [vmem:[%s5 + $0x14e0] sm:$0xff]
    %v1714 = vld [vmem:[%s5 + $0x14e8] sm:$0xff]
    %v1715 = vld [vmem:[%s5 + $0x14f0] sm:$0xff]
    %v1716 = vld [vmem:[%s5 + $0x14f8] sm:$0xff]
    %v1717 = vld [vmem:[%s5 + $0x1500] sm:$0xff]
    %v1718 = vld [vmem:[%s5 + $0x1508] sm:$0xff]
    %v1719 = vld [vmem:[%s5 + $0x1510] sm:$0xff]
    %v1720 = vld [vmem:[%s5 + $0x1518] sm:$0xff]
    %v1721 = vld [vmem:[%s5 + $0x1520] sm:$0xff]
    %v1722 = vld [vmem:[%s5 + $0x1528] sm:$0xff]
    %v1723 = vld [vmem:[%s5 + $0x1530] sm:$0xff]
    %v1724 = vld [vmem:[%s5 + $0x1538] sm:$0xff]
    %v1725 = vld [vmem:[%s5 + $0x1540] sm:$0xff]
    %v1726 = vld [vmem:[%s5 + $0x1548] sm:$0xff]
    %v1727 = vld [vmem:[%s5 + $0x1550] sm:$0xff]
    %v1728 = vld [vmem:[%s5 + $0x1558] sm:$0xff]
    %v1729 = vld [vmem:[%s5 + $0x1560] sm:$0xff]
    %v1730 = vld [vmem:[%s5 + $0x1568] sm:$0xff]
    %v1731 = vld [vmem:[%s5 + $0x1570] sm:$0xff]
    %v1732 = vld [vmem:[%s5 + $0x1578] sm:$0xff]
    %v1733 = vld [vmem:[%s5 + $0x1580] sm:$0xff]
    %v1734 = vld [vmem:[%s5 + $0x1588] sm:$0xff]
    %v1735 = vld [vmem:[%s5 + $0x1590] sm:$0xff]
    %v1736 = vld [vmem:[%s5 + $0x1598] sm:$0xff]
    %v1737 = vld [vmem:[%s5 + $0x15a0] sm:$0xff]
    %v1738 = vld [vmem:[%s5 + $0x15a8] sm:$0xff]
    %v1739 = vld [vmem:[%s5 + $0x15b0] sm:$0xff]
    %v1740 = vld [vmem:[%s5 + $0x15b8] sm:$0xff]
    %v1741 = vld [vmem:[%s5 + $0x15c0] sm:$0xff]
    %v1742 = vld [vmem:[%s5 + $0x15c8] sm:$0xff]
    %v1743 = vld [vmem:[%s5 + $0x15d0] sm:$0xff]
    %v1744 = vld [vmem:[%s5 + $0x15d8] sm:$0xff]
    %v1745 = vld [vmem:[%s5 + $0x15e0] sm:$0xff]
    %v1746 = vld [vmem:[%s5 + $0x15e8] sm:$0xff]
    %v1747 = vld [vmem:[%s5 + $0x15f0] sm:$0xff]
    %v1748 = vld [vmem:[%s5 + $0x15f8] sm:$0xff]
    %v1749 = vld [vmem:[%s5 + $0x1600] sm:$0xff]
    %v1750 = vld [vmem:[%s5 + $0x1608] sm:$0xff]
    %v1751 = vld [vmem:[%s5 + $0x1610] sm:$0xff]
    %v1752 = vld [vmem:[%s5 + $0x1618] sm:$0xff]
    %v1753 = vld [vmem:[%s5 + $0x1620] sm:$0xff]
    %v1754 = vld [vmem:[%s5 + $0x1628] sm:$0xff]
    %v1755 = vld [vmem:[%s5 + $0x1630] sm:$0xff]
    %v1756 = vld [vmem:[%s5 + $0x1638] sm:$0xff]
    %v1757 = vld [vmem:[%s5 + $0x1640] sm:$0xff]
    %v1758 = vld [vmem:[%s5 + $0x1648] sm:$0xff]
    %v1759 = vld [vmem:[%s5 + $0x1650] sm:$0xff]
    %v1760 = vld [vmem:[%s5 + $0x1658] sm:$0xff]
    %v1761 = vld [vmem:[%s5 + $0x1660] sm:$0xff]
    %v1762 = vld [vmem:[%s5 + $0x1668] sm:$0xff]
    %v1763 = vld [vmem:[%s5 + $0x1670] sm:$0xff]
    %v1764 = vld [vmem:[%s5 + $0x1678] sm:$0xff]
    %v1765 = vld [vmem:[%s5 + $0x1680] sm:$0xff]
    %v1766 = vld [vmem:[%s5 + $0x1688] sm:$0xff]
    %v1767 = vld [vmem:[%s5 + $0x1690] sm:$0xff]
    %v1768 = vld [vmem:[%s5 + $0x1698] sm:$0xff]
    %v1769 = vld [vmem:[%s5 + $0x16a0] sm:$0xff]
    %v1770 = vld [vmem:[%s5 + $0x16a8] sm:$0xff]
    %v1771 = vld [vmem:[%s5 + $0x16b0] sm:$0xff]
    %v1772 = vld [vmem:[%s5 + $0x16b8] sm:$0xff]
    %v1773 = vld [vmem:[%s5 + $0x16c0] sm:$0xff]
    %v1774 = vld [vmem:[%s5 + $0x16c8] sm:$0xff]
    %v1775 = vld [vmem:[%s5 + $0x16d0] sm:$0xff]
    %v1776 = vld [vmem:[%s5 + $0x16d8] sm:$0xff]
    %v1777 = vld [vmem:[%s5 + $0x16e0] sm:$0xff]
    %v1778 = vld [vmem:[%s5 + $0x16e8] sm:$0xff]
    %v1779 = vld [vmem:[%s5 + $0x16f0] sm:$0xff]
    %v1780 = vld [vmem:[%s5 + $0x16f8] sm:$0xff]
    %v1781 = vld [vmem:[%s5 + $0x1700] sm:$0xff]
    %v1782 = vld [vmem:[%s5 + $0x1708] sm:$0xff]
    %v1783 = vld [vmem:[%s5 + $0x1710] sm:$0xff]
    %v1784 = vld [vmem:[%s5 + $0x1718] sm:$0xff]
    %v1785 = vld [vmem:[%s5 + $0x1720] sm:$0xff]
    %v1786 = vld [vmem:[%s5 + $0x1728] sm:$0xff]
    %v1787 = vld [vmem:[%s5 + $0x1730] sm:$0xff]
    %v1788 = vld [vmem:[%s5 + $0x1738] sm:$0xff]
    %v1789 = vld [vmem:[%s5 + $0x1740] sm:$0xff]
    %v1790 = vld [vmem:[%s5 + $0x1748] sm:$0xff]
    %v1791 = vld [vmem:[%s5 + $0x1750] sm:$0xff]
    %v1792 = vld [vmem:[%s5 + $0x1758] sm:$0xff]
    %v1793 = vld [vmem:[%s5 + $0x1760] sm:$0xff]
    %v1794 = vld [vmem:[%s5 + $0x1768] sm:$0xff]
    %v1795 = vld [vmem:[%s5 + $0x1770] sm:$0xff]
    %v1796 = vld [vmem:[%s5 + $0x1778] sm:$0xff]
    %v1797 = vld [vmem:[%s5 + $0x1780] sm:$0xff]
    %v1798 = vld [vmem:[%s5 + $0x1788] sm:$0xff]
    %v1799 = vld [vmem:[%s5 + $0x1790] sm:$0xff]
    %v1800 = vld [vmem:[%s5 + $0x1798] sm:$0xff]
    %v1801 = vld [vmem:[%s5 + $0x17a0] sm:$0xff]
    %v1802 = vld [vmem:[%s5 + $0x17a8] sm:$0xff]
    %v1803 = vld [vmem:[%s5 + $0x17b0] sm:$0xff]
    %v1804 = vld [vmem:[%s5 + $0x17b8] sm:$0xff]
    %v1805 = vld [vmem:[%s5 + $0x17c0] sm:$0xff]
    %v1806 = vld [vmem:[%s5 + $0x17c8] sm:$0xff]
    %v1807 = vld [vmem:[%s5 + $0x17d0] sm:$0xff]
    %v1808 = vld [vmem:[%s5 + $0x17d8] sm:$0xff]
    %v1809 = vld [vmem:[%s5 + $0x17e0] sm:$0xff]
    %v1810 = vld [vmem:[%s5 + $0x17e8] sm:$0xff]
    %v1811 = vld [vmem:[%s5 + $0x17f0] sm:$0xff]
    %v1812 = vld [vmem:[%s5 + $0x17f8] sm:$0xff]
    %v1813 = vld [vmem:[%s6] sm:$0xff]
    %v1815 = vlaneseq
    %v1816 = vshrl.u32 %v1815, 7
    %v1817 = vsub.s32 0, %v1816
    %v1818 = vrot.slane %v1813, %v1817
    %v1819 = vlaneseq
    %v1820 = vshrl.u32 %v1819, 7
    %v1821 = vsub.s32 1, %v1820
    %v1822 = vrot.slane %v1813, %v1821
    %v1823 = vlaneseq
    %v1824 = vshrl.u32 %v1823, 7
    %v1825 = vsub.s32 2, %v1824
    %v1826 = vrot.slane %v1813, %v1825
    %v1827 = vlaneseq
    %v1828 = vshrl.u32 %v1827, 7
    %v1829 = vsub.s32 3, %v1828
    %v1830 = vrot.slane %v1813, %v1829
    %v1831 = vlaneseq
    %v1832 = vshrl.u32 %v1831, 7
    %v1833 = vsub.s32 4, %v1832
    %v1834 = vrot.slane %v1813, %v1833
    %v1835 = vlaneseq
    %v1836 = vshrl.u32 %v1835, 7
    %v1837 = vsub.s32 5, %v1836
    %v1838 = vrot.slane %v1813, %v1837
    %v1839 = vlaneseq
    %v1840 = vshrl.u32 %v1839, 7
    %v1841 = vsub.s32 6, %v1840
    %v1842 = vrot.slane %v1813, %v1841
    %v1843 = vlaneseq
    %v1844 = vshrl.u32 %v1843, 7
    %v1845 = vsub.s32 7, %v1844
    %v1846 = vrot.slane %v1813, %v1845
    %1855 = vmatprep.subr.mxu0 %v1166
    %1856 = vmatpush1.msra.mxu0 %v1165
    %1857 = vmatprep.subr.mxu0 %v1158
    %1858 = vmatpush1.msra.mxu0 %v1157
    %1859 = vmatprep.subr.mxu0 %v1150
    %1860 = vmatpush1.msra.mxu0 %v1149
    %1861 = vmatprep.subr.mxu0 %v1142
    %1862 = vmatpush1.msra.mxu0 %v1141
    %1863 = vmatprep.subr.mxu0 %v1134
    %1864 = vmatpush1.msra.mxu0 %v1133
    %1865 = vmatprep.subr.mxu0 %v1126
    %1866 = vmatpush1.msra.mxu0 %v1125
    %1867 = vmatprep.subr.mxu0 %v1118
    %1868 = vmatpush1.msra.mxu0 %v1117
    %1869 = vmatprep.subr.mxu0 %v1110
    %1870 = vmatpush1.msra.mxu0 %v1109
    %1871 = vmatprep.subr.mxu0 %v1102
    %1872 = vmatpush1.msra.mxu0 %v1101
    %1873 = vmatprep.subr.mxu0 %v1094
    %1874 = vmatpush1.msra.mxu0 %v1093
    %1875 = vmatprep.subr.mxu0 %v1086
    %1876 = vmatpush1.msra.mxu0 %v1085
    %1877 = vmatprep.subr.mxu0 %v1078
    %1878 = vmatpush1.msra.mxu0 %v1077
    %1879 = vmatprep.subr.mxu0 %v1070
    %1880 = vmatpush1.msra.mxu0 %v1069
    %1881 = vmatprep.subr.mxu0 %v1062
    %1882 = vmatpush1.msra.mxu0 %v1061
    %1883 = vmatprep.subr.mxu0 %v1054
    %1884 = vmatpush1.msra.mxu0 %v1053
    %1885 = vmatprep.subr.mxu0 %v1046
    %1886 = vmatpush1.msra.mxu0 %v1045
    %1887 = vmatprep.subr.mxu0 %v1294
    %1888 = vmatpush2.msra.mxu0 %v1293
    %1889 = vmatprep.subr.mxu0 %v1286
    %1890 = vmatpush2.msra.mxu0 %v1285
    %1891 = vmatprep.subr.mxu0 %v1278
    %1892 = vmatpush2.msra.mxu0 %v1277
    %1893 = vmatprep.subr.mxu0 %v1270
    %1894 = vmatpush2.msra.mxu0 %v1269
    %1895 = vmatprep.subr.mxu0 %v1262
    %1896 = vmatpush2.msra.mxu0 %v1261
    %1897 = vmatprep.subr.mxu0 %v1254
    %1898 = vmatpush2.msra.mxu0 %v1253
    %1899 = vmatprep.subr.mxu0 %v1246
    %1900 = vmatpush2.msra.mxu0 %v1245
    %1901 = vmatprep.subr.mxu0 %v1238
    %1902 = vmatpush2.msra.mxu0 %v1237
    %1903 = vmatprep.subr.mxu0 %v1230
    %1904 = vmatpush2.msra.mxu0 %v1229
    %1905 = vmatprep.subr.mxu0 %v1222
    %1906 = vmatpush2.msra.mxu0 %v1221
    %1907 = vmatprep.subr.mxu0 %v1214
    %1908 = vmatpush2.msra.mxu0 %v1213
    %1909 = vmatprep.subr.mxu0 %v1206
    %1910 = vmatpush2.msra.mxu0 %v1205
    %1911 = vmatprep.subr.mxu0 %v1198
    %1912 = vmatpush2.msra.mxu0 %v1197
    %1913 = vmatprep.subr.mxu0 %v1190
    %1914 = vmatpush2.msra.mxu0 %v1189
    %1915 = vmatprep.subr.mxu0 %v1182
    %1916 = vmatpush2.msra.mxu0 %v1181
    %1917 = vmatprep.subr.mxu0 %v1174
    %1918 = vmatpush2.msra.mxu0 %v1173
    %1919 = vmatprep.mubr.f32.mxu0 %v1036
    %1920 = vmatmul.mubr.f32.gmra.mxu0 %v1034
    %v1921 = vpop.f32.mrf.mxu0
    %v1922 = vadd.f32 %v1818, %v1921
    %v1923 = vpop.f32.mrf.mxu0
    %v1924 = vadd.f32 %v1822, %v1923
    %1925 = vdwg.mxu0
    %1926 = vmatprep.subr.mxu0 %v1422
    %1927 = vmatpush1.msra.mxu0 %v1421
    %1928 = vmatprep.subr.mxu0 %v1414
    %1929 = vmatpush1.msra.mxu0 %v1413
    %1930 = vmatprep.subr.mxu0 %v1406
    %1931 = vmatpush1.msra.mxu0 %v1405
    %1932 = vmatprep.subr.mxu0 %v1398
    %1933 = vmatpush1.msra.mxu0 %v1397
    %1934 = vmatprep.subr.mxu0 %v1390
    %1935 = vmatpush1.msra.mxu0 %v1389
    %1936 = vmatprep.subr.mxu0 %v1382
    %1937 = vmatpush1.msra.mxu0 %v1381
    %1938 = vmatprep.subr.mxu0 %v1374
    %1939 = vmatpush1.msra.mxu0 %v1373
    %1940 = vmatprep.subr.mxu0 %v1366
    %1941 = vmatpush1.msra.mxu0 %v1365
    %1942 = vmatprep.subr.mxu0 %v1358
    %1943 = vmatpush1.msra.mxu0 %v1357
    %1944 = vmatprep.subr.mxu0 %v1350
    %1945 = vmatpush1.msra.mxu0 %v1349
    %1946 = vmatprep.subr.mxu0 %v1342
    %1947 = vmatpush1.msra.mxu0 %v1341
    %1948 = vmatprep.subr.mxu0 %v1334
    %1949 = vmatpush1.msra.mxu0 %v1333
    %1950 = vmatprep.subr.mxu0 %v1326
    %1951 = vmatpush1.msra.mxu0 %v1325
    %1952 = vmatprep.subr.mxu0 %v1318
    %1953 = vmatpush1.msra.mxu0 %v1317
    %1954 = vmatprep.subr.mxu0 %v1310
    %1955 = vmatpush1.msra.mxu0 %v1309
    %1956 = vmatprep.subr.mxu0 %v1302
    %1957 = vmatpush1.msra.mxu0 %v1301
    %1958 = vmatprep.subr.mxu0 %v1550
    %1959 = vmatpush2.msra.mxu0 %v1549
    %1960 = vmatprep.subr.mxu0 %v1542
    %1961 = vmatpush2.msra.mxu0 %v1541
    %1962 = vmatprep.subr.mxu0 %v1534
    %1963 = vmatpush2.msra.mxu0 %v1533
    %1964 = vmatprep.subr.mxu0 %v1526
    %1965 = vmatpush2.msra.mxu0 %v1525
    %1966 = vmatprep.subr.mxu0 %v1518
    %1967 = vmatpush2.msra.mxu0 %v1517
    %1968 = vmatprep.subr.mxu0 %v1510
    %1969 = vmatpush2.msra.mxu0 %v1509
    %1970 = vmatprep.subr.mxu0 %v1502
    %1971 = vmatpush2.msra.mxu0 %v1501
    %1972 = vmatprep.subr.mxu0 %v1494
    %1973 = vmatpush2.msra.mxu0 %v1493
    %1974 = vmatprep.subr.mxu0 %v1486
    %1975 = vmatpush2.msra.mxu0 %v1485
    %1976 = vmatprep.subr.mxu0 %v1478
    %1977 = vmatpush2.msra.mxu0 %v1477
    %1978 = vmatprep.subr.mxu0 %v1470
    %1979 = vmatpush2.msra.mxu0 %v1469
    %1980 = vmatprep.subr.mxu0 %v1462
    %1981 = vmatpush2.msra.mxu0 %v1461
    %1982 = vmatprep.subr.mxu0 %v1454
    %1983 = vmatpush2.msra.mxu0 %v1453
    %1984 = vmatprep.subr.mxu0 %v1446
    %1985 = vmatpush2.msra.mxu0 %v1445
    %1986 = vmatprep.subr.mxu0 %v1438
    %1987 = vmatpush2.msra.mxu0 %v1437
    %1988 = vmatprep.subr.mxu0 %v1430
    %1989 = vmatpush2.msra.mxu0 %v1429
    %1990 = vmatprep.mubr.f32.mxu0 %v1040
    %1991 = vmatmul.mubr.f32.gmra.mxu0 %v1038
    %v1992 = vpop.f32.mrf.mxu0
    %v1993 = vadd.f32 %v1922, %v1992
    %v1994 = vpop.f32.mrf.mxu0
    %v1995 = vadd.f32 %v1924, %v1994
    %1996 = vdwg.mxu0
    %1997 = vmatprep.subr.mxu0 %v1678
    %1998 = vmatpush1.msra.mxu0 %v1677
    %1999 = vmatprep.subr.mxu0 %v1670
    %2000 = vmatpush1.msra.mxu0 %v1669
    %2001 = vmatprep.subr.mxu0 %v1662
    %2002 = vmatpush1.msra.mxu0 %v1661
    %2003 = vmatprep.subr.mxu0 %v1654
    %2004 = vmatpush1.msra.mxu0 %v1653
    %2005 = vmatprep.subr.mxu0 %v1646
    %2006 = vmatpush1.msra.mxu0 %v1645
    %2007 = vmatprep.subr.mxu0 %v1638
    %2008 = vmatpush1.msra.mxu0 %v1637
    %2009 = vmatprep.subr.mxu0 %v1630
    %2010 = vmatpush1.msra.mxu0 %v1629
    %2011 = vmatprep.subr.mxu0 %v1622
    %2012 = vmatpush1.msra.mxu0 %v1621
    %2013 = vmatprep.subr.mxu0 %v1614
    %2014 = vmatpush1.msra.mxu0 %v1613
    %2015 = vmatprep.subr.mxu0 %v1606
    %2016 = vmatpush1.msra.mxu0 %v1605
    %2017 = vmatprep.subr.mxu0 %v1598
    %2018 = vmatpush1.msra.mxu0 %v1597
    %2019 = vmatprep.subr.mxu0 %v1590
    %2020 = vmatpush1.msra.mxu0 %v1589
    %2021 = vmatprep.subr.mxu0 %v1582
    %2022 = vmatpush1.msra.mxu0 %v1581
    %2023 = vmatprep.subr.mxu0 %v1574
    %2024 = vmatpush1.msra.mxu0 %v1573
    %2025 = vmatprep.subr.mxu0 %v1566
    %2026 = vmatpush1.msra.mxu0 %v1565
    %2027 = vmatprep.subr.mxu0 %v1558
    %2028 = vmatpush1.msra.mxu0 %v1557
    %2029 = vmatprep.subr.mxu0 %v1806
    %2030 = vmatpush2.msra.mxu0 %v1805
    %2031 = vmatprep.subr.mxu0 %v1798
    %2032 = vmatpush2.msra.mxu0 %v1797
    %2033 = vmatprep.subr.mxu0 %v1790
    %2034 = vmatpush2.msra.mxu0 %v1789
    %2035 = vmatprep.subr.mxu0 %v1782
    %2036 = vmatpush2.msra.mxu0 %v1781
    %2037 = vmatprep.subr.mxu0 %v1774
    %2038 = vmatpush2.msra.mxu0 %v1773
    %2039 = vmatprep.subr.mxu0 %v1766
    %2040 = vmatpush2.msra.mxu0 %v1765
    %2041 = vmatprep.subr.mxu0 %v1758
    %2042 = vmatpush2.msra.mxu0 %v1757
    %2043 = vmatprep.subr.mxu0 %v1750
    %2044 = vmatpush2.msra.mxu0 %v1749
    %2045 = vmatprep.subr.mxu0 %v1742
    %2046 = vmatpush2.msra.mxu0 %v1741
    %2047 = vmatprep.subr.mxu0 %v1734
    %2048 = vmatpush2.msra.mxu0 %v1733
    %2049 = vmatprep.subr.mxu0 %v1726
    %2050 = vmatpush2.msra.mxu0 %v1725
    %2051 = vmatprep.subr.mxu0 %v1718
    %2052 = vmatpush2.msra.mxu0 %v1717
    %2053 = vmatprep.subr.mxu0 %v1710
    %2054 = vmatpush2.msra.mxu0 %v1709
    %2055 = vmatprep.subr.mxu0 %v1702
    %2056 = vmatpush2.msra.mxu0 %v1701
    %2057 = vmatprep.subr.mxu0 %v1694
    %2058 = vmatpush2.msra.mxu0 %v1693
    %2059 = vmatprep.subr.mxu0 %v1686
    %2060 = vmatpush2.msra.mxu0 %v1685
    %2061 = vmatprep.mubr.f32.mxu0 %v1044
    %2062 = vmatmul.mubr.f32.gmra.mxu0 %v1042
    %v2063 = vpop.f32.mrf.mxu0
    %v2064 = vadd.f32 %v1993, %v2063
    %v2065 = vpop.f32.mrf.mxu0
    %v2066 = vadd.f32 %v1995, %v2065
    %2067 = vdwg.mxu0
    %2068 = vmatprep.subr.mxu0 %v1168
    %2069 = vmatpush1.msra.mxu0 %v1167
    %2070 = vmatprep.subr.mxu0 %v1160
    %2071 = vmatpush1.msra.mxu0 %v1159
    %2072 = vmatprep.subr.mxu0 %v1152
    %2073 = vmatpush1.msra.mxu0 %v1151
    %2074 = vmatprep.subr.mxu0 %v1144
    %2075 = vmatpush1.msra.mxu0 %v1143
    %2076 = vmatprep.subr.mxu0 %v1136
    %2077 = vmatpush1.msra.mxu0 %v1135
    %2078 = vmatprep.subr.mxu0 %v1128
    %2079 = vmatpush1.msra.mxu0 %v1127
    %2080 = vmatprep.subr.mxu0 %v1120
    %2081 = vmatpush1.msra.mxu0 %v1119
    %2082 = vmatprep.subr.mxu0 %v1112
    %2083 = vmatpush1.msra.mxu0 %v1111
    %2084 = vmatprep.subr.mxu0 %v1104
    %2085 = vmatpush1.msra.mxu0 %v1103
    %2086 = vmatprep.subr.mxu0 %v1096
    %2087 = vmatpush1.msra.mxu0 %v1095
    %2088 = vmatprep.subr.mxu0 %v1088
    %2089 = vmatpush1.msra.mxu0 %v1087
    %2090 = vmatprep.subr.mxu0 %v1080
    %2091 = vmatpush1.msra.mxu0 %v1079
    %2092 = vmatprep.subr.mxu0 %v1072
    %2093 = vmatpush1.msra.mxu0 %v1071
    %2094 = vmatprep.subr.mxu0 %v1064
    %2095 = vmatpush1.msra.mxu0 %v1063
    %2096 = vmatprep.subr.mxu0 %v1056
    %2097 = vmatpush1.msra.mxu0 %v1055
    %2098 = vmatprep.subr.mxu0 %v1048
    %2099 = vmatpush1.msra.mxu0 %v1047
    %2100 = vmatprep.subr.mxu0 %v1296
    %2101 = vmatpush2.msra.mxu0 %v1295
    %2102 = vmatprep.subr.mxu0 %v1288
    %2103 = vmatpush2.msra.mxu0 %v1287
    %2104 = vmatprep.subr.mxu0 %v1280
    %2105 = vmatpush2.msra.mxu0 %v1279
    %2106 = vmatprep.subr.mxu0 %v1272
    %2107 = vmatpush2.msra.mxu0 %v1271
    %2108 = vmatprep.subr.mxu0 %v1264
    %2109 = vmatpush2.msra.mxu0 %v1263
    %2110 = vmatprep.subr.mxu0 %v1256
    %2111 = vmatpush2.msra.mxu0 %v1255
    %2112 = vmatprep.subr.mxu0 %v1248
    %2113 = vmatpush2.msra.mxu0 %v1247
    %2114 = vmatprep.subr.mxu0 %v1240
    %2115 = vmatpush2.msra.mxu0 %v1239
    %2116 = vmatprep.subr.mxu0 %v1232
    %2117 = vmatpush2.msra.mxu0 %v1231
    %2118 = vmatprep.subr.mxu0 %v1224
    %2119 = vmatpush2.msra.mxu0 %v1223
    %2120 = vmatprep.subr.mxu0 %v1216
    %2121 = vmatpush2.msra.mxu0 %v1215
    %2122 = vmatprep.subr.mxu0 %v1208
    %2123 = vmatpush2.msra.mxu0 %v1207
    %2124 = vmatprep.subr.mxu0 %v1200
    %2125 = vmatpush2.msra.mxu0 %v1199
    %2126 = vmatprep.subr.mxu0 %v1192
    %2127 = vmatpush2.msra.mxu0 %v1191
    %2128 = vmatprep.subr.mxu0 %v1184
    %2129 = vmatpush2.msra.mxu0 %v1183
    %2130 = vmatprep.subr.mxu0 %v1176
    %2131 = vmatpush2.msra.mxu0 %v1175
    %2132 = vmatprep.mubr.f32.mxu0 %v1036
    %2133 = vmatmul.mubr.f32.gmra.mxu0 %v1034
    %v2134 = vpop.f32.mrf.mxu0
    %v2135 = vadd.f32 %v1826, %v2134
    %v2136 = vpop.f32.mrf.mxu0
    %v2137 = vadd.f32 %v1830, %v2136
    %2138 = vdwg.mxu0
    %2139 = vmatprep.subr.mxu0 %v1424
    %2140 = vmatpush1.msra.mxu0 %v1423
    %2141 = vmatprep.subr.mxu0 %v1416
    %2142 = vmatpush1.msra.mxu0 %v1415
    %2143 = vmatprep.subr.mxu0 %v1408
    %2144 = vmatpush1.msra.mxu0 %v1407
    %2145 = vmatprep.subr.mxu0 %v1400
    %2146 = vmatpush1.msra.mxu0 %v1399
    %2147 = vmatprep.subr.mxu0 %v1392
    %2148 = vmatpush1.msra.mxu0 %v1391
    %2149 = vmatprep.subr.mxu0 %v1384
    %2150 = vmatpush1.msra.mxu0 %v1383
    %2151 = vmatprep.subr.mxu0 %v1376
    %2152 = vmatpush1.msra.mxu0 %v1375
    %2153 = vmatprep.subr.mxu0 %v1368
    %2154 = vmatpush1.msra.mxu0 %v1367
    %2155 = vmatprep.subr.mxu0 %v1360
    %2156 = vmatpush1.msra.mxu0 %v1359
    %2157 = vmatprep.subr.mxu0 %v1352
    %2158 = vmatpush1.msra.mxu0 %v1351
    %2159 = vmatprep.subr.mxu0 %v1344
    %2160 = vmatpush1.msra.mxu0 %v1343
    %2161 = vmatprep.subr.mxu0 %v1336
    %2162 = vmatpush1.msra.mxu0 %v1335
    %2163 = vmatprep.subr.mxu0 %v1328
    %2164 = vmatpush1.msra.mxu0 %v1327
    %2165 = vmatprep.subr.mxu0 %v1320
    %2166 = vmatpush1.msra.mxu0 %v1319
    %2167 = vmatprep.subr.mxu0 %v1312
    %2168 = vmatpush1.msra.mxu0 %v1311
    %2169 = vmatprep.subr.mxu0 %v1304
    %2170 = vmatpush1.msra.mxu0 %v1303
    %2171 = vmatprep.subr.mxu0 %v1552
    %2172 = vmatpush2.msra.mxu0 %v1551
    %2173 = vmatprep.subr.mxu0 %v1544
    %2174 = vmatpush2.msra.mxu0 %v1543
    %2175 = vmatprep.subr.mxu0 %v1536
    %2176 = vmatpush2.msra.mxu0 %v1535
    %2177 = vmatprep.subr.mxu0 %v1528
    %2178 = vmatpush2.msra.mxu0 %v1527
    %2179 = vmatprep.subr.mxu0 %v1520
    %2180 = vmatpush2.msra.mxu0 %v1519
    %2181 = vmatprep.subr.mxu0 %v1512
    %2182 = vmatpush2.msra.mxu0 %v1511
    %2183 = vmatprep.subr.mxu0 %v1504
    %2184 = vmatpush2.msra.mxu0 %v1503
    %2185 = vmatprep.subr.mxu0 %v1496
    %2186 = vmatpush2.msra.mxu0 %v1495
    %2187 = vmatprep.subr.mxu0 %v1488
    %2188 = vmatpush2.msra.mxu0 %v1487
    %2189 = vmatprep.subr.mxu0 %v1480
    %2190 = vmatpush2.msra.mxu0 %v1479
    %2191 = vmatprep.subr.mxu0 %v1472
    %2192 = vmatpush2.msra.mxu0 %v1471
    %2193 = vmatprep.subr.mxu0 %v1464
    %2194 = vmatpush2.msra.mxu0 %v1463
    %2195 = vmatprep.subr.mxu0 %v1456
    %2196 = vmatpush2.msra.mxu0 %v1455
    %2197 = vmatprep.subr.mxu0 %v1448
    %2198 = vmatpush2.msra.mxu0 %v1447
    %2199 = vmatprep.subr.mxu0 %v1440
    %2200 = vmatpush2.msra.mxu0 %v1439
    %2201 = vmatprep.subr.mxu0 %v1432
    %2202 = vmatpush2.msra.mxu0 %v1431
    %2203 = vmatprep.mubr.f32.mxu0 %v1040
    %2204 = vmatmul.mubr.f32.gmra.mxu0 %v1038
    %v2205 = vpop.f32.mrf.mxu0
    %v2206 = vadd.f32 %v2135, %v2205
    %v2207 = vpop.f32.mrf.mxu0
    %v2208 = vadd.f32 %v2137, %v2207
    %2209 = vdwg.mxu0
    %2210 = vmatprep.subr.mxu0 %v1680
    %2211 = vmatpush1.msra.mxu0 %v1679
    %2212 = vmatprep.subr.mxu0 %v1672
    %2213 = vmatpush1.msra.mxu0 %v1671
    %2214 = vmatprep.subr.mxu0 %v1664
    %2215 = vmatpush1.msra.mxu0 %v1663
    %2216 = vmatprep.subr.mxu0 %v1656
    %2217 = vmatpush1.msra.mxu0 %v1655
    %2218 = vmatprep.subr.mxu0 %v1648
    %2219 = vmatpush1.msra.mxu0 %v1647
    %2220 = vmatprep.subr.mxu0 %v1640
    %2221 = vmatpush1.msra.mxu0 %v1639
    %2222 = vmatprep.subr.mxu0 %v1632
    %2223 = vmatpush1.msra.mxu0 %v1631
    %2224 = vmatprep.subr.mxu0 %v1624
    %2225 = vmatpush1.msra.mxu0 %v1623
    %2226 = vmatprep.subr.mxu0 %v1616
    %2227 = vmatpush1.msra.mxu0 %v1615
    %2228 = vmatprep.subr.mxu0 %v1608
    %2229 = vmatpush1.msra.mxu0 %v1607
    %2230 = vmatprep.subr.mxu0 %v1600
    %2231 = vmatpush1.msra.mxu0 %v1599
    %2232 = vmatprep.subr.mxu0 %v1592
    %2233 = vmatpush1.msra.mxu0 %v1591
    %2234 = vmatprep.subr.mxu0 %v1584
    %2235 = vmatpush1.msra.mxu0 %v1583
    %2236 = vmatprep.subr.mxu0 %v1576
    %2237 = vmatpush1.msra.mxu0 %v1575
    %2238 = vmatprep.subr.mxu0 %v1568
    %2239 = vmatpush1.msra.mxu0 %v1567
    %2240 = vmatprep.subr.mxu0 %v1560
    %2241 = vmatpush1.msra.mxu0 %v1559
    %2242 = vmatprep.subr.mxu0 %v1808
    %2243 = vmatpush2.msra.mxu0 %v1807
    %2244 = vmatprep.subr.mxu0 %v1800
    %2245 = vmatpush2.msra.mxu0 %v1799
    %2246 = vmatprep.subr.mxu0 %v1792
    %2247 = vmatpush2.msra.mxu0 %v1791
    %2248 = vmatprep.subr.mxu0 %v1784
    %2249 = vmatpush2.msra.mxu0 %v1783
    %2250 = vmatprep.subr.mxu0 %v1776
    %2251 = vmatpush2.msra.mxu0 %v1775
    %2252 = vmatprep.subr.mxu0 %v1768
    %2253 = vmatpush2.msra.mxu0 %v1767
    %2254 = vmatprep.subr.mxu0 %v1760
    %2255 = vmatpush2.msra.mxu0 %v1759
    %2256 = vmatprep.subr.mxu0 %v1752
    %2257 = vmatpush2.msra.mxu0 %v1751
    %2258 = vmatprep.subr.mxu0 %v1744
    %2259 = vmatpush2.msra.mxu0 %v1743
    %2260 = vmatprep.subr.mxu0 %v1736
    %2261 = vmatpush2.msra.mxu0 %v1735
    %2262 = vmatprep.subr.mxu0 %v1728
    %2263 = vmatpush2.msra.mxu0 %v1727
    %2264 = vmatprep.subr.mxu0 %v1720
    %2265 = vmatpush2.msra.mxu0 %v1719
    %2266 = vmatprep.subr.mxu0 %v1712
    %2267 = vmatpush2.msra.mxu0 %v1711
    %2268 = vmatprep.subr.mxu0 %v1704
    %2269 = vmatpush2.msra.mxu0 %v1703
    %2270 = vmatprep.subr.mxu0 %v1696
    %2271 = vmatpush2.msra.mxu0 %v1695
    %2272 = vmatprep.subr.mxu0 %v1688
    %2273 = vmatpush2.msra.mxu0 %v1687
    %2274 = vmatprep.mubr.f32.mxu0 %v1044
    %2275 = vmatmul.mubr.f32.gmra.mxu0 %v1042
    %v2276 = vpop.f32.mrf.mxu0
    %v2277 = vadd.f32 %v2206, %v2276
    %v2278 = vpop.f32.mrf.mxu0
    %v2279 = vadd.f32 %v2208, %v2278
    %2280 = vdwg.mxu0
    %2281 = vmatprep.subr.mxu0 %v1170
    %2282 = vmatpush1.msra.mxu0 %v1169
    %2283 = vmatprep.subr.mxu0 %v1162
    %2284 = vmatpush1.msra.mxu0 %v1161
    %2285 = vmatprep.subr.mxu0 %v1154
    %2286 = vmatpush1.msra.mxu0 %v1153
    %2287 = vmatprep.subr.mxu0 %v1146
    %2288 = vmatpush1.msra.mxu0 %v1145
    %2289 = vmatprep.subr.mxu0 %v1138
    %2290 = vmatpush1.msra.mxu0 %v1137
    %2291 = vmatprep.subr.mxu0 %v1130
    %2292 = vmatpush1.msra.mxu0 %v1129
    %2293 = vmatprep.subr.mxu0 %v1122
    %2294 = vmatpush1.msra.mxu0 %v1121
    %2295 = vmatprep.subr.mxu0 %v1114
    %2296 = vmatpush1.msra.mxu0 %v1113
    %2297 = vmatprep.subr.mxu0 %v1106
    %2298 = vmatpush1.msra.mxu0 %v1105
    %2299 = vmatprep.subr.mxu0 %v1098
    %2300 = vmatpush1.msra.mxu0 %v1097
    %2301 = vmatprep.subr.mxu0 %v1090
    %2302 = vmatpush1.msra.mxu0 %v1089
    %2303 = vmatprep.subr.mxu0 %v1082
    %2304 = vmatpush1.msra.mxu0 %v1081
    %2305 = vmatprep.subr.mxu0 %v1074
    %2306 = vmatpush1.msra.mxu0 %v1073
    %2307 = vmatprep.subr.mxu0 %v1066
    %2308 = vmatpush1.msra.mxu0 %v1065
    %2309 = vmatprep.subr.mxu0 %v1058
    %2310 = vmatpush1.msra.mxu0 %v1057
    %2311 = vmatprep.subr.mxu0 %v1050
    %2312 = vmatpush1.msra.mxu0 %v1049
    %2313 = vmatprep.subr.mxu0 %v1298
    %2314 = vmatpush2.msra.mxu0 %v1297
    %2315 = vmatprep.subr.mxu0 %v1290
    %2316 = vmatpush2.msra.mxu0 %v1289
    %2317 = vmatprep.subr.mxu0 %v1282
    %2318 = vmatpush2.msra.mxu0 %v1281
    %2319 = vmatprep.subr.mxu0 %v1274
    %2320 = vmatpush2.msra.mxu0 %v1273
    %2321 = vmatprep.subr.mxu0 %v1266
    %2322 = vmatpush2.msra.mxu0 %v1265
    %2323 = vmatprep.subr.mxu0 %v1258
    %2324 = vmatpush2.msra.mxu0 %v1257
    %2325 = vmatprep.subr.mxu0 %v1250
    %2326 = vmatpush2.msra.mxu0 %v1249
    %2327 = vmatprep.subr.mxu0 %v1242
    %2328 = vmatpush2.msra.mxu0 %v1241
    %2329 = vmatprep.subr.mxu0 %v1234
    %2330 = vmatpush2.msra.mxu0 %v1233
    %2331 = vmatprep.subr.mxu0 %v1226
    %2332 = vmatpush2.msra.mxu0 %v1225
    %2333 = vmatprep.subr.mxu0 %v1218
    %2334 = vmatpush2.msra.mxu0 %v1217
    %2335 = vmatprep.subr.mxu0 %v1210
    %2336 = vmatpush2.msra.mxu0 %v1209
    %2337 = vmatprep.subr.mxu0 %v1202
    %2338 = vmatpush2.msra.mxu0 %v1201
    %2339 = vmatprep.subr.mxu0 %v1194
    %2340 = vmatpush2.msra.mxu0 %v1193
    %2341 = vmatprep.subr.mxu0 %v1186
    %2342 = vmatpush2.msra.mxu0 %v1185
    %2343 = vmatprep.subr.mxu0 %v1178
    %2344 = vmatpush2.msra.mxu0 %v1177
    %2345 = vmatprep.mubr.f32.mxu0 %v1036
    %2346 = vmatmul.mubr.f32.gmra.mxu0 %v1034
    %v2347 = vpop.f32.mrf.mxu0
    %v2348 = vadd.f32 %v1834, %v2347
    %v2349 = vpop.f32.mrf.mxu0
    %v2350 = vadd.f32 %v1838, %v2349
    %2351 = vdwg.mxu0
    %2352 = vmatprep.subr.mxu0 %v1426
    %2353 = vmatpush1.msra.mxu0 %v1425
    %2354 = vmatprep.subr.mxu0 %v1418
    %2355 = vmatpush1.msra.mxu0 %v1417
    %2356 = vmatprep.subr.mxu0 %v1410
    %2357 = vmatpush1.msra.mxu0 %v1409
    %2358 = vmatprep.subr.mxu0 %v1402
    %2359 = vmatpush1.msra.mxu0 %v1401
    %2360 = vmatprep.subr.mxu0 %v1394
    %2361 = vmatpush1.msra.mxu0 %v1393
    %2362 = vmatprep.subr.mxu0 %v1386
    %2363 = vmatpush1.msra.mxu0 %v1385
    %2364 = vmatprep.subr.mxu0 %v1378
    %2365 = vmatpush1.msra.mxu0 %v1377
    %2366 = vmatprep.subr.mxu0 %v1370
    %2367 = vmatpush1.msra.mxu0 %v1369
    %2368 = vmatprep.subr.mxu0 %v1362
    %2369 = vmatpush1.msra.mxu0 %v1361
    %2370 = vmatprep.subr.mxu0 %v1354
    %2371 = vmatpush1.msra.mxu0 %v1353
    %2372 = vmatprep.subr.mxu0 %v1346
    %2373 = vmatpush1.msra.mxu0 %v1345
    %2374 = vmatprep.subr.mxu0 %v1338
    %2375 = vmatpush1.msra.mxu0 %v1337
    %2376 = vmatprep.subr.mxu0 %v1330
    %2377 = vmatpush1.msra.mxu0 %v1329
    %2378 = vmatprep.subr.mxu0 %v1322
    %2379 = vmatpush1.msra.mxu0 %v1321
    %2380 = vmatprep.subr.mxu0 %v1314
    %2381 = vmatpush1.msra.mxu0 %v1313
    %2382 = vmatprep.subr.mxu0 %v1306
    %2383 = vmatpush1.msra.mxu0 %v1305
    %2384 = vmatprep.subr.mxu0 %v1554
    %2385 = vmatpush2.msra.mxu0 %v1553
    %2386 = vmatprep.subr.mxu0 %v1546
    %2387 = vmatpush2.msra.mxu0 %v1545
    %2388 = vmatprep.subr.mxu0 %v1538
    %2389 = vmatpush2.msra.mxu0 %v1537
    %2390 = vmatprep.subr.mxu0 %v1530
    %2391 = vmatpush2.msra.mxu0 %v1529
    %2392 = vmatprep.subr.mxu0 %v1522
    %2393 = vmatpush2.msra.mxu0 %v1521
    %2394 = vmatprep.subr.mxu0 %v1514
    %2395 = vmatpush2.msra.mxu0 %v1513
    %2396 = vmatprep.subr.mxu0 %v1506
    %2397 = vmatpush2.msra.mxu0 %v1505
    %2398 = vmatprep.subr.mxu0 %v1498
    %2399 = vmatpush2.msra.mxu0 %v1497
    %2400 = vmatprep.subr.mxu0 %v1490
    %2401 = vmatpush2.msra.mxu0 %v1489
    %2402 = vmatprep.subr.mxu0 %v1482
    %2403 = vmatpush2.msra.mxu0 %v1481
    %2404 = vmatprep.subr.mxu0 %v1474
    %2405 = vmatpush2.msra.mxu0 %v1473
    %2406 = vmatprep.subr.mxu0 %v1466
    %2407 = vmatpush2.msra.mxu0 %v1465
    %2408 = vmatprep.subr.mxu0 %v1458
    %2409 = vmatpush2.msra.mxu0 %v1457
    %2410 = vmatprep.subr.mxu0 %v1450
    %2411 = vmatpush2.msra.mxu0 %v1449
    %2412 = vmatprep.subr.mxu0 %v1442
    %2413 = vmatpush2.msra.mxu0 %v1441
    %2414 = vmatprep.subr.mxu0 %v1434
    %2415 = vmatpush2.msra.mxu0 %v1433
    %2416 = vmatprep.mubr.f32.mxu0 %v1040
    %2417 = vmatmul.mubr.f32.gmra.mxu0 %v1038
    %v2418 = vpop.f32.mrf.mxu0
    %v2419 = vadd.f32 %v2348, %v2418
    %v2420 = vpop.f32.mrf.mxu0
    %v2421 = vadd.f32 %v2350, %v2420
    %2422 = vdwg.mxu0
    %2423 = vmatprep.subr.mxu0 %v1682
    %2424 = vmatpush1.msra.mxu0 %v1681
    %2425 = vmatprep.subr.mxu0 %v1674
    %2426 = vmatpush1.msra.mxu0 %v1673
    %2427 = vmatprep.subr.mxu0 %v1666
    %2428 = vmatpush1.msra.mxu0 %v1665
    %2429 = vmatprep.subr.mxu0 %v1658
    %2430 = vmatpush1.msra.mxu0 %v1657
    %2431 = vmatprep.subr.mxu0 %v1650
    %2432 = vmatpush1.msra.mxu0 %v1649
    %2433 = vmatprep.subr.mxu0 %v1642
    %2434 = vmatpush1.msra.mxu0 %v1641
    %2435 = vmatprep.subr.mxu0 %v1634
    %2436 = vmatpush1.msra.mxu0 %v1633
    %2437 = vmatprep.subr.mxu0 %v1626
    %2438 = vmatpush1.msra.mxu0 %v1625
    %2439 = vmatprep.subr.mxu0 %v1618
    %2440 = vmatpush1.msra.mxu0 %v1617
    %2441 = vmatprep.subr.mxu0 %v1610
    %2442 = vmatpush1.msra.mxu0 %v1609
    %2443 = vmatprep.subr.mxu0 %v1602
    %2444 = vmatpush1.msra.mxu0 %v1601
    %2445 = vmatprep.subr.mxu0 %v1594
    %2446 = vmatpush1.msra.mxu0 %v1593
    %2447 = vmatprep.subr.mxu0 %v1586
    %2448 = vmatpush1.msra.mxu0 %v1585
    %2449 = vmatprep.subr.mxu0 %v1578
    %2450 = vmatpush1.msra.mxu0 %v1577
    %2451 = vmatprep.subr.mxu0 %v1570
    %2452 = vmatpush1.msra.mxu0 %v1569
    %2453 = vmatprep.subr.mxu0 %v1562
    %2454 = vmatpush1.msra.mxu0 %v1561
    %2455 = vmatprep.subr.mxu0 %v1810
    %2456 = vmatpush2.msra.mxu0 %v1809
    %2457 = vmatprep.subr.mxu0 %v1802
    %2458 = vmatpush2.msra.mxu0 %v1801
    %2459 = vmatprep.subr.mxu0 %v1794
    %2460 = vmatpush2.msra.mxu0 %v1793
    %2461 = vmatprep.subr.mxu0 %v1786
    %2462 = vmatpush2.msra.mxu0 %v1785
    %2463 = vmatprep.subr.mxu0 %v1778
    %2464 = vmatpush2.msra.mxu0 %v1777
    %2465 = vmatprep.subr.mxu0 %v1770
    %2466 = vmatpush2.msra.mxu0 %v1769
    %2467 = vmatprep.subr.mxu0 %v1762
    %2468 = vmatpush2.msra.mxu0 %v1761
    %2469 = vmatprep.subr.mxu0 %v1754
    %2470 = vmatpush2.msra.mxu0 %v1753
    %2471 = vmatprep.subr.mxu0 %v1746
    %2472 = vmatpush2.msra.mxu0 %v1745
    %2473 = vmatprep.subr.mxu0 %v1738
    %2474 = vmatpush2.msra.mxu0 %v1737
    %2475 = vmatprep.subr.mxu0 %v1730
    %2476 = vmatpush2.msra.mxu0 %v1729
    %2477 = vmatprep.subr.mxu0 %v1722
    %2478 = vmatpush2.msra.mxu0 %v1721
    %2479 = vmatprep.subr.mxu0 %v1714
    %2480 = vmatpush2.msra.mxu0 %v1713
    %2481 = vmatprep.subr.mxu0 %v1706
    %2482 = vmatpush2.msra.mxu0 %v1705
    %2483 = vmatprep.subr.mxu0 %v1698
    %2484 = vmatpush2.msra.mxu0 %v1697
    %2485 = vmatprep.subr.mxu0 %v1690
    %2486 = vmatpush2.msra.mxu0 %v1689
    %2487 = vmatprep.mubr.f32.mxu0 %v1044
    %2488 = vmatmul.mubr.f32.gmra.mxu0 %v1042
    %v2489 = vpop.f32.mrf.mxu0
    %v2490 = vadd.f32 %v2419, %v2489
    %v2491 = vpop.f32.mrf.mxu0
    %v2492 = vadd.f32 %v2421, %v2491
    %2493 = vdwg.mxu0
    %2494 = vmatprep.subr.mxu0 %v1172
    %2495 = vmatpush1.msra.mxu0 %v1171
    %2496 = vmatprep.subr.mxu0 %v1164
    %2497 = vmatpush1.msra.mxu0 %v1163
    %2498 = vmatprep.subr.mxu0 %v1156
    %2499 = vmatpush1.msra.mxu0 %v1155
    %2500 = vmatprep.subr.mxu0 %v1148
    %2501 = vmatpush1.msra.mxu0 %v1147
    %2502 = vmatprep.subr.mxu0 %v1140
    %2503 = vmatpush1.msra.mxu0 %v1139
    %2504 = vmatprep.subr.mxu0 %v1132
    %2505 = vmatpush1.msra.mxu0 %v1131
    %2506 = vmatprep.subr.mxu0 %v1124
    %2507 = vmatpush1.msra.mxu0 %v1123
    %2508 = vmatprep.subr.mxu0 %v1116
    %2509 = vmatpush1.msra.mxu0 %v1115
    %2510 = vmatprep.subr.mxu0 %v1108
    %2511 = vmatpush1.msra.mxu0 %v1107
    %2512 = vmatprep.subr.mxu0 %v1100
    %2513 = vmatpush1.msra.mxu0 %v1099
    %2514 = vmatprep.subr.mxu0 %v1092
    %2515 = vmatpush1.msra.mxu0 %v1091
    %2516 = vmatprep.subr.mxu0 %v1084
    %2517 = vmatpush1.msra.mxu0 %v1083
    %2518 = vmatprep.subr.mxu0 %v1076
    %2519 = vmatpush1.msra.mxu0 %v1075
    %2520 = vmatprep.subr.mxu0 %v1068
    %2521 = vmatpush1.msra.mxu0 %v1067
    %2522 = vmatprep.subr.mxu0 %v1060
    %2523 = vmatpush1.msra.mxu0 %v1059
    %2524 = vmatprep.subr.mxu0 %v1052
    %2525 = vmatpush1.msra.mxu0 %v1051
    %2526 = vmatprep.subr.mxu0 %v1300
    %2527 = vmatpush2.msra.mxu0 %v1299
    %2528 = vmatprep.subr.mxu0 %v1292
    %2529 = vmatpush2.msra.mxu0 %v1291
    %2530 = vmatprep.subr.mxu0 %v1284
    %2531 = vmatpush2.msra.mxu0 %v1283
    %2532 = vmatprep.subr.mxu0 %v1276
    %2533 = vmatpush2.msra.mxu0 %v1275
    %2534 = vmatprep.subr.mxu0 %v1268
    %2535 = vmatpush2.msra.mxu0 %v1267
    %2536 = vmatprep.subr.mxu0 %v1260
    %2537 = vmatpush2.msra.mxu0 %v1259
    %2538 = vmatprep.subr.mxu0 %v1252
    %2539 = vmatpush2.msra.mxu0 %v1251
    %2540 = vmatprep.subr.mxu0 %v1244
    %2541 = vmatpush2.msra.mxu0 %v1243
    %2542 = vmatprep.subr.mxu0 %v1236
    %2543 = vmatpush2.msra.mxu0 %v1235
    %2544 = vmatprep.subr.mxu0 %v1228
    %2545 = vmatpush2.msra.mxu0 %v1227
    %2546 = vmatprep.subr.mxu0 %v1220
    %2547 = vmatpush2.msra.mxu0 %v1219
    %2548 = vmatprep.subr.mxu0 %v1212
    %2549 = vmatpush2.msra.mxu0 %v1211
    %2550 = vmatprep.subr.mxu0 %v1204
    %2551 = vmatpush2.msra.mxu0 %v1203
    %2552 = vmatprep.subr.mxu0 %v1196
    %2553 = vmatpush2.msra.mxu0 %v1195
    %2554 = vmatprep.subr.mxu0 %v1188
    %2555 = vmatpush2.msra.mxu0 %v1187
    %2556 = vmatprep.subr.mxu0 %v1180
    %2557 = vmatpush2.msra.mxu0 %v1179
    %2558 = vmatprep.mubr.f32.mxu0 %v1036
    %2559 = vmatmul.mubr.f32.gmra.mxu0 %v1034
    %v2560 = vpop.f32.mrf.mxu0
    %v2561 = vadd.f32 %v1842, %v2560
    %v2562 = vpop.f32.mrf.mxu0
    %v2563 = vadd.f32 %v1846, %v2562
    %2564 = vdwg.mxu0
    %2565 = vmatprep.subr.mxu0 %v1428
    %2566 = vmatpush1.msra.mxu0 %v1427
    %2567 = vmatprep.subr.mxu0 %v1420
    %2568 = vmatpush1.msra.mxu0 %v1419
    %2569 = vmatprep.subr.mxu0 %v1412
    %2570 = vmatpush1.msra.mxu0 %v1411
    %2571 = vmatprep.subr.mxu0 %v1404
    %2572 = vmatpush1.msra.mxu0 %v1403
    %2573 = vmatprep.subr.mxu0 %v1396
    %2574 = vmatpush1.msra.mxu0 %v1395
    %2575 = vmatprep.subr.mxu0 %v1388
    %2576 = vmatpush1.msra.mxu0 %v1387
    %2577 = vmatprep.subr.mxu0 %v1380
    %2578 = vmatpush1.msra.mxu0 %v1379
    %2579 = vmatprep.subr.mxu0 %v1372
    %2580 = vmatpush1.msra.mxu0 %v1371
    %2581 = vmatprep.subr.mxu0 %v1364
    %2582 = vmatpush1.msra.mxu0 %v1363
    %2583 = vmatprep.subr.mxu0 %v1356
    %2584 = vmatpush1.msra.mxu0 %v1355
    %2585 = vmatprep.subr.mxu0 %v1348
    %2586 = vmatpush1.msra.mxu0 %v1347
    %2587 = vmatprep.subr.mxu0 %v1340
    %2588 = vmatpush1.msra.mxu0 %v1339
    %2589 = vmatprep.subr.mxu0 %v1332
    %2590 = vmatpush1.msra.mxu0 %v1331
    %2591 = vmatprep.subr.mxu0 %v1324
    %2592 = vmatpush1.msra.mxu0 %v1323
    %2593 = vmatprep.subr.mxu0 %v1316
    %2594 = vmatpush1.msra.mxu0 %v1315
    %2595 = vmatprep.subr.mxu0 %v1308
    %2596 = vmatpush1.msra.mxu0 %v1307
    %2597 = vmatprep.subr.mxu0 %v1556
    %2598 = vmatpush2.msra.mxu0 %v1555
    %2599 = vmatprep.subr.mxu0 %v1548
    %2600 = vmatpush2.msra.mxu0 %v1547
    %2601 = vmatprep.subr.mxu0 %v1540
    %2602 = vmatpush2.msra.mxu0 %v1539
    %2603 = vmatprep.subr.mxu0 %v1532
    %2604 = vmatpush2.msra.mxu0 %v1531
    %2605 = vmatprep.subr.mxu0 %v1524
    %2606 = vmatpush2.msra.mxu0 %v1523
    %2607 = vmatprep.subr.mxu0 %v1516
    %2608 = vmatpush2.msra.mxu0 %v1515
    %2609 = vmatprep.subr.mxu0 %v1508
    %2610 = vmatpush2.msra.mxu0 %v1507
    %2611 = vmatprep.subr.mxu0 %v1500
    %2612 = vmatpush2.msra.mxu0 %v1499
    %2613 = vmatprep.subr.mxu0 %v1492
    %2614 = vmatpush2.msra.mxu0 %v1491
    %2615 = vmatprep.subr.mxu0 %v1484
    %2616 = vmatpush2.msra.mxu0 %v1483
    %2617 = vmatprep.subr.mxu0 %v1476
    %2618 = vmatpush2.msra.mxu0 %v1475
    %2619 = vmatprep.subr.mxu0 %v1468
    %2620 = vmatpush2.msra.mxu0 %v1467
    %2621 = vmatprep.subr.mxu0 %v1460
    %2622 = vmatpush2.msra.mxu0 %v1459
    %2623 = vmatprep.subr.mxu0 %v1452
    %2624 = vmatpush2.msra.mxu0 %v1451
    %2625 = vmatprep.subr.mxu0 %v1444
    %2626 = vmatpush2.msra.mxu0 %v1443
    %2627 = vmatprep.subr.mxu0 %v1436
    %2628 = vmatpush2.msra.mxu0 %v1435
    %2629 = vmatprep.mubr.f32.mxu0 %v1040
    %2630 = vmatmul.mubr.f32.gmra.mxu0 %v1038
    %v2631 = vpop.f32.mrf.mxu0
    %v2632 = vadd.f32 %v2561, %v2631
    %v2633 = vpop.f32.mrf.mxu0
    %v2634 = vadd.f32 %v2563, %v2633
    %2635 = vdwg.mxu0
    %2636 = vmatprep.subr.mxu0 %v1684
    %2637 = vmatpush1.msra.mxu0 %v1683
    %2638 = vmatprep.subr.mxu0 %v1676
    %2639 = vmatpush1.msra.mxu0 %v1675
    %2640 = vmatprep.subr.mxu0 %v1668
    %2641 = vmatpush1.msra.mxu0 %v1667
    %2642 = vmatprep.subr.mxu0 %v1660
    %2643 = vmatpush1.msra.mxu0 %v1659
    %2644 = vmatprep.subr.mxu0 %v1652
    %2645 = vmatpush1.msra.mxu0 %v1651
    %2646 = vmatprep.subr.mxu0 %v1644
    %2647 = vmatpush1.msra.mxu0 %v1643
    %2648 = vmatprep.subr.mxu0 %v1636
    %2649 = vmatpush1.msra.mxu0 %v1635
    %2650 = vmatprep.subr.mxu0 %v1628
    %2651 = vmatpush1.msra.mxu0 %v1627
    %2652 = vmatprep.subr.mxu0 %v1620
    %2653 = vmatpush1.msra.mxu0 %v1619
    %2654 = vmatprep.subr.mxu0 %v1612
    %2655 = vmatpush1.msra.mxu0 %v1611
    %2656 = vmatprep.subr.mxu0 %v1604
    %2657 = vmatpush1.msra.mxu0 %v1603
    %2658 = vmatprep.subr.mxu0 %v1596
    %2659 = vmatpush1.msra.mxu0 %v1595
    %2660 = vmatprep.subr.mxu0 %v1588
    %2661 = vmatpush1.msra.mxu0 %v1587
    %2662 = vmatprep.subr.mxu0 %v1580
    %2663 = vmatpush1.msra.mxu0 %v1579
    %2664 = vmatprep.subr.mxu0 %v1572
    %2665 = vmatpush1.msra.mxu0 %v1571
    %2666 = vmatprep.subr.mxu0 %v1564
    %2667 = vmatpush1.msra.mxu0 %v1563
    %2668 = vmatprep.subr.mxu0 %v1812
    %2669 = vmatpush2.msra.mxu0 %v1811
    %2670 = vmatprep.subr.mxu0 %v1804
    %2671 = vmatpush2.msra.mxu0 %v1803
    %2672 = vmatprep.subr.mxu0 %v1796
    %2673 = vmatpush2.msra.mxu0 %v1795
    %2674 = vmatprep.subr.mxu0 %v1788
    %2675 = vmatpush2.msra.mxu0 %v1787
    %2676 = vmatprep.subr.mxu0 %v1780
    %2677 = vmatpush2.msra.mxu0 %v1779
    %2678 = vmatprep.subr.mxu0 %v1772
    %2679 = vmatpush2.msra.mxu0 %v1771
    %2680 = vmatprep.subr.mxu0 %v1764
    %2681 = vmatpush2.msra.mxu0 %v1763
    %2682 = vmatprep.subr.mxu0 %v1756
    %2683 = vmatpush2.msra.mxu0 %v1755
    %2684 = vmatprep.subr.mxu0 %v1748
    %2685 = vmatpush2.msra.mxu0 %v1747
    %2686 = vmatprep.subr.mxu0 %v1740
    %2687 = vmatpush2.msra.mxu0 %v1739
    %2688 = vmatprep.subr.mxu0 %v1732
    %2689 = vmatpush2.msra.mxu0 %v1731
    %2690 = vmatprep.subr.mxu0 %v1724
    %2691 = vmatpush2.msra.mxu0 %v1723
    %2692 = vmatprep.subr.mxu0 %v1716
    %2693 = vmatpush2.msra.mxu0 %v1715
    %2694 = vmatprep.subr.mxu0 %v1708
    %2695 = vmatpush2.msra.mxu0 %v1707
    %2696 = vmatprep.subr.mxu0 %v1700
    %2697 = vmatpush2.msra.mxu0 %v1699
    %2698 = vmatprep.subr.mxu0 %v1692
    %2699 = vmatpush2.msra.mxu0 %v1691
    %2700 = vmatprep.mubr.f32.mxu0 %v1044
    %2701 = vmatmul.mubr.f32.gmra.mxu0 %v1042
    %v2702 = vpop.f32.mrf.mxu0
    %v2703 = vadd.f32 %v2632, %v2702
    %v2704 = vpop.f32.mrf.mxu0
    %v2705 = vadd.f32 %v2634, %v2704
    %2706 = vdwg.mxu0
    %v2707 = vld [vmem:[%s7] sm:$0xff]
    %v2708 = vld [vmem:[%s7 + $0x8] sm:$0xff]
    %v2709 = vld [vmem:[%s7 + $0x10] sm:$0xff]
    %v2710 = vld [vmem:[%s7 + $0x18] sm:$0xff]
    %v2711 = vld [vmem:[%s7 + $0x20] sm:$0xff]
    %v2712 = vld [vmem:[%s7 + $0x28] sm:$0xff]
    %v2713 = vld [vmem:[%s7 + $0x30] sm:$0xff]
    %v2714 = vld [vmem:[%s7 + $0x38] sm:$0xff]
    %v2715 = vld [vmem:[%s7 + $0x40] sm:$0xff]
    %v2716 = vld [vmem:[%s7 + $0x48] sm:$0xff]
    %v2717 = vld [vmem:[%s7 + $0x50] sm:$0xff]
    %v2718 = vld [vmem:[%s7 + $0x58] sm:$0xff]
    %v2719 = vld [vmem:[%s7 + $0x60] sm:$0xff]
    %v2720 = vld [vmem:[%s7 + $0x68] sm:$0xff]
    %v2721 = vld [vmem:[%s7 + $0x70] sm:$0xff]
    %v2722 = vld [vmem:[%s7 + $0x78] sm:$0xff]
    %v2723 = vld [vmem:[%s7 + $0x80] sm:$0xff]
    %v2724 = vld [vmem:[%s7 + $0x88] sm:$0xff]
    %v2725 = vld [vmem:[%s7 + $0x90] sm:$0xff]
    %v2726 = vld [vmem:[%s7 + $0x98] sm:$0xff]
    %v2727 = vld [vmem:[%s7 + $0xa0] sm:$0xff]
    %v2728 = vld [vmem:[%s7 + $0xa8] sm:$0xff]
    %v2729 = vld [vmem:[%s7 + $0xb0] sm:$0xff]
    %v2730 = vld [vmem:[%s7 + $0xb8] sm:$0xff]
    %v2731 = vld [vmem:[%s7 + $0xc0] sm:$0xff]
    %v2732 = vld [vmem:[%s7 + $0xc8] sm:$0xff]
    %v2733 = vld [vmem:[%s7 + $0xd0] sm:$0xff]
    %v2734 = vld [vmem:[%s7 + $0xd8] sm:$0xff]
    %v2735 = vld [vmem:[%s7 + $0xe0] sm:$0xff]
    %v2736 = vld [vmem:[%s7 + $0xe8] sm:$0xff]
    %v2737 = vld [vmem:[%s7 + $0xf0] sm:$0xff]
    %v2738 = vld [vmem:[%s7 + $0xf8] sm:$0xff]
    %v2739 = vld [vmem:[%s7 + $0x100] sm:$0xff]
    %v2740 = vld [vmem:[%s7 + $0x108] sm:$0xff]
    %v2741 = vld [vmem:[%s7 + $0x110] sm:$0xff]
    %v2742 = vld [vmem:[%s7 + $0x118] sm:$0xff]
    %v2743 = vld [vmem:[%s7 + $0x120] sm:$0xff]
    %v2744 = vld [vmem:[%s7 + $0x128] sm:$0xff]
    %v2745 = vld [vmem:[%s7 + $0x130] sm:$0xff]
    %v2746 = vld [vmem:[%s7 + $0x138] sm:$0xff]
    %v2747 = vld [vmem:[%s7 + $0x140] sm:$0xff]
    %v2748 = vld [vmem:[%s7 + $0x148] sm:$0xff]
    %v2749 = vld [vmem:[%s7 + $0x150] sm:$0xff]
    %v2750 = vld [vmem:[%s7 + $0x158] sm:$0xff]
    %v2751 = vld [vmem:[%s7 + $0x160] sm:$0xff]
    %v2752 = vld [vmem:[%s7 + $0x168] sm:$0xff]
    %v2753 = vld [vmem:[%s7 + $0x170] sm:$0xff]
    %v2754 = vld [vmem:[%s7 + $0x178] sm:$0xff]
    %v2755 = vld [vmem:[%s7 + $0x180] sm:$0x3f]
    %v2756 = vld [vmem:[%s7 + $0x188] sm:$0x3f]
    %v2757 = vld [vmem:[%s7 + $0x190] sm:$0x3f]
    %v2758 = vld [vmem:[%s7 + $0x198] sm:$0x3f]
    %v2759 = vld [vmem:[%s7 + $0x1a0] sm:$0x3f]
    %v2760 = vld [vmem:[%s7 + $0x1a8] sm:$0x3f]
    %v2761 = vld [vmem:[%s7 + $0x1b0] sm:$0x3f]
    %v2762 = vld [vmem:[%s7 + $0x1b8] sm:$0x3f]
    %v2764 = vsel %vm94, %v2755, 0
    %v2767 = vsel %vm94, %v2756, 0
    %v2770 = vsel %vm94, %v2757, 0
    %v2773 = vsel %vm94, %v2758, 0
    %v2776 = vsel %vm94, %v2759, 0
    %v2779 = vsel %vm94, %v2760, 0
    %v2782 = vsel %vm94, %v2761, 0
    %v2785 = vsel %vm94, %v2762, 0
    %2787 = vmatprep.subr.mxu0 0.0
    %2788 = vmatpush1.msra.mxu0 0.0
    %2789 = vmatprep.subr.mxu0 0.0
    %2790 = vmatpush1.msra.mxu0 0.0
    %2791 = vmatprep.subr.mxu0 0.0
    %2792 = vmatpush1.msra.mxu0 0.0
    %2793 = vmatprep.subr.mxu0 0.0
    %2794 = vmatpush1.msra.mxu0 0.0
    %2795 = vmatprep.subr.mxu0 0.0
    %2796 = vmatpush1.msra.mxu0 0.0
    %2797 = vmatprep.subr.mxu0 0.0
    %2798 = vmatpush1.msra.mxu0 0.0
    %2799 = vmatprep.subr.mxu0 0.0
    %2800 = vmatpush1.msra.mxu0 0.0
    %2801 = vmatprep.subr.mxu0 0.0
    %2802 = vmatpush1.msra.mxu0 0.0
    %2803 = vmatprep.subr.mxu0 0.0
    %2804 = vmatpush1.msra.mxu0 0.0
    %2805 = vmatprep.subr.mxu0 %v2767
    %2806 = vmatpush1.msra.mxu0 %v2764
    %2807 = vmatprep.subr.mxu0 %v2748
    %2808 = vmatpush1.msra.mxu0 %v2747
    %2809 = vmatprep.subr.mxu0 %v2740
    %2810 = vmatpush1.msra.mxu0 %v2739
    %2811 = vmatprep.subr.mxu0 %v2732
    %2812 = vmatpush1.msra.mxu0 %v2731
    %2813 = vmatprep.subr.mxu0 %v2724
    %2814 = vmatpush1.msra.mxu0 %v2723
    %2815 = vmatprep.subr.mxu0 %v2716
    %2816 = vmatpush1.msra.mxu0 %v2715
    %2817 = vmatprep.subr.mxu0 %v2708
    %2818 = vmatpush1.msra.mxu0 %v2707
    %2819 = vmatprep.subr.mxu0 0.0
    %2820 = vmatpush2.msra.mxu0 0.0
    %2821 = vmatprep.subr.mxu0 0.0
    %2822 = vmatpush2.msra.mxu0 0.0
    %2823 = vmatprep.subr.mxu0 0.0
    %2824 = vmatpush2.msra.mxu0 0.0
    %2825 = vmatprep.subr.mxu0 0.0
    %2826 = vmatpush2.msra.mxu0 0.0
    %2827 = vmatprep.subr.mxu0 0.0
    %2828 = vmatpush2.msra.mxu0 0.0
    %2829 = vmatprep.subr.mxu0 0.0
    %2830 = vmatpush2.msra.mxu0 0.0
    %2831 = vmatprep.subr.mxu0 0.0
    %2832 = vmatpush2.msra.mxu0 0.0
    %2833 = vmatprep.subr.mxu0 0.0
    %2834 = vmatpush2.msra.mxu0 0.0
    %2835 = vmatprep.subr.mxu0 0.0
    %2836 = vmatpush2.msra.mxu0 0.0
    %2837 = vmatprep.subr.mxu0 0.0
    %2838 = vmatpush2.msra.mxu0 0.0
    %2839 = vmatprep.subr.mxu0 0.0
    %2840 = vmatpush2.msra.mxu0 0.0
    %2841 = vmatprep.subr.mxu0 0.0
    %2842 = vmatpush2.msra.mxu0 0.0
    %2843 = vmatprep.subr.mxu0 0.0
    %2844 = vmatpush2.msra.mxu0 0.0
    %2845 = vmatprep.subr.mxu0 0.0
    %2846 = vmatpush2.msra.mxu0 0.0
    %2847 = vmatprep.subr.mxu0 0.0
    %2848 = vmatpush2.msra.mxu0 0.0
    %2849 = vmatprep.subr.mxu0 0.0
    %2850 = vmatpush2.msra.mxu0 0.0
    %2851 = vmatprep.mubr.f32.mxu0 0.0
    %2852 = vmatmul.mubr.f32.gmra.mxu0 %v92
    %v2853 = vpop.f32.mrf.mxu0
    %v2854 = vadd.f32 0.0, %v2853
    %v2855 = vpop.f32.mrf.mxu0
    %v2856 = vadd.f32 0.0, %v2855
    %2857 = vdwg.mxu0
    %2858 = vmatprep.subr.mxu0 0.0
    %2859 = vmatpush1.msra.mxu0 0.0
    %2860 = vmatprep.subr.mxu0 0.0
    %2861 = vmatpush1.msra.mxu0 0.0
    %2862 = vmatprep.subr.mxu0 0.0
    %2863 = vmatpush1.msra.mxu0 0.0
    %2864 = vmatprep.subr.mxu0 0.0
    %2865 = vmatpush1.msra.mxu0 0.0
    %2866 = vmatprep.subr.mxu0 0.0
    %2867 = vmatpush1.msra.mxu0 0.0
    %2868 = vmatprep.subr.mxu0 0.0
    %2869 = vmatpush1.msra.mxu0 0.0
    %2870 = vmatprep.subr.mxu0 0.0
    %2871 = vmatpush1.msra.mxu0 0.0
    %2872 = vmatprep.subr.mxu0 0.0
    %2873 = vmatpush1.msra.mxu0 0.0
    %2874 = vmatprep.subr.mxu0 0.0
    %2875 = vmatpush1.msra.mxu0 0.0
    %2876 = vmatprep.subr.mxu0 %v2773
    %2877 = vmatpush1.msra.mxu0 %v2770
    %2878 = vmatprep.subr.mxu0 %v2750
    %2879 = vmatpush1.msra.mxu0 %v2749
    %2880 = vmatprep.subr.mxu0 %v2742
    %2881 = vmatpush1.msra.mxu0 %v2741
    %2882 = vmatprep.subr.mxu0 %v2734
    %2883 = vmatpush1.msra.mxu0 %v2733
    %2884 = vmatprep.subr.mxu0 %v2726
    %2885 = vmatpush1.msra.mxu0 %v2725
    %2886 = vmatprep.subr.mxu0 %v2718
    %2887 = vmatpush1.msra.mxu0 %v2717
    %2888 = vmatprep.subr.mxu0 %v2710
    %2889 = vmatpush1.msra.mxu0 %v2709
    %2890 = vmatprep.subr.mxu0 0.0
    %2891 = vmatpush2.msra.mxu0 0.0
    %2892 = vmatprep.subr.mxu0 0.0
    %2893 = vmatpush2.msra.mxu0 0.0
    %2894 = vmatprep.subr.mxu0 0.0
    %2895 = vmatpush2.msra.mxu0 0.0
    %2896 = vmatprep.subr.mxu0 0.0
    %2897 = vmatpush2.msra.mxu0 0.0
    %2898 = vmatprep.subr.mxu0 0.0
    %2899 = vmatpush2.msra.mxu0 0.0
    %2900 = vmatprep.subr.mxu0 0.0
    %2901 = vmatpush2.msra.mxu0 0.0
    %2902 = vmatprep.subr.mxu0 0.0
    %2903 = vmatpush2.msra.mxu0 0.0
    %2904 = vmatprep.subr.mxu0 0.0
    %2905 = vmatpush2.msra.mxu0 0.0
    %2906 = vmatprep.subr.mxu0 0.0
    %2907 = vmatpush2.msra.mxu0 0.0
    %2908 = vmatprep.subr.mxu0 0.0
    %2909 = vmatpush2.msra.mxu0 0.0
    %2910 = vmatprep.subr.mxu0 0.0
    %2911 = vmatpush2.msra.mxu0 0.0
    %2912 = vmatprep.subr.mxu0 0.0
    %2913 = vmatpush2.msra.mxu0 0.0
    %2914 = vmatprep.subr.mxu0 0.0
    %2915 = vmatpush2.msra.mxu0 0.0
    %2916 = vmatprep.subr.mxu0 0.0
    %2917 = vmatpush2.msra.mxu0 0.0
    %2918 = vmatprep.subr.mxu0 0.0
    %2919 = vmatpush2.msra.mxu0 0.0
    %2920 = vmatprep.subr.mxu0 0.0
    %2921 = vmatpush2.msra.mxu0 0.0
    %2922 = vmatprep.mubr.f32.mxu0 0.0
    %2923 = vmatmul.mubr.f32.gmra.mxu0 %v92
    %v2924 = vpop.f32.mrf.mxu0
    %v2925 = vadd.f32 0.0, %v2924
    %v2926 = vpop.f32.mrf.mxu0
    %v2927 = vadd.f32 0.0, %v2926
    %2928 = vdwg.mxu0
    %2929 = vmatprep.subr.mxu0 0.0
    %2930 = vmatpush1.msra.mxu0 0.0
    %2931 = vmatprep.subr.mxu0 0.0
    %2932 = vmatpush1.msra.mxu0 0.0
    %2933 = vmatprep.subr.mxu0 0.0
    %2934 = vmatpush1.msra.mxu0 0.0
    %2935 = vmatprep.subr.mxu0 0.0
    %2936 = vmatpush1.msra.mxu0 0.0
    %2937 = vmatprep.subr.mxu0 0.0
    %2938 = vmatpush1.msra.mxu0 0.0
    %2939 = vmatprep.subr.mxu0 0.0
    %2940 = vmatpush1.msra.mxu0 0.0
    %2941 = vmatprep.subr.mxu0 0.0
    %2942 = vmatpush1.msra.mxu0 0.0
    %2943 = vmatprep.subr.mxu0 0.0
    %2944 = vmatpush1.msra.mxu0 0.0
    %2945 = vmatprep.subr.mxu0 0.0
    %2946 = vmatpush1.msra.mxu0 0.0
    %2947 = vmatprep.subr.mxu0 %v2779
    %2948 = vmatpush1.msra.mxu0 %v2776
    %2949 = vmatprep.subr.mxu0 %v2752
    %2950 = vmatpush1.msra.mxu0 %v2751
    %2951 = vmatprep.subr.mxu0 %v2744
    %2952 = vmatpush1.msra.mxu0 %v2743
    %2953 = vmatprep.subr.mxu0 %v2736
    %2954 = vmatpush1.msra.mxu0 %v2735
    %2955 = vmatprep.subr.mxu0 %v2728
    %2956 = vmatpush1.msra.mxu0 %v2727
    %2957 = vmatprep.subr.mxu0 %v2720
    %2958 = vmatpush1.msra.mxu0 %v2719
    %2959 = vmatprep.subr.mxu0 %v2712
    %2960 = vmatpush1.msra.mxu0 %v2711
    %2961 = vmatprep.subr.mxu0 0.0
    %2962 = vmatpush2.msra.mxu0 0.0
    %2963 = vmatprep.subr.mxu0 0.0
    %2964 = vmatpush2.msra.mxu0 0.0
    %2965 = vmatprep.subr.mxu0 0.0
    %2966 = vmatpush2.msra.mxu0 0.0
    %2967 = vmatprep.subr.mxu0 0.0
    %2968 = vmatpush2.msra.mxu0 0.0
    %2969 = vmatprep.subr.mxu0 0.0
    %2970 = vmatpush2.msra.mxu0 0.0
    %2971 = vmatprep.subr.mxu0 0.0
    %2972 = vmatpush2.msra.mxu0 0.0
    %2973 = vmatprep.subr.mxu0 0.0
    %2974 = vmatpush2.msra.mxu0 0.0
    %2975 = vmatprep.subr.mxu0 0.0
    %2976 = vmatpush2.msra.mxu0 0.0
    %2977 = vmatprep.subr.mxu0 0.0
    %2978 = vmatpush2.msra.mxu0 0.0
    %2979 = vmatprep.subr.mxu0 0.0
    %2980 = vmatpush2.msra.mxu0 0.0
    %2981 = vmatprep.subr.mxu0 0.0
    %2982 = vmatpush2.msra.mxu0 0.0
    %2983 = vmatprep.subr.mxu0 0.0
    %2984 = vmatpush2.msra.mxu0 0.0
    %2985 = vmatprep.subr.mxu0 0.0
    %2986 = vmatpush2.msra.mxu0 0.0
    %2987 = vmatprep.subr.mxu0 0.0
    %2988 = vmatpush2.msra.mxu0 0.0
    %2989 = vmatprep.subr.mxu0 0.0
    %2990 = vmatpush2.msra.mxu0 0.0
    %2991 = vmatprep.subr.mxu0 0.0
    %2992 = vmatpush2.msra.mxu0 0.0
    %2993 = vmatprep.mubr.f32.mxu0 0.0
    %2994 = vmatmul.mubr.f32.gmra.mxu0 %v92
    %v2995 = vpop.f32.mrf.mxu0
    %v2996 = vadd.f32 0.0, %v2995
    %v2997 = vpop.f32.mrf.mxu0
    %v2998 = vadd.f32 0.0, %v2997
    %2999 = vdwg.mxu0
    %3000 = vmatprep.subr.mxu0 0.0
    %3001 = vmatpush1.msra.mxu0 0.0
    %3002 = vmatprep.subr.mxu0 0.0
    %3003 = vmatpush1.msra.mxu0 0.0
    %3004 = vmatprep.subr.mxu0 0.0
    %3005 = vmatpush1.msra.mxu0 0.0
    %3006 = vmatprep.subr.mxu0 0.0
    %3007 = vmatpush1.msra.mxu0 0.0
    %3008 = vmatprep.subr.mxu0 0.0
    %3009 = vmatpush1.msra.mxu0 0.0
    %3010 = vmatprep.subr.mxu0 0.0
    %3011 = vmatpush1.msra.mxu0 0.0
    %3012 = vmatprep.subr.mxu0 0.0
    %3013 = vmatpush1.msra.mxu0 0.0
    %3014 = vmatprep.subr.mxu0 0.0
    %3015 = vmatpush1.msra.mxu0 0.0
    %3016 = vmatprep.subr.mxu0 0.0
    %3017 = vmatpush1.msra.mxu0 0.0
    %3018 = vmatprep.subr.mxu0 %v2785
    %3019 = vmatpush1.msra.mxu0 %v2782
    %3020 = vmatprep.subr.mxu0 %v2754
    %3021 = vmatpush1.msra.mxu0 %v2753
    %3022 = vmatprep.subr.mxu0 %v2746
    %3023 = vmatpush1.msra.mxu0 %v2745
    %3024 = vmatprep.subr.mxu0 %v2738
    %3025 = vmatpush1.msra.mxu0 %v2737
    %3026 = vmatprep.subr.mxu0 %v2730
    %3027 = vmatpush1.msra.mxu0 %v2729
    %3028 = vmatprep.subr.mxu0 %v2722
    %3029 = vmatpush1.msra.mxu0 %v2721
    %3030 = vmatprep.subr.mxu0 %v2714
    %3031 = vmatpush1.msra.mxu0 %v2713
    %3032 = vmatprep.subr.mxu0 0.0
    %3033 = vmatpush2.msra.mxu0 0.0
    %3034 = vmatprep.subr.mxu0 0.0
    %3035 = vmatpush2.msra.mxu0 0.0
    %3036 = vmatprep.subr.mxu0 0.0
    %3037 = vmatpush2.msra.mxu0 0.0
    %3038 = vmatprep.subr.mxu0 0.0
    %3039 = vmatpush2.msra.mxu0 0.0
    %3040 = vmatprep.subr.mxu0 0.0
    %3041 = vmatpush2.msra.mxu0 0.0
    %3042 = vmatprep.subr.mxu0 0.0
    %3043 = vmatpush2.msra.mxu0 0.0
    %3044 = vmatprep.subr.mxu0 0.0
    %3045 = vmatpush2.msra.mxu0 0.0
    %3046 = vmatprep.subr.mxu0 0.0
    %3047 = vmatpush2.msra.mxu0 0.0
    %3048 = vmatprep.subr.mxu0 0.0
    %3049 = vmatpush2.msra.mxu0 0.0
    %3050 = vmatprep.subr.mxu0 0.0
    %3051 = vmatpush2.msra.mxu0 0.0
    %3052 = vmatprep.subr.mxu0 0.0
    %3053 = vmatpush2.msra.mxu0 0.0
    %3054 = vmatprep.subr.mxu0 0.0
    %3055 = vmatpush2.msra.mxu0 0.0
    %3056 = vmatprep.subr.mxu0 0.0
    %3057 = vmatpush2.msra.mxu0 0.0
    %3058 = vmatprep.subr.mxu0 0.0
    %3059 = vmatpush2.msra.mxu0 0.0
    %3060 = vmatprep.subr.mxu0 0.0
    %3061 = vmatpush2.msra.mxu0 0.0
    %3062 = vmatprep.subr.mxu0 0.0
    %3063 = vmatpush2.msra.mxu0 0.0
    %3064 = vmatprep.mubr.f32.mxu0 0.0
    %3065 = vmatmul.mubr.f32.gmra.mxu0 %v92
    %v3066 = vpop.f32.mrf.mxu0
    %v3067 = vadd.f32 0.0, %v3066
    %v3068 = vpop.f32.mrf.mxu0
    %v3069 = vadd.f32 0.0, %v3068
    %3070 = vdwg.mxu0
    %v3071 = vmul.f32 %v2854, %v2064
    %v3072 = vmul.f32 %v2856, %v2066
    %v3073 = vmul.f32 %v2925, %v2277
    %v3074 = vmul.f32 %v2927, %v2279
    %v3075 = vmul.f32 %v2996, %v2490
    %v3076 = vmul.f32 %v2998, %v2492
    %v3077 = vmul.f32 %v3067, %v2703
    %v3078 = vmul.f32 %v3069, %v2705
    %v3079 = vld [vmem:[%s8] sm:$0xff]
    %v3080 = vld [vmem:[%s8 + $0x8] sm:$0xff]
    %v3081 = vld [vmem:[%s8 + $0x10] sm:$0xff]
    %v3082 = vld [vmem:[%s8 + $0x18] sm:$0xff]
    %v3083 = vld [vmem:[%s8 + $0x20] sm:$0xff]
    %v3084 = vld [vmem:[%s8 + $0x28] sm:$0xff]
    %v3085 = vld [vmem:[%s8 + $0x30] sm:$0xff]
    %v3086 = vld [vmem:[%s8 + $0x38] sm:$0xff]
    %v3087 = vld [vmem:[%s8 + $0x40] sm:$0xff]
    %v3088 = vld [vmem:[%s8 + $0x48] sm:$0xff]
    %v3089 = vld [vmem:[%s8 + $0x50] sm:$0xff]
    %v3090 = vld [vmem:[%s8 + $0x58] sm:$0xff]
    %v3091 = vld [vmem:[%s8 + $0x60] sm:$0xff]
    %v3092 = vld [vmem:[%s8 + $0x68] sm:$0xff]
    %v3093 = vld [vmem:[%s8 + $0x70] sm:$0xff]
    %v3094 = vld [vmem:[%s8 + $0x78] sm:$0xff]
    %v3095 = vld [vmem:[%s8 + $0x80] sm:$0xff]
    %v3096 = vld [vmem:[%s8 + $0x88] sm:$0xff]
    %v3097 = vld [vmem:[%s8 + $0x90] sm:$0xff]
    %v3098 = vld [vmem:[%s8 + $0x98] sm:$0xff]
    %v3099 = vld [vmem:[%s8 + $0xa0] sm:$0xff]
    %v3100 = vld [vmem:[%s8 + $0xa8] sm:$0xff]
    %v3101 = vld [vmem:[%s8 + $0xb0] sm:$0xff]
    %v3102 = vld [vmem:[%s8 + $0xb8] sm:$0xff]
    %v3103 = vld [vmem:[%s8 + $0xc0] sm:$0xff]
    %v3104 = vld [vmem:[%s8 + $0xc8] sm:$0xff]
    %v3105 = vld [vmem:[%s8 + $0xd0] sm:$0xff]
    %v3106 = vld [vmem:[%s8 + $0xd8] sm:$0xff]
    %v3107 = vld [vmem:[%s8 + $0xe0] sm:$0xff]
    %v3108 = vld [vmem:[%s8 + $0xe8] sm:$0xff]
    %v3109 = vld [vmem:[%s8 + $0xf0] sm:$0xff]
    %v3110 = vld [vmem:[%s8 + $0xf8] sm:$0xff]
    %v3111 = vld [vmem:[%s8 + $0x100] sm:$0xff]
    %v3112 = vld [vmem:[%s8 + $0x108] sm:$0xff]
    %v3113 = vld [vmem:[%s8 + $0x110] sm:$0xff]
    %v3114 = vld [vmem:[%s8 + $0x118] sm:$0xff]
    %v3115 = vld [vmem:[%s8 + $0x120] sm:$0xff]
    %v3116 = vld [vmem:[%s8 + $0x128] sm:$0xff]
    %v3117 = vld [vmem:[%s8 + $0x130] sm:$0xff]
    %v3118 = vld [vmem:[%s8 + $0x138] sm:$0xff]
    %v3119 = vld [vmem:[%s8 + $0x140] sm:$0xff]
    %v3120 = vld [vmem:[%s8 + $0x148] sm:$0xff]
    %v3121 = vld [vmem:[%s8 + $0x150] sm:$0xff]
    %v3122 = vld [vmem:[%s8 + $0x158] sm:$0xff]
    %v3123 = vld [vmem:[%s8 + $0x160] sm:$0xff]
    %v3124 = vld [vmem:[%s8 + $0x168] sm:$0xff]
    %v3125 = vld [vmem:[%s8 + $0x170] sm:$0xff]
    %v3126 = vld [vmem:[%s8 + $0x178] sm:$0xff]
    %v3127 = vld [vmem:[%s8 + $0x180] sm:$0xff]
    %v3128 = vld [vmem:[%s8 + $0x188] sm:$0xff]
    %v3129 = vld [vmem:[%s8 + $0x190] sm:$0xff]
    %v3130 = vld [vmem:[%s8 + $0x198] sm:$0xff]
    %v3131 = vld [vmem:[%s8 + $0x1a0] sm:$0xff]
    %v3132 = vld [vmem:[%s8 + $0x1a8] sm:$0xff]
    %v3133 = vld [vmem:[%s8 + $0x1b0] sm:$0xff]
    %v3134 = vld [vmem:[%s8 + $0x1b8] sm:$0xff]
    %v3135 = vld [vmem:[%s8 + $0x1c0] sm:$0xff]
    %v3136 = vld [vmem:[%s8 + $0x1c8] sm:$0xff]
    %v3137 = vld [vmem:[%s8 + $0x1d0] sm:$0xff]
    %v3138 = vld [vmem:[%s8 + $0x1d8] sm:$0xff]
    %v3139 = vld [vmem:[%s8 + $0x1e0] sm:$0xff]
    %v3140 = vld [vmem:[%s8 + $0x1e8] sm:$0xff]
    %v3141 = vld [vmem:[%s8 + $0x1f0] sm:$0xff]
    %v3142 = vld [vmem:[%s8 + $0x1f8] sm:$0xff]
    %v3143 = vld [vmem:[%s8 + $0x200] sm:$0xff]
    %v3144 = vld [vmem:[%s8 + $0x208] sm:$0xff]
    %v3145 = vld [vmem:[%s8 + $0x210] sm:$0xff]
    %v3146 = vld [vmem:[%s8 + $0x218] sm:$0xff]
    %v3147 = vld [vmem:[%s8 + $0x220] sm:$0xff]
    %v3148 = vld [vmem:[%s8 + $0x228] sm:$0xff]
    %v3149 = vld [vmem:[%s8 + $0x230] sm:$0xff]
    %v3150 = vld [vmem:[%s8 + $0x238] sm:$0xff]
    %v3151 = vld [vmem:[%s8 + $0x240] sm:$0xff]
    %v3152 = vld [vmem:[%s8 + $0x248] sm:$0xff]
    %v3153 = vld [vmem:[%s8 + $0x250] sm:$0xff]
    %v3154 = vld [vmem:[%s8 + $0x258] sm:$0xff]
    %v3155 = vld [vmem:[%s8 + $0x260] sm:$0xff]
    %v3156 = vld [vmem:[%s8 + $0x268] sm:$0xff]
    %v3157 = vld [vmem:[%s8 + $0x270] sm:$0xff]
    %v3158 = vld [vmem:[%s8 + $0x278] sm:$0xff]
    %v3159 = vld [vmem:[%s8 + $0x280] sm:$0xff]
    %v3160 = vld [vmem:[%s8 + $0x288] sm:$0xff]
    %v3161 = vld [vmem:[%s8 + $0x290] sm:$0xff]
    %v3162 = vld [vmem:[%s8 + $0x298] sm:$0xff]
    %v3163 = vld [vmem:[%s8 + $0x2a0] sm:$0xff]
    %v3164 = vld [vmem:[%s8 + $0x2a8] sm:$0xff]
    %v3165 = vld [vmem:[%s8 + $0x2b0] sm:$0xff]
    %v3166 = vld [vmem:[%s8 + $0x2b8] sm:$0xff]
    %v3167 = vld [vmem:[%s8 + $0x2c0] sm:$0xff]
    %v3168 = vld [vmem:[%s8 + $0x2c8] sm:$0xff]
    %v3169 = vld [vmem:[%s8 + $0x2d0] sm:$0xff]
    %v3170 = vld [vmem:[%s8 + $0x2d8] sm:$0xff]
    %v3171 = vld [vmem:[%s8 + $0x2e0] sm:$0xff]
    %v3172 = vld [vmem:[%s8 + $0x2e8] sm:$0xff]
    %v3173 = vld [vmem:[%s8 + $0x2f0] sm:$0xff]
    %v3174 = vld [vmem:[%s8 + $0x2f8] sm:$0xff]
    %v3175 = vld [vmem:[%s8 + $0x300] sm:$0xff]
    %v3176 = vld [vmem:[%s8 + $0x308] sm:$0xff]
    %v3177 = vld [vmem:[%s8 + $0x310] sm:$0xff]
    %v3178 = vld [vmem:[%s8 + $0x318] sm:$0xff]
    %v3179 = vld [vmem:[%s8 + $0x320] sm:$0xff]
    %v3180 = vld [vmem:[%s8 + $0x328] sm:$0xff]
    %v3181 = vld [vmem:[%s8 + $0x330] sm:$0xff]
    %v3182 = vld [vmem:[%s8 + $0x338] sm:$0xff]
    %v3183 = vld [vmem:[%s8 + $0x340] sm:$0xff]
    %v3184 = vld [vmem:[%s8 + $0x348] sm:$0xff]
    %v3185 = vld [vmem:[%s8 + $0x350] sm:$0xff]
    %v3186 = vld [vmem:[%s8 + $0x358] sm:$0xff]
    %v3187 = vld [vmem:[%s8 + $0x360] sm:$0xff]
    %v3188 = vld [vmem:[%s8 + $0x368] sm:$0xff]
    %v3189 = vld [vmem:[%s8 + $0x370] sm:$0xff]
    %v3190 = vld [vmem:[%s8 + $0x378] sm:$0xff]
    %v3191 = vld [vmem:[%s8 + $0x380] sm:$0xff]
    %v3192 = vld [vmem:[%s8 + $0x388] sm:$0xff]
    %v3193 = vld [vmem:[%s8 + $0x390] sm:$0xff]
    %v3194 = vld [vmem:[%s8 + $0x398] sm:$0xff]
    %v3195 = vld [vmem:[%s8 + $0x3a0] sm:$0xff]
    %v3196 = vld [vmem:[%s8 + $0x3a8] sm:$0xff]
    %v3197 = vld [vmem:[%s8 + $0x3b0] sm:$0xff]
    %v3198 = vld [vmem:[%s8 + $0x3b8] sm:$0xff]
    %v3199 = vld [vmem:[%s8 + $0x3c0] sm:$0xff]
    %v3200 = vld [vmem:[%s8 + $0x3c8] sm:$0xf]
    %vm3201 = vcmask 621568
    %v3203 = vsel %vm3201, %v3078, 0
    %vm3205 = vcmask 1043456
    %v3207 = vsel %vm3205, %v3200, 0
    %3209 = vmatprep.subr.mxu0 0.0
    %3210 = vmatpush1.msra.mxu0 %v3094
    %3211 = vmatprep.subr.mxu0 0.0
    %3212 = vmatpush1.msra.mxu0 %v3093
    %3213 = vmatprep.subr.mxu0 0.0
    %3214 = vmatpush1.msra.mxu0 %v3092
    %3215 = vmatprep.subr.mxu0 0.0
    %3216 = vmatpush1.msra.mxu0 %v3091
    %3217 = vmatprep.subr.mxu0 0.0
    %3218 = vmatpush1.msra.mxu0 %v3090
    %3219 = vmatprep.subr.mxu0 0.0
    %3220 = vmatpush1.msra.mxu0 %v3089
    %3221 = vmatprep.subr.mxu0 0.0
    %3222 = vmatpush1.msra.mxu0 %v3088
    %3223 = vmatprep.subr.mxu0 0.0
    %3224 = vmatpush1.msra.mxu0 %v3087
    %3225 = vmatprep.subr.mxu0 0.0
    %3226 = vmatpush1.msra.mxu0 %v3086
    %3227 = vmatprep.subr.mxu0 0.0
    %3228 = vmatpush1.msra.mxu0 %v3085
    %3229 = vmatprep.subr.mxu0 0.0
    %3230 = vmatpush1.msra.mxu0 %v3084
    %3231 = vmatprep.subr.mxu0 0.0
    %3232 = vmatpush1.msra.mxu0 %v3083
    %3233 = vmatprep.subr.mxu0 0.0
    %3234 = vmatpush1.msra.mxu0 %v3082
    %3235 = vmatprep.subr.mxu0 0.0
    %3236 = vmatpush1.msra.mxu0 %v3081
    %3237 = vmatprep.subr.mxu0 0.0
    %3238 = vmatpush1.msra.mxu0 %v3080
    %3239 = vmatprep.subr.mxu0 0.0
    %3240 = vmatpush1.msra.mxu0 %v3079
    %3241 = vmatprep.subr.mxu0 0.0
    %3242 = vmatpush2.msra.mxu0 %v3110
    %3243 = vmatprep.subr.mxu0 0.0
    %3244 = vmatpush2.msra.mxu0 %v3109
    %3245 = vmatprep.subr.mxu0 0.0
    %3246 = vmatpush2.msra.mxu0 %v3108
    %3247 = vmatprep.subr.mxu0 0.0
    %3248 = vmatpush2.msra.mxu0 %v3107
    %3249 = vmatprep.subr.mxu0 0.0
    %3250 = vmatpush2.msra.mxu0 %v3106
    %3251 = vmatprep.subr.mxu0 0.0
    %3252 = vmatpush2.msra.mxu0 %v3105
    %3253 = vmatprep.subr.mxu0 0.0
    %3254 = vmatpush2.msra.mxu0 %v3104
    %3255 = vmatprep.subr.mxu0 0.0
    %3256 = vmatpush2.msra.mxu0 %v3103
    %3257 = vmatprep.subr.mxu0 0.0
    %3258 = vmatpush2.msra.mxu0 %v3102
    %3259 = vmatprep.subr.mxu0 0.0
    %3260 = vmatpush2.msra.mxu0 %v3101
    %3261 = vmatprep.subr.mxu0 0.0
    %3262 = vmatpush2.msra.mxu0 %v3100
    %3263 = vmatprep.subr.mxu0 0.0
    %3264 = vmatpush2.msra.mxu0 %v3099
    %3265 = vmatprep.subr.mxu0 0.0
    %3266 = vmatpush2.msra.mxu0 %v3098
    %3267 = vmatprep.subr.mxu0 0.0
    %3268 = vmatpush2.msra.mxu0 %v3097
    %3269 = vmatprep.subr.mxu0 0.0
    %3270 = vmatpush2.msra.mxu0 %v3096
    %3271 = vmatprep.subr.mxu0 0.0
    %3272 = vmatpush2.msra.mxu0 %v3095
    %3273 = vmatprep.mubr.f32.mxu0 %v3072
    %3274 = vmatmul.mubr.f32.gmra.mxu0 %v3071
    %v3275 = vpop.f32.mrf.mxu0
    %v3276 = vadd.f32 0.0, %v3275
    %v3277 = vpop.f32.mrf.mxu0
    %3278 = vdwg.mxu0
    %3279 = vmatprep.subr.mxu0 0.0
    %3280 = vmatpush1.msra.mxu0 %v3126
    %3281 = vmatprep.subr.mxu0 0.0
    %3282 = vmatpush1.msra.mxu0 %v3125
    %3283 = vmatprep.subr.mxu0 0.0
    %3284 = vmatpush1.msra.mxu0 %v3124
    %3285 = vmatprep.subr.mxu0 0.0
    %3286 = vmatpush1.msra.mxu0 %v3123
    %3287 = vmatprep.subr.mxu0 0.0
    %3288 = vmatpush1.msra.mxu0 %v3122
    %3289 = vmatprep.subr.mxu0 0.0
    %3290 = vmatpush1.msra.mxu0 %v3121
    %3291 = vmatprep.subr.mxu0 0.0
    %3292 = vmatpush1.msra.mxu0 %v3120
    %3293 = vmatprep.subr.mxu0 0.0
    %3294 = vmatpush1.msra.mxu0 %v3119
    %3295 = vmatprep.subr.mxu0 0.0
    %3296 = vmatpush1.msra.mxu0 %v3118
    %3297 = vmatprep.subr.mxu0 0.0
    %3298 = vmatpush1.msra.mxu0 %v3117
    %3299 = vmatprep.subr.mxu0 0.0
    %3300 = vmatpush1.msra.mxu0 %v3116
    %3301 = vmatprep.subr.mxu0 0.0
    %3302 = vmatpush1.msra.mxu0 %v3115
    %3303 = vmatprep.subr.mxu0 0.0
    %3304 = vmatpush1.msra.mxu0 %v3114
    %3305 = vmatprep.subr.mxu0 0.0
    %3306 = vmatpush1.msra.mxu0 %v3113
    %3307 = vmatprep.subr.mxu0 0.0
    %3308 = vmatpush1.msra.mxu0 %v3112
    %3309 = vmatprep.subr.mxu0 0.0
    %3310 = vmatpush1.msra.mxu0 %v3111
    %3311 = vmatprep.subr.mxu0 0.0
    %3312 = vmatpush2.msra.mxu0 %v3142
    %3313 = vmatprep.subr.mxu0 0.0
    %3314 = vmatpush2.msra.mxu0 %v3141
    %3315 = vmatprep.subr.mxu0 0.0
    %3316 = vmatpush2.msra.mxu0 %v3140
    %3317 = vmatprep.subr.mxu0 0.0
    %3318 = vmatpush2.msra.mxu0 %v3139
    %3319 = vmatprep.subr.mxu0 0.0
    %3320 = vmatpush2.msra.mxu0 %v3138
    %3321 = vmatprep.subr.mxu0 0.0
    %3322 = vmatpush2.msra.mxu0 %v3137
    %3323 = vmatprep.subr.mxu0 0.0
    %3324 = vmatpush2.msra.mxu0 %v3136
    %3325 = vmatprep.subr.mxu0 0.0
    %3326 = vmatpush2.msra.mxu0 %v3135
    %3327 = vmatprep.subr.mxu0 0.0
    %3328 = vmatpush2.msra.mxu0 %v3134
    %3329 = vmatprep.subr.mxu0 0.0
    %3330 = vmatpush2.msra.mxu0 %v3133
    %3331 = vmatprep.subr.mxu0 0.0
    %3332 = vmatpush2.msra.mxu0 %v3132
    %3333 = vmatprep.subr.mxu0 0.0
    %3334 = vmatpush2.msra.mxu0 %v3131
    %3335 = vmatprep.subr.mxu0 0.0
    %3336 = vmatpush2.msra.mxu0 %v3130
    %3337 = vmatprep.subr.mxu0 0.0
    %3338 = vmatpush2.msra.mxu0 %v3129
    %3339 = vmatprep.subr.mxu0 0.0
    %3340 = vmatpush2.msra.mxu0 %v3128
    %3341 = vmatprep.subr.mxu0 0.0
    %3342 = vmatpush2.msra.mxu0 %v3127
    %3343 = vmatprep.mubr.f32.mxu0 %v3074
    %3344 = vmatmul.mubr.f32.gmra.mxu0 %v3073
    %v3345 = vpop.f32.mrf.mxu0
    %v3346 = vadd.f32 %v3276, %v3345
    %v3347 = vpop.f32.mrf.mxu0
    %3348 = vdwg.mxu0
    %3349 = vmatprep.subr.mxu0 0.0
    %3350 = vmatpush1.msra.mxu0 %v3158
    %3351 = vmatprep.subr.mxu0 0.0
    %3352 = vmatpush1.msra.mxu0 %v3157
    %3353 = vmatprep.subr.mxu0 0.0
    %3354 = vmatpush1.msra.mxu0 %v3156
    %3355 = vmatprep.subr.mxu0 0.0
    %3356 = vmatpush1.msra.mxu0 %v3155
    %3357 = vmatprep.subr.mxu0 0.0
    %3358 = vmatpush1.msra.mxu0 %v3154
    %3359 = vmatprep.subr.mxu0 0.0
    %3360 = vmatpush1.msra.mxu0 %v3153
    %3361 = vmatprep.subr.mxu0 0.0
    %3362 = vmatpush1.msra.mxu0 %v3152
    %3363 = vmatprep.subr.mxu0 0.0
    %3364 = vmatpush1.msra.mxu0 %v3151
    %3365 = vmatprep.subr.mxu0 0.0
    %3366 = vmatpush1.msra.mxu0 %v3150
    %3367 = vmatprep.subr.mxu0 0.0
    %3368 = vmatpush1.msra.mxu0 %v3149
    %3369 = vmatprep.subr.mxu0 0.0
    %3370 = vmatpush1.msra.mxu0 %v3148
    %3371 = vmatprep.subr.mxu0 0.0
    %3372 = vmatpush1.msra.mxu0 %v3147
    %3373 = vmatprep.subr.mxu0 0.0
    %3374 = vmatpush1.msra.mxu0 %v3146
    %3375 = vmatprep.subr.mxu0 0.0
    %3376 = vmatpush1.msra.mxu0 %v3145
    %3377 = vmatprep.subr.mxu0 0.0
    %3378 = vmatpush1.msra.mxu0 %v3144
    %3379 = vmatprep.subr.mxu0 0.0
    %3380 = vmatpush1.msra.mxu0 %v3143
    %3381 = vmatprep.subr.mxu0 0.0
    %3382 = vmatpush2.msra.mxu0 %v3174
    %3383 = vmatprep.subr.mxu0 0.0
    %3384 = vmatpush2.msra.mxu0 %v3173
    %3385 = vmatprep.subr.mxu0 0.0
    %3386 = vmatpush2.msra.mxu0 %v3172
    %3387 = vmatprep.subr.mxu0 0.0
    %3388 = vmatpush2.msra.mxu0 %v3171
    %3389 = vmatprep.subr.mxu0 0.0
    %3390 = vmatpush2.msra.mxu0 %v3170
    %3391 = vmatprep.subr.mxu0 0.0
    %3392 = vmatpush2.msra.mxu0 %v3169
    %3393 = vmatprep.subr.mxu0 0.0
    %3394 = vmatpush2.msra.mxu0 %v3168
    %3395 = vmatprep.subr.mxu0 0.0
    %3396 = vmatpush2.msra.mxu0 %v3167
    %3397 = vmatprep.subr.mxu0 0.0
    %3398 = vmatpush2.msra.mxu0 %v3166
    %3399 = vmatprep.subr.mxu0 0.0
    %3400 = vmatpush2.msra.mxu0 %v3165
    %3401 = vmatprep.subr.mxu0 0.0
    %3402 = vmatpush2.msra.mxu0 %v3164
    %3403 = vmatprep.subr.mxu0 0.0
    %3404 = vmatpush2.msra.mxu0 %v3163
    %3405 = vmatprep.subr.mxu0 0.0
    %3406 = vmatpush2.msra.mxu0 %v3162
    %3407 = vmatprep.subr.mxu0 0.0
    %3408 = vmatpush2.msra.mxu0 %v3161
    %3409 = vmatprep.subr.mxu0 0.0
    %3410 = vmatpush2.msra.mxu0 %v3160
    %3411 = vmatprep.subr.mxu0 0.0
    %3412 = vmatpush2.msra.mxu0 %v3159
    %3413 = vmatprep.mubr.f32.mxu0 %v3076
    %3414 = vmatmul.mubr.f32.gmra.mxu0 %v3075
    %v3415 = vpop.f32.mrf.mxu0
    %v3416 = vadd.f32 %v3346, %v3415
    %v3417 = vpop.f32.mrf.mxu0
    %3418 = vdwg.mxu0
    %3419 = vmatprep.subr.mxu0 0.0
    %3420 = vmatpush1.msra.mxu0 %v3190
    %3421 = vmatprep.subr.mxu0 0.0
    %3422 = vmatpush1.msra.mxu0 %v3189
    %3423 = vmatprep.subr.mxu0 0.0
    %3424 = vmatpush1.msra.mxu0 %v3188
    %3425 = vmatprep.subr.mxu0 0.0
    %3426 = vmatpush1.msra.mxu0 %v3187
    %3427 = vmatprep.subr.mxu0 0.0
    %3428 = vmatpush1.msra.mxu0 %v3186
    %3429 = vmatprep.subr.mxu0 0.0
    %3430 = vmatpush1.msra.mxu0 %v3185
    %3431 = vmatprep.subr.mxu0 0.0
    %3432 = vmatpush1.msra.mxu0 %v3184
    %3433 = vmatprep.subr.mxu0 0.0
    %3434 = vmatpush1.msra.mxu0 %v3183
    %3435 = vmatprep.subr.mxu0 0.0
    %3436 = vmatpush1.msra.mxu0 %v3182
    %3437 = vmatprep.subr.mxu0 0.0
    %3438 = vmatpush1.msra.mxu0 %v3181
    %3439 = vmatprep.subr.mxu0 0.0
    %3440 = vmatpush1.msra.mxu0 %v3180
    %3441 = vmatprep.subr.mxu0 0.0
    %3442 = vmatpush1.msra.mxu0 %v3179
    %3443 = vmatprep.subr.mxu0 0.0
    %3444 = vmatpush1.msra.mxu0 %v3178
    %3445 = vmatprep.subr.mxu0 0.0
    %3446 = vmatpush1.msra.mxu0 %v3177
    %3447 = vmatprep.subr.mxu0 0.0
    %3448 = vmatpush1.msra.mxu0 %v3176
    %3449 = vmatprep.subr.mxu0 0.0
    %3450 = vmatpush1.msra.mxu0 %v3175
    %3451 = vmatprep.subr.mxu0 0.0
    %3452 = vmatpush2.msra.mxu0 0.0
    %3453 = vmatprep.subr.mxu0 0.0
    %3454 = vmatpush2.msra.mxu0 0.0
    %3455 = vmatprep.subr.mxu0 0.0
    %3456 = vmatpush2.msra.mxu0 0.0
    %3457 = vmatprep.subr.mxu0 0.0
    %3458 = vmatpush2.msra.mxu0 0.0
    %3459 = vmatprep.subr.mxu0 0.0
    %3460 = vmatpush2.msra.mxu0 0.0
    %3461 = vmatprep.subr.mxu0 0.0
    %3462 = vmatpush2.msra.mxu0 0.0
    %3463 = vmatprep.subr.mxu0 0.0
    %3464 = vmatpush2.msra.mxu0 %v3207
    %3465 = vmatprep.subr.mxu0 0.0
    %3466 = vmatpush2.msra.mxu0 %v3199
    %3467 = vmatprep.subr.mxu0 0.0
    %3468 = vmatpush2.msra.mxu0 %v3198
    %3469 = vmatprep.subr.mxu0 0.0
    %3470 = vmatpush2.msra.mxu0 %v3197
    %3471 = vmatprep.subr.mxu0 0.0
    %3472 = vmatpush2.msra.mxu0 %v3196
    %3473 = vmatprep.subr.mxu0 0.0
    %3474 = vmatpush2.msra.mxu0 %v3195
    %3475 = vmatprep.subr.mxu0 0.0
    %3476 = vmatpush2.msra.mxu0 %v3194
    %3477 = vmatprep.subr.mxu0 0.0
    %3478 = vmatpush2.msra.mxu0 %v3193
    %3479 = vmatprep.subr.mxu0 0.0
    %3480 = vmatpush2.msra.mxu0 %v3192
    %3481 = vmatprep.subr.mxu0 0.0
    %3482 = vmatpush2.msra.mxu0 %v3191
    %3483 = vmatprep.mubr.f32.mxu0 %v3203
    %3484 = vmatmul.mubr.f32.gmra.mxu0 %v3077
    %v3485 = vpop.f32.mrf.mxu0
    %v3486 = vadd.f32 %v3416, %v3485
    %v3487 = vpop.f32.mrf.mxu0
    %3488 = vdwg.mxu0
    %v3489 = vld [vmem:[%s9] sm:$0xff]
    %v3490 = vld [vmem:[%s9 + $0x8] sm:$0xff]
    %v3491 = vld [vmem:[%s9 + $0x10] sm:$0xff]
    %v3492 = vld [vmem:[%s9 + $0x18] sm:$0xff]
    %v3493 = vld [vmem:[%s9 + $0x20] sm:$0xff]
    %v3494 = vld [vmem:[%s9 + $0x28] sm:$0xff]
    %v3495 = vld [vmem:[%s9 + $0x30] sm:$0x3f]
    %v3496 = vld [vmem:[%s10] sm:$0x1]
    %v3498 = vlaneseq
    %v3499 = vshrl.u32 %v3498, 7
    %v3500 = vsub.s32 0, %v3499
    %v3501 = vrot.slane %v3496, %v3500
    %v3504 = vsel %vm90, %v3486, 0
    %v3507 = vsel %vm94, %v3495, 0
    %3509 = vmatprep.subr.mxu0 0.0
    %3510 = vmatpush1.msra.mxu0 0.0
    %3511 = vmatprep.subr.mxu0 0.0
    %3512 = vmatpush1.msra.mxu0 0.0
    %3513 = vmatprep.subr.mxu0 0.0
    %3514 = vmatpush1.msra.mxu0 0.0
    %3515 = vmatprep.subr.mxu0 0.0
    %3516 = vmatpush1.msra.mxu0 0.0
    %3517 = vmatprep.subr.mxu0 0.0
    %3518 = vmatpush1.msra.mxu0 0.0
    %3519 = vmatprep.subr.mxu0 0.0
    %3520 = vmatpush1.msra.mxu0 0.0
    %3521 = vmatprep.subr.mxu0 0.0
    %3522 = vmatpush1.msra.mxu0 0.0
    %3523 = vmatprep.subr.mxu0 0.0
    %3524 = vmatpush1.msra.mxu0 0.0
    %3525 = vmatprep.subr.mxu0 0.0
    %3526 = vmatpush1.msra.mxu0 0.0
    %3527 = vmatprep.subr.mxu0 0.0
    %3528 = vmatpush1.msra.mxu0 %v3507
    %3529 = vmatprep.subr.mxu0 0.0
    %3530 = vmatpush1.msra.mxu0 %v3494
    %3531 = vmatprep.subr.mxu0 0.0
    %3532 = vmatpush1.msra.mxu0 %v3493
    %3533 = vmatprep.subr.mxu0 0.0
    %3534 = vmatpush1.msra.mxu0 %v3492
    %3535 = vmatprep.subr.mxu0 0.0
    %3536 = vmatpush1.msra.mxu0 %v3491
    %3537 = vmatprep.subr.mxu0 0.0
    %3538 = vmatpush1.msra.mxu0 %v3490
    %3539 = vmatprep.subr.mxu0 0.0
    %3540 = vmatpush1.msra.mxu0 %v3489
    %3541 = vmatprep.subr.mxu0 0.0
    %3542 = vmatpush2.msra.mxu0 0.0
    %3543 = vmatprep.subr.mxu0 0.0
    %3544 = vmatpush2.msra.mxu0 0.0
    %3545 = vmatprep.subr.mxu0 0.0
    %3546 = vmatpush2.msra.mxu0 0.0
    %3547 = vmatprep.subr.mxu0 0.0
    %3548 = vmatpush2.msra.mxu0 0.0
    %3549 = vmatprep.subr.mxu0 0.0
    %3550 = vmatpush2.msra.mxu0 0.0
    %3551 = vmatprep.subr.mxu0 0.0
    %3552 = vmatpush2.msra.mxu0 0.0
    %3553 = vmatprep.subr.mxu0 0.0
    %3554 = vmatpush2.msra.mxu0 0.0
    %3555 = vmatprep.subr.mxu0 0.0
    %3556 = vmatpush2.msra.mxu0 0.0
    %3557 = vmatprep.subr.mxu0 0.0
    %3558 = vmatpush2.msra.mxu0 0.0
    %3559 = vmatprep.subr.mxu0 0.0
    %3560 = vmatpush2.msra.mxu0 0.0
    %3561 = vmatprep.subr.mxu0 0.0
    %3562 = vmatpush2.msra.mxu0 0.0
    %3563 = vmatprep.subr.mxu0 0.0
    %3564 = vmatpush2.msra.mxu0 0.0
    %3565 = vmatprep.subr.mxu0 0.0
    %3566 = vmatpush2.msra.mxu0 0.0
    %3567 = vmatprep.subr.mxu0 0.0
    %3568 = vmatpush2.msra.mxu0 0.0
    %3569 = vmatprep.subr.mxu0 0.0
    %3570 = vmatpush2.msra.mxu0 0.0
    %3571 = vmatprep.subr.mxu0 0.0
    %3572 = vmatpush2.msra.mxu0 0.0
    %3573 = vmatprep.mubr.f32.mxu0 0.0
    %3574 = vmatmul.mubr.f32.gmra.mxu0 %v3504
    %v3575 = vpop.f32.mrf.mxu0
    %v3576 = vadd.f32 %v3501, %v3575
    %v3577 = vpop.f32.mrf.mxu0
    %3578 = vdwg.mxu0
    %v3579 = vmax.f32 %v3576, 0.0
    %v3580 = vld [vmem:[%s11] sm:$0xff]
    %v3581 = vld [vmem:[%s11 + $0x8] sm:$0xff]
    %v3582 = vld [vmem:[%s11 + $0x10] sm:$0xff]
    %v3583 = vld [vmem:[%s11 + $0x18] sm:$0xff]
    %v3584 = vld [vmem:[%s11 + $0x20] sm:$0xff]
    %v3585 = vld [vmem:[%s11 + $0x28] sm:$0xff]
    %v3586 = vld [vmem:[%s11 + $0x30] sm:$0xff]
    %v3587 = vld [vmem:[%s11 + $0x38] sm:$0xff]
    %v3588 = vld [vmem:[%s11 + $0x40] sm:$0xff]
    %v3589 = vld [vmem:[%s11 + $0x48] sm:$0xff]
    %v3590 = vld [vmem:[%s11 + $0x50] sm:$0xff]
    %v3591 = vld [vmem:[%s11 + $0x58] sm:$0xff]
    %v3592 = vld [vmem:[%s11 + $0x60] sm:$0xff]
    %v3593 = vld [vmem:[%s11 + $0x68] sm:$0xff]
    %v3594 = vld [vmem:[%s11 + $0x70] sm:$0xff]
    %v3595 = vld [vmem:[%s11 + $0x78] sm:$0xff]
    %v3596 = vld [vmem:[%s12] sm:$0x1]
    %v3598 = vlaneseq
    %v3599 = vshrl.u32 %v3598, 7
    %v3600 = vsub.s32 0, %v3599
    %v3601 = vrot.slane %v3596, %v3600
    %3603 = vmatprep.subr.mxu0 0.0
    %3604 = vmatpush1.msra.mxu0 %v3595
    %3605 = vmatprep.subr.mxu0 0.0
    %3606 = vmatpush1.msra.mxu0 %v3594
    %3607 = vmatprep.subr.mxu0 0.0
    %3608 = vmatpush1.msra.mxu0 %v3593
    %3609 = vmatprep.subr.mxu0 0.0
    %3610 = vmatpush1.msra.mxu0 %v3592
    %3611 = vmatprep.subr.mxu0 0.0
    %3612 = vmatpush1.msra.mxu0 %v3591
    %3613 = vmatprep.subr.mxu0 0.0
    %3614 = vmatpush1.msra.mxu0 %v3590
    %3615 = vmatprep.subr.mxu0 0.0
    %3616 = vmatpush1.msra.mxu0 %v3589
    %3617 = vmatprep.subr.mxu0 0.0
    %3618 = vmatpush1.msra.mxu0 %v3588
    %3619 = vmatprep.subr.mxu0 0.0
    %3620 = vmatpush1.msra.mxu0 %v3587
    %3621 = vmatprep.subr.mxu0 0.0
    %3622 = vmatpush1.msra.mxu0 %v3586
    %3623 = vmatprep.subr.mxu0 0.0
    %3624 = vmatpush1.msra.mxu0 %v3585
    %3625 = vmatprep.subr.mxu0 0.0
    %3626 = vmatpush1.msra.mxu0 %v3584
    %3627 = vmatprep.subr.mxu0 0.0
    %3628 = vmatpush1.msra.mxu0 %v3583
    %3629 = vmatprep.subr.mxu0 0.0
    %3630 = vmatpush1.msra.mxu0 %v3582
    %3631 = vmatprep.subr.mxu0 0.0
    %3632 = vmatpush1.msra.mxu0 %v3581
    %3633 = vmatprep.subr.mxu0 0.0
    %3634 = vmatpush1.msra.mxu0 %v3580
    %3635 = vmatprep.subr.mxu0 0.0
    %3636 = vmatpush2.msra.mxu0 0.0
    %3637 = vmatprep.subr.mxu0 0.0
    %3638 = vmatpush2.msra.mxu0 0.0
    %3639 = vmatprep.subr.mxu0 0.0
    %3640 = vmatpush2.msra.mxu0 0.0
    %3641 = vmatprep.subr.mxu0 0.0
    %3642 = vmatpush2.msra.mxu0 0.0
    %3643 = vmatprep.subr.mxu0 0.0
    %3644 = vmatpush2.msra.mxu0 0.0
    %3645 = vmatprep.subr.mxu0 0.0
    %3646 = vmatpush2.msra.mxu0 0.0
    %3647 = vmatprep.subr.mxu0 0.0
    %3648 = vmatpush2.msra.mxu0 0.0
    %3649 = vmatprep.subr.mxu0 0.0
    %3650 = vmatpush2.msra.mxu0 0.0
    %3651 = vmatprep.subr.mxu0 0.0
    %3652 = vmatpush2.msra.mxu0 0.0
    %3653 = vmatprep.subr.mxu0 0.0
    %3654 = vmatpush2.msra.mxu0 0.0
    %3655 = vmatprep.subr.mxu0 0.0
    %3656 = vmatpush2.msra.mxu0 0.0
    %3657 = vmatprep.subr.mxu0 0.0
    %3658 = vmatpush2.msra.mxu0 0.0
    %3659 = vmatprep.subr.mxu0 0.0
    %3660 = vmatpush2.msra.mxu0 0.0
    %3661 = vmatprep.subr.mxu0 0.0
    %3662 = vmatpush2.msra.mxu0 0.0
    %3663 = vmatprep.subr.mxu0 0.0
    %3664 = vmatpush2.msra.mxu0 0.0
    %3665 = vmatprep.subr.mxu0 0.0
    %3666 = vmatpush2.msra.mxu0 0.0
    %3667 = vmatprep.mubr.f32.mxu0 0.0
    %3668 = vmatmul.mubr.f32.gmra.mxu0 %v3579
    %v3669 = vpop.f32.mrf.mxu0
    %v3670 = vadd.f32 %v3601, %v3669
    %v3671 = vpop.f32.mrf.mxu0
    %3672 = vdwg.mxu0
    %v3673 = vmax.f32 %v3670, 0.0
    %v3674 = vld [vmem:[%s13] sm:$0xff]
    %v3675 = vld [vmem:[%s13 + $0x8] sm:$0xff]
    %v3676 = vld [vmem:[%s13 + $0x10] sm:$0xff]
    %v3677 = vld [vmem:[%s13 + $0x18] sm:$0xff]
    %v3678 = vld [vmem:[%s13 + $0x20] sm:$0xff]
    %v3679 = vld [vmem:[%s13 + $0x28] sm:$0xff]
    %v3680 = vld [vmem:[%s13 + $0x30] sm:$0xff]
    %v3681 = vld [vmem:[%s13 + $0x38] sm:$0xff]
    %v3682 = vld [vmem:[%s13 + $0x40] sm:$0xff]
    %v3683 = vld [vmem:[%s13 + $0x48] sm:$0xff]
    %v3684 = vld [vmem:[%s13 + $0x50] sm:$0xff]
    %v3685 = vld [vmem:[%s13 + $0x58] sm:$0xff]
    %v3686 = vld [vmem:[%s13 + $0x60] sm:$0xff]
    %v3687 = vld [vmem:[%s13 + $0x68] sm:$0xff]
    %v3688 = vld [vmem:[%s13 + $0x70] sm:$0xff]
    %v3689 = vld [vmem:[%s13 + $0x78] sm:$0xff]
    %v3690 = vld [vmem:[%s14] sm:$0x1]
    %v3692 = vlaneseq
    %v3693 = vshrl.u32 %v3692, 7
    %v3694 = vsub.s32 0, %v3693
    %v3695 = vrot.slane %v3690, %v3694
    %3697 = vmatprep.subr.mxu0 0.0
    %3698 = vmatpush1.msra.mxu0 %v3689
    %3699 = vmatprep.subr.mxu0 0.0
    %3700 = vmatpush1.msra.mxu0 %v3688
    %3701 = vmatprep.subr.mxu0 0.0
    %3702 = vmatpush1.msra.mxu0 %v3687
    %3703 = vmatprep.subr.mxu0 0.0
    %3704 = vmatpush1.msra.mxu0 %v3686
    %3705 = vmatprep.subr.mxu0 0.0
    %3706 = vmatpush1.msra.mxu0 %v3685
    %3707 = vmatprep.subr.mxu0 0.0
    %3708 = vmatpush1.msra.mxu0 %v3684
    %3709 = vmatprep.subr.mxu0 0.0
    %3710 = vmatpush1.msra.mxu0 %v3683
    %3711 = vmatprep.subr.mxu0 0.0
    %3712 = vmatpush1.msra.mxu0 %v3682
    %3713 = vmatprep.subr.mxu0 0.0
    %3714 = vmatpush1.msra.mxu0 %v3681
    %3715 = vmatprep.subr.mxu0 0.0
    %3716 = vmatpush1.msra.mxu0 %v3680
    %3717 = vmatprep.subr.mxu0 0.0
    %3718 = vmatpush1.msra.mxu0 %v3679
    %3719 = vmatprep.subr.mxu0 0.0
    %3720 = vmatpush1.msra.mxu0 %v3678
    %3721 = vmatprep.subr.mxu0 0.0
    %3722 = vmatpush1.msra.mxu0 %v3677
    %3723 = vmatprep.subr.mxu0 0.0
    %3724 = vmatpush1.msra.mxu0 %v3676
    %3725 = vmatprep.subr.mxu0 0.0
    %3726 = vmatpush1.msra.mxu0 %v3675
    %3727 = vmatprep.subr.mxu0 0.0
    %3728 = vmatpush1.msra.mxu0 %v3674
    %3729 = vmatprep.subr.mxu0 0.0
    %3730 = vmatpush2.msra.mxu0 0.0
    %3731 = vmatprep.subr.mxu0 0.0
    %3732 = vmatpush2.msra.mxu0 0.0
    %3733 = vmatprep.subr.mxu0 0.0
    %3734 = vmatpush2.msra.mxu0 0.0
    %3735 = vmatprep.subr.mxu0 0.0
    %3736 = vmatpush2.msra.mxu0 0.0
    %3737 = vmatprep.subr.mxu0 0.0
    %3738 = vmatpush2.msra.mxu0 0.0
    %3739 = vmatprep.subr.mxu0 0.0
    %3740 = vmatpush2.msra.mxu0 0.0
    %3741 = vmatprep.subr.mxu0 0.0
    %3742 = vmatpush2.msra.mxu0 0.0
    %3743 = vmatprep.subr.mxu0 0.0
    %3744 = vmatpush2.msra.mxu0 0.0
    %3745 = vmatprep.subr.mxu0 0.0
    %3746 = vmatpush2.msra.mxu0 0.0
    %3747 = vmatprep.subr.mxu0 0.0
    %3748 = vmatpush2.msra.mxu0 0.0
    %3749 = vmatprep.subr.mxu0 0.0
    %3750 = vmatpush2.msra.mxu0 0.0
    %3751 = vmatprep.subr.mxu0 0.0
    %3752 = vmatpush2.msra.mxu0 0.0
    %3753 = vmatprep.subr.mxu0 0.0
    %3754 = vmatpush2.msra.mxu0 0.0
    %3755 = vmatprep.subr.mxu0 0.0
    %3756 = vmatpush2.msra.mxu0 0.0
    %3757 = vmatprep.subr.mxu0 0.0
    %3758 = vmatpush2.msra.mxu0 0.0
    %3759 = vmatprep.subr.mxu0 0.0
    %3760 = vmatpush2.msra.mxu0 0.0
    %3761 = vmatprep.mubr.f32.mxu0 0.0
    %3762 = vmatmul.mubr.f32.gmra.mxu0 %v3673
    %v3763 = vpop.f32.mrf.mxu0
    %v3764 = vadd.f32 %v3695, %v3763
    %v3765 = vpop.f32.mrf.mxu0
    %3766 = vdwg.mxu0
    %vm3767 = vcmask 50176
    %v3768 = vsel %vm3767, %v3764, -inf
    %3769 = vmax.xlane.f32.xlu0 %v3768
    %v3770 = vpop.xlane.xlu0 %3769
    %v3771 = vsub.f32 %v3764, %v3770
    %v3772 = vmul.f32 %v3771, 1.442695
    %v3773 = vpow.pop %v3772
    %v3774 = vsel %vm3767, %v3773, 0.0
    %3775 = vadd.xlane.f32.xlu0 %v3774
    %v3776 = vpop.xlane.xlu0 %3775
    %v3777 = vrcp.pop %v3776
    %v3778 = vmul.f32 %v3773, %v3777
    %3779 = vst.msk [vmem:[#allocation2] sm:$0x3] %vm3767, %v3778
    // Predicated region
    $region62: #{tpu_custom_call.1} parent=1 // pred_check
      _
    $region63: #{tpu_custom_call.1} parent=1 // pred_check_branch
      %3781 = sbr.rel (0) target = $region65
    $region64: #{tpu_custom_call.1} parent=1 // pred_region
      %s3783 = ssub.s32 32, 32
      %3784 = vsyncadd [#allocation3], %s3783
      %s3786 = sshll.u32 [#allocation2], 4
      %s3787 = int_to_ptr.vmem [resolvable:$true] %s3786
      %3789 = dma.vmem_to_hbm [thread:$0]  %s3787, 32, %s15, [#allocation3]
    $region65: #{tpu_custom_call.1} parent=1 // pred_fallthru
      _
    // Predicated region
    $region66: #{tpu_custom_call.1} parent=1 // pred_check
      _
    $region67: #{tpu_custom_call.1} parent=1 // pred_check_branch
      %3791 = sbr.rel (0) target = $region69
    $region68: #{tpu_custom_call.1} parent=1 // pred_region
      %3792 = dma.done [#allocation3], 32
    $region69: #{tpu_custom_call.1} parent=1 // pred_fallthru
      _
    %3793 = vsyncpa [#allocation3], 1

</llo_original>
